<compile_context>
chip_gen: v7x
topology: tpu7x:2x2x1
jax: 0.10.0
libtpu: 0.0.40
codegen_flags: <defaults>
</compile_context>

<pallas_src>
import jax
import jax.numpy as jnp
from jax.experimental import pallas as pl
from jax.experimental.pallas import tpu as pltpu


def decoder_kernel(
    gix_ref,     # (T, B, 3H)   precomputed x-path GRU gates (includes b_ih)
    kproj_ref,   # (K, B, H)    key projection enc @ Wk, keys leading
    encext_ref,  # (K, B, H+1)  encoder values with a trailing ones-column
    vlen_ref,    # (1, B)       valid lengths (int32), lanes = batch
    h0_ref,      # (B, H)       initial hidden state
    wh_ref,      # (H, 4H)      [Wq | Whh] fused
    bhh_ref,     # (1, 3H)
    wv_ref,      # (1, H)       additive-attention scoring vector
    wihc_ref,    # (H, 3H)      context half of GRU input weights
    wout_ref,    # (H, Vp)      output dense, vocab padded to lane-dense Vp
    bout_ref,    # (1, Vp)
    out_ref,     # (T, B, Vp)   logits (padded)
    escore_ref,  # (T, K, B)    UNNORMALIZED attention exps (normalized outside)
    hfin_ref,    # (B, H)       final hidden state
    hall_ref,    # (T, B, H)    VMEM scratch: per-step hidden states
):
    T, B, H = hall_ref.shape
    K = kproj_ref.shape[0]

    # Small loop-invariant loads only (keeps vregs free for the unrolled body);
    # the larger kproj / enc_ext tensors are re-read from VMEM inside step().
    wh = wh_ref[...]
    bhh = bhh_ref[...]
    wihc = wihc_ref[...]
    wv_row = wv_ref[...].reshape(1, 1, H)
    kv_idx = jax.lax.broadcasted_iota(jnp.int32, (K, B), 0)
    mask = kv_idx < vlen_ref[...]                                   # (K, B)

    def step(t, h):
        # fused query + hidden-gate projection: one lane-dense (H,4H) matmul
        fused = jnp.dot(h, wh, preferred_element_type=jnp.float32)  # (B, 4H)
        q_proj = fused[:, :H]                                       # (B, H)
        gh = fused[:, H:] + bhh                                     # (B, 3H)

        # additive attention in keys-leading layout: K dense (B,H) slabs
        kproj = kproj_ref[...]                                      # (K, B, H)
        feat = jnp.tanh(q_proj[None, :, :] + kproj)                 # (K, B, H)
        scores = jnp.sum(feat * wv_row, axis=-1)                    # (K, B)

        # masked exponentials (no max-subtraction; see header note)
        e = jnp.exp(jnp.where(mask, scores, jnp.float32(-1e6)))     # (K, B)
        escore_ref[t] = e          # off the carry chain; normalized in wrapper

        # context via VPU: K multiply-adds over dense (B, H+1) slabs.
        # The trailing ones-column of enc_ext makes the softmax denominator
        # land directly in (B, 1) layout — no transpose on the carry chain.
        ctx_ext = jnp.sum(e[:, :, None] * encext_ref[...], axis=0)  # (B, H+1)
        # exact reciprocal (approx=True would breach the 1e-4 tolerance)
        inv = pl.reciprocal(ctx_ext[:, H:], approx=False)           # (B, 1)
        context = ctx_ext[:, :H] * inv                              # (B, H)

        # GRU cell (PyTorch gate order r, z, n); x-path gates precomputed
        gi = jnp.dot(context, wihc,
                     preferred_element_type=jnp.float32) + gix_ref[t]  # (B,3H)
        r = jax.nn.sigmoid(gi[:, :H] + gh[:, :H])
        z = jax.nn.sigmoid(gi[:, H:2 * H] + gh[:, H:2 * H])
        n = jnp.tanh(gi[:, 2 * H:] + r * gh[:, 2 * H:])
        h_new = (1.0 - z) * n + z * h                               # (B, H)

        hall_ref[t] = h_new        # narrow (B,H) store; projection hoisted
        return h_new

    h_final = jax.lax.fori_loop(0, T, step, h0_ref[...], unroll=True)
    hfin_ref[...] = h_final.astype(hfin_ref.dtype)   # written exactly once

    # Output projection hoisted off the recurrence: one (T*B,H)@(H,Vp) matmul
    # with full MXU occupancy and a lane-dense (Vp=128) store.
    h_all = hall_ref[...].reshape(T * B, H)
    logits = (jnp.dot(h_all, wout_ref[...], preferred_element_type=jnp.float32)
              + bout_ref[...])
    out_ref[...] = logits.reshape(T, B, out_ref.shape[-1]).astype(out_ref.dtype)


def bahdanau_decoder_forward(X_tokens, enc_outputs, hidden_state, enc_valid_lens, params):
    """Forward pass of the attention decoder.

    Returns (outputs (B,T,V),
             state = (enc_outputs, hidden (1,B,H), enc_valid_lens),
             attention_weights (B,T,K)).
    """
    B, T = X_tokens.shape
    _, K, H = enc_outputs.shape
    V, E = params["emb"].shape
    Vp = ((V + 127) // 128) * 128     # lane-dense padded vocab width
    f32 = jnp.float32

    enc = enc_outputs.astype(f32)

    # ---- loop-invariant precomputes (glue, outside the serial recurrence) ----
    # key projection, hoisted out of the T-step loop; keys-leading layout
    k_proj = (enc.reshape(B * K, H) @ params["Wk"].astype(f32)).reshape(B, K, H)
    k_proj_kbh = jnp.transpose(k_proj, (1, 0, 2))                     # (K, B, H)
    # encoder values + ones column (denominator trick), keys leading
    enc_ext = jnp.concatenate(
        [jnp.transpose(enc, (1, 0, 2)), jnp.ones((K, B, 1), f32)], axis=-1)
    # embedding lookup + x-path GRU gates for all steps as one batched matmul
    x_emb = params["emb"][X_tokens].astype(f32)                       # (B, T, E)
    gi_x = (jnp.einsum("bte,eg->tbg", x_emb, params["Wih"][H:].astype(f32))
            + params["bih"].astype(f32))                              # (T, B, 3H)
    # fuse the two matmuls sharing LHS h into one lane-dense (H, 4H) weight
    W_h = jnp.concatenate([params["Wq"].astype(f32),
                           params["Whh"].astype(f32)], axis=1)        # (H, 4H)
    Wih_ctx = params["Wih"][:H].astype(f32)                           # (H, 3H)
    # pad output projection to 128 lanes (zero columns, sliced off afterwards)
    Wout_p = jnp.zeros((H, Vp), f32).at[:, :V].set(params["Wout"].astype(f32))
    bout_p = jnp.zeros((1, Vp), f32).at[:, :V].set(params["bout"].astype(f32))
    wv_row = params["wv"].astype(f32).reshape(1, H)
    vlen = enc_valid_lens.reshape(1, B).astype(jnp.int32)
    h0 = hidden_state[-1].astype(f32)

    def full(shape):
        n = len(shape)
        return pl.BlockSpec(shape, lambda i, _n=n: (0,) * _n)

    # Single kernel invocation: everything (~100 KB) is VMEM-resident, the
    # time recurrence runs as an in-kernel unrolled loop. Keep grid=(1,);
    # per-step grid overhead would dwarf the per-step compute.
    # TODO(synk): at realistic H/V scale, tile Wout over a vocab axis (re-derive
    # against v7x's 64 MiB VMEM) and optionally feed bf16 matmul/feature-path
    # operands on v6e/v7x (tolerance-gated); do not shard the serial recurrence
    # across v7x's 2 TCs at this batch size.
    grid_spec = pltpu.PrefetchScalarGridSpec(
        num_scalar_prefetch=0,
        grid=(1,),
        in_specs=[
            full((T, B, 3 * H)),          # gi_x
            full((K, B, H)),              # k_proj (keys leading)
            full((K, B, H + 1)),          # enc values + ones column
            full((1, B)),                 # valid lens
            full((B, H)),                 # h0
            full((H, 4 * H)),             # W_h = [Wq | Whh]
            full((1, 3 * H)),             # b_hh
            full((1, H)),                 # w_v
            full((H, 3 * H)),             # Wih_ctx
            full((H, Vp)), full((1, Vp)), # Wout, bout (padded)
        ],
        out_specs=[
            full((T, B, Vp)),             # logits (padded)
            full((T, K, B)),              # unnormalized attention exps
            full((B, H)),                 # final hidden
        ],
        scratch_shapes=[pltpu.VMEM((T, B, H), jnp.float32)],
    )

    outs, e_raw, h_fin = pl.pallas_call(
        decoder_kernel,
        out_shape=(
            jax.ShapeDtypeStruct((T, B, Vp), f32),
            jax.ShapeDtypeStruct((T, K, B), f32),
            jax.ShapeDtypeStruct((B, H), f32),
        ),
        grid_spec=grid_spec,
        compiler_params=pltpu.CompilerParams(dimension_semantics=("arbitrary",)),
    )(gi_x, k_proj_kbh, enc_ext, vlen, h0, W_h,
      params["bhh"].astype(f32), wv_row, Wih_ctx, Wout_p, bout_p)

    outputs = jnp.transpose(outs[:, :, :V], (1, 0, 2))    # (B, T, V) like PyTorch
    # normalize attention weights outside the serial kernel (pure reassociation)
    attn = jnp.transpose(e_raw, (2, 0, 1))                 # (B, T, K)
    attn_w = attn / jnp.sum(attn, axis=-1, keepdims=True)
    state = (enc_outputs, h_fin[None], enc_valid_lens)     # hidden -> (1, B, H)
    return outputs, state, attn_w


def reference_forward(X_tokens, enc_outputs, hidden_state, enc_valid_lens, params):
    """Pure-JAX reference mirroring Seq2SeqAttentionDecoder.forward (num_layers=1, eval)."""
    B, T = X_tokens.shape
    _, K, H = enc_outputs.shape
    emb = params["emb"][X_tokens].astype(jnp.float32)   # (B, T, E)
    enc = enc_outputs.astype(jnp.float32)
    h = hidden_state[-1].astype(jnp.float32)
    k_proj = (enc.reshape(B * K, H) @ params["Wk"]).reshape(B, K, H)
    mask = jnp.arange(K)[None, :] < enc_valid_lens[:, None]
    outs, attns = [], []
    for t in range(T):
        q = h @ params["Wq"]
        feat = jnp.tanh(q[:, None, :] + k_proj)
        scores = (feat.reshape(B * K, H) @ params["wv"]).reshape(B, K)
        scores = jnp.where(mask, scores, -1e6)
        a = jax.nn.softmax(scores, axis=-1)
        ctx = jnp.sum(a[:, :, None] * enc, axis=1)
        x_cat = jnp.concatenate([ctx, emb[:, t, :]], axis=-1)
        gi = x_cat @ params["Wih"] + params["bih"]
        gh = h @ params["Whh"] + params["bhh"]
        r = jax.nn.sigmoid(gi[:, :H] + gh[:, :H])
        z = jax.nn.sigmoid(gi[:, H:2 * H] + gh[:, H:2 * H])
        n = jnp.tanh(gi[:, 2 * H:] + r * gh[:, 2 * H:])
        h = (1.0 - z) * n + z * h
        outs.append(h @ params["Wout"] + params["bout"])
        attns.append(a)
    return jnp.stack(outs, axis=1), h[None], jnp.stack(attns, axis=1)


if __name__ == "__main__":
    # small synthetic config
    V, E, H = 30, 16, 32          # vocab, embed_size, num_hiddens (num_layers = 1)
    B, T, K = 8, 6, 10            # batch, decoder steps, encoder steps
    # TODO(synk): num_layers is fixed to 1 and dropout omitted (p=0 / eval mode);
    # a multi-layer GRU stack would need an extra in-kernel layer loop.

    key = jax.random.PRNGKey(0)
    ks = jax.random.split(key, 16)
    s = 0.1
    params = dict(
        emb=jax.random.normal(ks[0], (V, E), jnp.float32) * s,
        Wq=jax.random.normal(ks[1], (H, H), jnp.float32) * s,
        Wk=jax.random.normal(ks[2], (H, H), jnp.float32) * s,
        wv=jax.random.normal(ks[3], (H, 1), jnp.float32) * s,
        Wih=jax.random.normal(ks[4], (H + E, 3 * H), jnp.float32) * s,
        bih=jax.random.normal(ks[5], (1, 3 * H), jnp.float32) * s,
        Whh=jax.random.normal(ks[6], (H, 3 * H), jnp.float32) * s,
        bhh=jax.random.normal(ks[7], (1, 3 * H), jnp.float32) * s,
        Wout=jax.random.normal(ks[8], (H, V), jnp.float32) * s,
        bout=jax.random.normal(ks[9], (1, V), jnp.float32) * s,
    )

    X_tokens = jax.random.randint(ks[10], (B, T), 0, V, dtype=jnp.int32)
    enc_outputs = jax.random.normal(ks[11], (B, K, H), jnp.float32)
    hidden_state = jax.random.normal(ks[12], (1, B, H), jnp.float32)
    enc_valid_lens = jnp.array([3, 10, 7, 5, 10, 2, 8, 6], dtype=jnp.int32)

    outputs, state, attn_w = bahdanau_decoder_forward(
        X_tokens, enc_outputs, hidden_state, enc_valid_lens, params)
    jax.block_until_ready((outputs, state, attn_w))

    ref_out, ref_h, ref_attn = reference_forward(
        X_tokens, enc_outputs, hidden_state, enc_valid_lens, params)

    assert outputs.shape == (B, T, V) and attn_w.shape == (B, T, K)
    assert state[1].shape == (1, B, H)
    assert jnp.allclose(outputs, ref_out, atol=1e-4, rtol=1e-4)
    assert jnp.allclose(attn_w, ref_attn, atol=1e-4, rtol=1e-4)
    assert jnp.allclose(state[1], ref_h, atol=1e-4, rtol=1e-4)

    print("KERNEL_OK")
</pallas_src>

<mosaic_0001>
module attributes {stable_mosaic.version = 11 : i64} {
  func.func @decoder_kernel(%arg0: i32, %arg1: memref<6x8x96xf32, #tpu.memory_space<vmem>>, %arg2: memref<10x8x32xf32, #tpu.memory_space<vmem>>, %arg3: memref<10x8x33xf32, #tpu.memory_space<vmem>>, %arg4: memref<1x8xi32, #tpu.memory_space<vmem>>, %arg5: memref<8x32xf32, #tpu.memory_space<vmem>>, %arg6: memref<32x128xf32, #tpu.memory_space<vmem>>, %arg7: memref<1x96xf32, #tpu.memory_space<vmem>>, %arg8: memref<1x32xf32, #tpu.memory_space<vmem>>, %arg9: memref<32x96xf32, #tpu.memory_space<vmem>>, %arg10: memref<32x128xf32, #tpu.memory_space<vmem>>, %arg11: memref<1x128xf32, #tpu.memory_space<vmem>>, %arg12: memref<6x8x128xf32, #tpu.memory_space<vmem>>, %arg13: memref<6x10x8xf32, #tpu.memory_space<vmem>>, %arg14: memref<8x32xf32, #tpu.memory_space<vmem>>, %arg15: memref<6x8x32xf32, #tpu.memory_space<vmem>>) attributes {dimension_semantics = [#tpu.dimension_semantics<arbitrary>], iteration_bounds = array<i64: 1>, scalar_prefetch = 0 : i64, scratch_operands = 1 : i64, tpu.core_type = #tpu.core_type<tc>, window_params = [{pipeline_mode = #tpu.pipeline_mode<synchronous>, transform_indices = @transform_0, window_bounds = array<i64: 6, 8, 96>}, {pipeline_mode = #tpu.pipeline_mode<synchronous>, transform_indices = @transform_1, window_bounds = array<i64: 10, 8, 32>}, {pipeline_mode = #tpu.pipeline_mode<synchronous>, transform_indices = @transform_2, window_bounds = array<i64: 10, 8, 33>}, {pipeline_mode = #tpu.pipeline_mode<synchronous>, transform_indices = @transform_3, window_bounds = array<i64: 1, 8>}, {pipeline_mode = #tpu.pipeline_mode<synchronous>, transform_indices = @transform_4, window_bounds = array<i64: 8, 32>}, {pipeline_mode = #tpu.pipeline_mode<synchronous>, transform_indices = @transform_5, window_bounds = array<i64: 32, 128>}, {pipeline_mode = #tpu.pipeline_mode<synchronous>, transform_indices = @transform_6, window_bounds = array<i64: 1, 96>}, {pipeline_mode = #tpu.pipeline_mode<synchronous>, transform_indices = @transform_7, window_bounds = array<i64: 1, 32>}, {pipeline_mode = #tpu.pipeline_mode<synchronous>, transform_indices = @transform_8, window_bounds = array<i64: 32, 96>}, {pipeline_mode = #tpu.pipeline_mode<synchronous>, transform_indices = @transform_9, window_bounds = array<i64: 32, 128>}, {pipeline_mode = #tpu.pipeline_mode<synchronous>, transform_indices = @transform_10, window_bounds = array<i64: 1, 128>}, {pipeline_mode = #tpu.pipeline_mode<synchronous>, transform_indices = @transform_11, window_bounds = array<i64: 6, 8, 128>}, {pipeline_mode = #tpu.pipeline_mode<synchronous>, transform_indices = @transform_12, window_bounds = array<i64: 6, 10, 8>}, {pipeline_mode = #tpu.pipeline_mode<synchronous>, transform_indices = @transform_13, window_bounds = array<i64: 8, 32>}]} {
    %c0 = arith.constant 0 : index
    %c0_0 = arith.constant 0 : index
    %0 = vector.load %arg6[%c0, %c0_0] : memref<32x128xf32, #tpu.memory_space<vmem>>, vector<32x128xf32>
    %c0_1 = arith.constant 0 : index
    %c0_2 = arith.constant 0 : index
    %1 = vector.load %arg7[%c0_1, %c0_2] : memref<1x96xf32, #tpu.memory_space<vmem>>, vector<1x96xf32>
    %c0_3 = arith.constant 0 : index
    %c0_4 = arith.constant 0 : index
    %2 = vector.load %arg9[%c0_3, %c0_4] : memref<32x96xf32, #tpu.memory_space<vmem>>, vector<32x96xf32>
    %c0_5 = arith.constant 0 : index
    %c0_6 = arith.constant 0 : index
    %3 = vector.load %arg8[%c0_5, %c0_6] : memref<1x32xf32, #tpu.memory_space<vmem>>, vector<1x32xf32>
    %4 = vector.shape_cast %3 : vector<1x32xf32> to vector<1x1x32xf32>
    %5 = tpu.iota {dimensions = array<i32: 0>} : vector<10x8xi32>
    %c0_7 = arith.constant 0 : index
    %c0_8 = arith.constant 0 : index
    %6 = vector.load %arg4[%c0_7, %c0_8] : memref<1x8xi32, #tpu.memory_space<vmem>>, vector<1x8xi32>
    %7 = vector.broadcast %6 : vector<1x8xi32> to vector<10x8xi32>
    %8 = arith.cmpi slt, %5, %7 : vector<10x8xi32>
    %c0_9 = arith.constant 0 : index
    %c0_10 = arith.constant 0 : index
    %9 = vector.load %arg5[%c0_9, %c0_10] : memref<8x32xf32, #tpu.memory_space<vmem>>, vector<8x32xf32>
    %c0_i32 = arith.constant 0 : i32
    %cst = arith.constant dense<0.000000e+00> : vector<8x128xf32>
    %10 = tpu.matmul %9, %0, %cst {dimension_numbers = #tpu.dot_dimension_numbers<[1], [0], [0], [1], [0, 0, 1, 1], [], []>} : vector<8x32xf32>, vector<32x128xf32>, vector<8x128xf32> -> vector<8x128xf32>
    %11 = vector.extract_strided_slice %10 {offsets = [0, 0], sizes = [8, 32], strides = [1, 1]} : vector<8x128xf32> to vector<8x32xf32>
    %12 = vector.extract_strided_slice %10 {offsets = [0, 32], sizes = [8, 96], strides = [1, 1]} : vector<8x128xf32> to vector<8x96xf32>
    %13 = vector.broadcast %1 : vector<1x96xf32> to vector<8x96xf32>
    %14 = arith.addf %12, %13 : vector<8x96xf32>
    %c0_11 = arith.constant 0 : index
    %c0_12 = arith.constant 0 : index
    %c0_13 = arith.constant 0 : index
    %15 = vector.load %arg2[%c0_11, %c0_12, %c0_13] : memref<10x8x32xf32, #tpu.memory_space<vmem>>, vector<10x8x32xf32>
    %16 = vector.shape_cast %11 : vector<8x32xf32> to vector<1x8x32xf32>
    %17 = vector.broadcast %16 : vector<1x8x32xf32> to vector<10x8x32xf32>
    %18 = arith.addf %17, %15 : vector<10x8x32xf32>
    %19 = math.tanh %18 : vector<10x8x32xf32>
    %20 = vector.broadcast %4 : vector<1x1x32xf32> to vector<10x8x32xf32>
    %21 = arith.mulf %19, %20 : vector<10x8x32xf32>
    %cst_14 = arith.constant dense<0.000000e+00> : vector<10x8xf32>
    %22 = vector.multi_reduction <add>, %21, %cst_14 [2] : vector<10x8x32xf32> to vector<10x8xf32>
    %cst_15 = arith.constant -1.000000e+06 : f32
    %23 = vector.broadcast %cst_15 : f32 to vector<10x8xf32>
    %24 = arith.select %8, %22, %23 : vector<10x8xi1>, vector<10x8xf32>
    %25 = math.exp %24 : vector<10x8xf32>
    %26 = arith.index_cast %c0_i32 : i32 to index
    %c0_16 = arith.constant 0 : index
    %c0_17 = arith.constant 0 : index
    %27 = vector.load %arg13[%26, %c0_16, %c0_17] : memref<6x10x8xf32, #tpu.memory_space<vmem>>, vector<1x10x8xf32>
    %28 = vector.shape_cast %27 : vector<1x10x8xf32> to vector<10x8xf32>
    %29 = vector.shape_cast %25 : vector<10x8xf32> to vector<1x10x8xf32>
    tpu.vector_store %arg13[%26, %c0_16, %c0_17], %29 {strides = array<i32>} : memref<6x10x8xf32, #tpu.memory_space<vmem>>, vector<1x10x8xf32>,
    %30 = vector.shape_cast %25 : vector<10x8xf32> to vector<10x8x1xf32>
    %c0_18 = arith.constant 0 : index
    %c0_19 = arith.constant 0 : index
    %c0_20 = arith.constant 0 : index
    %31 = vector.load %arg3[%c0_18, %c0_19, %c0_20] : memref<10x8x33xf32, #tpu.memory_space<vmem>>, vector<10x8x33xf32>
    %32 = vector.broadcast %30 : vector<10x8x1xf32> to vector<10x8x33xf32>
    %33 = arith.mulf %32, %31 : vector<10x8x33xf32>
    %cst_21 = arith.constant dense<0.000000e+00> : vector<8x33xf32>
    %34 = vector.multi_reduction <add>, %33, %cst_21 [0] : vector<10x8x33xf32> to vector<8x33xf32>
    %35 = vector.extract_strided_slice %34 {offsets = [0, 32], sizes = [8, 1], strides = [1, 1]} : vector<8x33xf32> to vector<8x1xf32>
    %36 = tpu.reciprocal %35 : vector<8x1xf32> -> vector<8x1xf32>
    %37 = vector.extract_strided_slice %34 {offsets = [0, 0], sizes = [8, 32], strides = [1, 1]} : vector<8x33xf32> to vector<8x32xf32>
    %38 = vector.broadcast %36 : vector<8x1xf32> to vector<8x32xf32>
    %39 = arith.mulf %37, %38 : vector<8x32xf32>
    %cst_22 = arith.constant dense<0.000000e+00> : vector<8x96xf32>
    %40 = tpu.matmul %39, %2, %cst_22 {dimension_numbers = #tpu.dot_dimension_numbers<[1], [0], [0], [1], [0, 0, 1, 1], [], []>} : vector<8x32xf32>, vector<32x96xf32>, vector<8x96xf32> -> vector<8x96xf32>
    %41 = arith.index_cast %c0_i32 : i32 to index
    %c0_23 = arith.constant 0 : index
    %c0_24 = arith.constant 0 : index
    %42 = vector.load %arg1[%41, %c0_23, %c0_24] : memref<6x8x96xf32, #tpu.memory_space<vmem>>, vector<1x8x96xf32>
    %43 = vector.shape_cast %42 : vector<1x8x96xf32> to vector<8x96xf32>
    %44 = arith.addf %40, %43 : vector<8x96xf32>
    %45 = vector.extract_strided_slice %44 {offsets = [0, 0], sizes = [8, 32], strides = [1, 1]} : vector<8x96xf32> to vector<8x32xf32>
    %46 = vector.extract_strided_slice %14 {offsets = [0, 0], sizes = [8, 32], strides = [1, 1]} : vector<8x96xf32> to vector<8x32xf32>
    %47 = arith.addf %45, %46 : vector<8x32xf32>
    %48 = arith.negf %47 : vector<8x32xf32>
    %49 = math.exp %48 : vector<8x32xf32>
    %cst_25 = arith.constant 1.000000e+00 : f32
    %50 = vector.broadcast %cst_25 : f32 to vector<8x32xf32>
    %51 = arith.addf %50, %49 : vector<8x32xf32>
    %52 = arith.divf %50, %51 : vector<8x32xf32>
    %53 = vector.extract_strided_slice %44 {offsets = [0, 32], sizes = [8, 32], strides = [1, 1]} : vector<8x96xf32> to vector<8x32xf32>
    %54 = vector.extract_strided_slice %14 {offsets = [0, 32], sizes = [8, 32], strides = [1, 1]} : vector<8x96xf32> to vector<8x32xf32>
    %55 = arith.addf %53, %54 : vector<8x32xf32>
    %56 = arith.negf %55 : vector<8x32xf32>
    %57 = math.exp %56 : vector<8x32xf32>
    %cst_26 = arith.constant 1.000000e+00 : f32
    %58 = vector.broadcast %cst_26 : f32 to vector<8x32xf32>
    %59 = arith.addf %58, %57 : vector<8x32xf32>
    %60 = arith.divf %58, %59 : vector<8x32xf32>
    %61 = vector.extract_strided_slice %44 {offsets = [0, 64], sizes = [8, 32], strides = [1, 1]} : vector<8x96xf32> to vector<8x32xf32>
    %62 = vector.extract_strided_slice %14 {offsets = [0, 64], sizes = [8, 32], strides = [1, 1]} : vector<8x96xf32> to vector<8x32xf32>
    %63 = arith.mulf %52, %62 : vector<8x32xf32>
    %64 = arith.addf %61, %63 : vector<8x32xf32>
    %65 = math.tanh %64 : vector<8x32xf32>
    %cst_27 = arith.constant 1.000000e+00 : f32
    %66 = vector.broadcast %cst_27 : f32 to vector<8x32xf32>
    %67 = arith.subf %66, %60 : vector<8x32xf32>
    %68 = arith.mulf %67, %65 : vector<8x32xf32>
    %69 = arith.mulf %60, %9 : vector<8x32xf32>
    %70 = arith.addf %68, %69 : vector<8x32xf32>
    %71 = arith.index_cast %c0_i32 : i32 to index
    %c0_28 = arith.constant 0 : index
    %c0_29 = arith.constant 0 : index
    %72 = vector.load %arg15[%71, %c0_28, %c0_29] : memref<6x8x32xf32, #tpu.memory_space<vmem>>, vector<1x8x32xf32>
    %73 = vector.shape_cast %72 : vector<1x8x32xf32> to vector<8x32xf32>
    %74 = vector.shape_cast %70 : vector<8x32xf32> to vector<1x8x32xf32>
    tpu.vector_store %arg15[%71, %c0_28, %c0_29], %74 {strides = array<i32>} : memref<6x8x32xf32, #tpu.memory_space<vmem>>, vector<1x8x32xf32>,
    %c1_i32 = arith.constant 1 : i32
    %cst_30 = arith.constant dense<0.000000e+00> : vector<8x128xf32>
    %75 = tpu.matmul %70, %0, %cst_30 {dimension_numbers = #tpu.dot_dimension_numbers<[1], [0], [0], [1], [0, 0, 1, 1], [], []>} : vector<8x32xf32>, vector<32x128xf32>, vector<8x128xf32> -> vector<8x128xf32>
    %76 = vector.extract_strided_slice %75 {offsets = [0, 0], sizes = [8, 32], strides = [1, 1]} : vector<8x128xf32> to vector<8x32xf32>
    %77 = vector.extract_strided_slice %75 {offsets = [0, 32], sizes = [8, 96], strides = [1, 1]} : vector<8x128xf32> to vector<8x96xf32>
    %78 = vector.broadcast %1 : vector<1x96xf32> to vector<8x96xf32>
    %79 = arith.addf %77, %78 : vector<8x96xf32>
    %c0_31 = arith.constant 0 : index
    %c0_32 = arith.constant 0 : index
    %c0_33 = arith.constant 0 : index
    %80 = vector.load %arg2[%c0_31, %c0_32, %c0_33] : memref<10x8x32xf32, #tpu.memory_space<vmem>>, vector<10x8x32xf32>
    %81 = vector.shape_cast %76 : vector<8x32xf32> to vector<1x8x32xf32>
    %82 = vector.broadcast %81 : vector<1x8x32xf32> to vector<10x8x32xf32>
    %83 = arith.addf %82, %80 : vector<10x8x32xf32>
    %84 = math.tanh %83 : vector<10x8x32xf32>
    %85 = vector.broadcast %4 : vector<1x1x32xf32> to vector<10x8x32xf32>
    %86 = arith.mulf %84, %85 : vector<10x8x32xf32>
    %cst_34 = arith.constant dense<0.000000e+00> : vector<10x8xf32>
    %87 = vector.multi_reduction <add>, %86, %cst_34 [2] : vector<10x8x32xf32> to vector<10x8xf32>
    %cst_35 = arith.constant -1.000000e+06 : f32
    %88 = vector.broadcast %cst_35 : f32 to vector<10x8xf32>
    %89 = arith.select %8, %87, %88 : vector<10x8xi1>, vector<10x8xf32>
    %90 = math.exp %89 : vector<10x8xf32>
    %91 = arith.index_cast %c1_i32 : i32 to index
    %c0_36 = arith.constant 0 : index
    %c0_37 = arith.constant 0 : index
    %92 = vector.load %arg13[%91, %c0_36, %c0_37] : memref<6x10x8xf32, #tpu.memory_space<vmem>>, vector<1x10x8xf32>
    %93 = vector.shape_cast %92 : vector<1x10x8xf32> to vector<10x8xf32>
    %94 = vector.shape_cast %90 : vector<10x8xf32> to vector<1x10x8xf32>
    tpu.vector_store %arg13[%91, %c0_36, %c0_37], %94 {strides = array<i32>} : memref<6x10x8xf32, #tpu.memory_space<vmem>>, vector<1x10x8xf32>,
    %95 = vector.shape_cast %90 : vector<10x8xf32> to vector<10x8x1xf32>
    %c0_38 = arith.constant 0 : index
    %c0_39 = arith.constant 0 : index
    %c0_40 = arith.constant 0 : index
    %96 = vector.load %arg3[%c0_38, %c0_39, %c0_40] : memref<10x8x33xf32, #tpu.memory_space<vmem>>, vector<10x8x33xf32>
    %97 = vector.broadcast %95 : vector<10x8x1xf32> to vector<10x8x33xf32>
    %98 = arith.mulf %97, %96 : vector<10x8x33xf32>
    %cst_41 = arith.constant dense<0.000000e+00> : vector<8x33xf32>
    %99 = vector.multi_reduction <add>, %98, %cst_41 [0] : vector<10x8x33xf32> to vector<8x33xf32>
    %100 = vector.extract_strided_slice %99 {offsets = [0, 32], sizes = [8, 1], strides = [1, 1]} : vector<8x33xf32> to vector<8x1xf32>
    %101 = tpu.reciprocal %100 : vector<8x1xf32> -> vector<8x1xf32>
    %102 = vector.extract_strided_slice %99 {offsets = [0, 0], sizes = [8, 32], strides = [1, 1]} : vector<8x33xf32> to vector<8x32xf32>
    %103 = vector.broadcast %101 : vector<8x1xf32> to vector<8x32xf32>
    %104 = arith.mulf %102, %103 : vector<8x32xf32>
    %cst_42 = arith.constant dense<0.000000e+00> : vector<8x96xf32>
    %105 = tpu.matmul %104, %2, %cst_42 {dimension_numbers = #tpu.dot_dimension_numbers<[1], [0], [0], [1], [0, 0, 1, 1], [], []>} : vector<8x32xf32>, vector<32x96xf32>, vector<8x96xf32> -> vector<8x96xf32>
    %106 = arith.index_cast %c1_i32 : i32 to index
    %c0_43 = arith.constant 0 : index
    %c0_44 = arith.constant 0 : index
    %107 = vector.load %arg1[%106, %c0_43, %c0_44] : memref<6x8x96xf32, #tpu.memory_space<vmem>>, vector<1x8x96xf32>
    %108 = vector.shape_cast %107 : vector<1x8x96xf32> to vector<8x96xf32>
    %109 = arith.addf %105, %108 : vector<8x96xf32>
    %110 = vector.extract_strided_slice %109 {offsets = [0, 0], sizes = [8, 32], strides = [1, 1]} : vector<8x96xf32> to vector<8x32xf32>
    %111 = vector.extract_strided_slice %79 {offsets = [0, 0], sizes = [8, 32], strides = [1, 1]} : vector<8x96xf32> to vector<8x32xf32>
    %112 = arith.addf %110, %111 : vector<8x32xf32>
    %113 = arith.negf %112 : vector<8x32xf32>
    %114 = math.exp %113 : vector<8x32xf32>
    %cst_45 = arith.constant 1.000000e+00 : f32
    %115 = vector.broadcast %cst_45 : f32 to vector<8x32xf32>
    %116 = arith.addf %115, %114 : vector<8x32xf32>
    %117 = arith.divf %115, %116 : vector<8x32xf32>
    %118 = vector.extract_strided_slice %109 {offsets = [0, 32], sizes = [8, 32], strides = [1, 1]} : vector<8x96xf32> to vector<8x32xf32>
    %119 = vector.extract_strided_slice %79 {offsets = [0, 32], sizes = [8, 32], strides = [1, 1]} : vector<8x96xf32> to vector<8x32xf32>
    %120 = arith.addf %118, %119 : vector<8x32xf32>
    %121 = arith.negf %120 : vector<8x32xf32>
    %122 = math.exp %121 : vector<8x32xf32>
    %cst_46 = arith.constant 1.000000e+00 : f32
    %123 = vector.broadcast %cst_46 : f32 to vector<8x32xf32>
    %124 = arith.addf %123, %122 : vector<8x32xf32>
    %125 = arith.divf %123, %124 : vector<8x32xf32>
    %126 = vector.extract_strided_slice %109 {offsets = [0, 64], sizes = [8, 32], strides = [1, 1]} : vector<8x96xf32> to vector<8x32xf32>
    %127 = vector.extract_strided_slice %79 {offsets = [0, 64], sizes = [8, 32], strides = [1, 1]} : vector<8x96xf32> to vector<8x32xf32>
    %128 = arith.mulf %117, %127 : vector<8x32xf32>
    %129 = arith.addf %126, %128 : vector<8x32xf32>
    %130 = math.tanh %129 : vector<8x32xf32>
    %cst_47 = arith.constant 1.000000e+00 : f32
    %131 = vector.broadcast %cst_47 : f32 to vector<8x32xf32>
    %132 = arith.subf %131, %125 : vector<8x32xf32>
    %133 = arith.mulf %132, %130 : vector<8x32xf32>
    %134 = arith.mulf %125, %70 : vector<8x32xf32>
    %135 = arith.addf %133, %134 : vector<8x32xf32>
    %136 = arith.index_cast %c1_i32 : i32 to index
    %c0_48 = arith.constant 0 : index
    %c0_49 = arith.constant 0 : index
    %137 = vector.load %arg15[%136, %c0_48, %c0_49] : memref<6x8x32xf32, #tpu.memory_space<vmem>>, vector<1x8x32xf32>
    %138 = vector.shape_cast %137 : vector<1x8x32xf32> to vector<8x32xf32>
    %139 = vector.shape_cast %135 : vector<8x32xf32> to vector<1x8x32xf32>
    tpu.vector_store %arg15[%136, %c0_48, %c0_49], %139 {strides = array<i32>} : memref<6x8x32xf32, #tpu.memory_space<vmem>>, vector<1x8x32xf32>,
    %c2_i32 = arith.constant 2 : i32
    %cst_50 = arith.constant dense<0.000000e+00> : vector<8x128xf32>
    %140 = tpu.matmul %135, %0, %cst_50 {dimension_numbers = #tpu.dot_dimension_numbers<[1], [0], [0], [1], [0, 0, 1, 1], [], []>} : vector<8x32xf32>, vector<32x128xf32>, vector<8x128xf32> -> vector<8x128xf32>
    %141 = vector.extract_strided_slice %140 {offsets = [0, 0], sizes = [8, 32], strides = [1, 1]} : vector<8x128xf32> to vector<8x32xf32>
    %142 = vector.extract_strided_slice %140 {offsets = [0, 32], sizes = [8, 96], strides = [1, 1]} : vector<8x128xf32> to vector<8x96xf32>
    %143 = vector.broadcast %1 : vector<1x96xf32> to vector<8x96xf32>
    %144 = arith.addf %142, %143 : vector<8x96xf32>
    %c0_51 = arith.constant 0 : index
    %c0_52 = arith.constant 0 : index
    %c0_53 = arith.constant 0 : index
    %145 = vector.load %arg2[%c0_51, %c0_52, %c0_53] : memref<10x8x32xf32, #tpu.memory_space<vmem>>, vector<10x8x32xf32>
    %146 = vector.shape_cast %141 : vector<8x32xf32> to vector<1x8x32xf32>
    %147 = vector.broadcast %146 : vector<1x8x32xf32> to vector<10x8x32xf32>
    %148 = arith.addf %147, %145 : vector<10x8x32xf32>
    %149 = math.tanh %148 : vector<10x8x32xf32>
    %150 = vector.broadcast %4 : vector<1x1x32xf32> to vector<10x8x32xf32>
    %151 = arith.mulf %149, %150 : vector<10x8x32xf32>
    %cst_54 = arith.constant dense<0.000000e+00> : vector<10x8xf32>
    %152 = vector.multi_reduction <add>, %151, %cst_54 [2] : vector<10x8x32xf32> to vector<10x8xf32>
    %cst_55 = arith.constant -1.000000e+06 : f32
    %153 = vector.broadcast %cst_55 : f32 to vector<10x8xf32>
    %154 = arith.select %8, %152, %153 : vector<10x8xi1>, vector<10x8xf32>
    %155 = math.exp %154 : vector<10x8xf32>
    %156 = arith.index_cast %c2_i32 : i32 to index
    %c0_56 = arith.constant 0 : index
    %c0_57 = arith.constant 0 : index
    %157 = vector.load %arg13[%156, %c0_56, %c0_57] : memref<6x10x8xf32, #tpu.memory_space<vmem>>, vector<1x10x8xf32>
    %158 = vector.shape_cast %157 : vector<1x10x8xf32> to vector<10x8xf32>
    %159 = vector.shape_cast %155 : vector<10x8xf32> to vector<1x10x8xf32>
    tpu.vector_store %arg13[%156, %c0_56, %c0_57], %159 {strides = array<i32>} : memref<6x10x8xf32, #tpu.memory_space<vmem>>, vector<1x10x8xf32>,
    %160 = vector.shape_cast %155 : vector<10x8xf32> to vector<10x8x1xf32>
    %c0_58 = arith.constant 0 : index
    %c0_59 = arith.constant 0 : index
    %c0_60 = arith.constant 0 : index
    %161 = vector.load %arg3[%c0_58, %c0_59, %c0_60] : memref<10x8x33xf32, #tpu.memory_space<vmem>>, vector<10x8x33xf32>
    %162 = vector.broadcast %160 : vector<10x8x1xf32> to vector<10x8x33xf32>
    %163 = arith.mulf %162, %161 : vector<10x8x33xf32>
    %cst_61 = arith.constant dense<0.000000e+00> : vector<8x33xf32>
    %164 = vector.multi_reduction <add>, %163, %cst_61 [0] : vector<10x8x33xf32> to vector<8x33xf32>
    %165 = vector.extract_strided_slice %164 {offsets = [0, 32], sizes = [8, 1], strides = [1, 1]} : vector<8x33xf32> to vector<8x1xf32>
    %166 = tpu.reciprocal %165 : vector<8x1xf32> -> vector<8x1xf32>
    %167 = vector.extract_strided_slice %164 {offsets = [0, 0], sizes = [8, 32], strides = [1, 1]} : vector<8x33xf32> to vector<8x32xf32>
    %168 = vector.broadcast %166 : vector<8x1xf32> to vector<8x32xf32>
    %169 = arith.mulf %167, %168 : vector<8x32xf32>
    %cst_62 = arith.constant dense<0.000000e+00> : vector<8x96xf32>
    %170 = tpu.matmul %169, %2, %cst_62 {dimension_numbers = #tpu.dot_dimension_numbers<[1], [0], [0], [1], [0, 0, 1, 1], [], []>} : vector<8x32xf32>, vector<32x96xf32>, vector<8x96xf32> -> vector<8x96xf32>
    %171 = arith.index_cast %c2_i32 : i32 to index
    %c0_63 = arith.constant 0 : index
    %c0_64 = arith.constant 0 : index
    %172 = vector.load %arg1[%171, %c0_63, %c0_64] : memref<6x8x96xf32, #tpu.memory_space<vmem>>, vector<1x8x96xf32>
    %173 = vector.shape_cast %172 : vector<1x8x96xf32> to vector<8x96xf32>
    %174 = arith.addf %170, %173 : vector<8x96xf32>
    %175 = vector.extract_strided_slice %174 {offsets = [0, 0], sizes = [8, 32], strides = [1, 1]} : vector<8x96xf32> to vector<8x32xf32>
    %176 = vector.extract_strided_slice %144 {offsets = [0, 0], sizes = [8, 32], strides = [1, 1]} : vector<8x96xf32> to vector<8x32xf32>
    %177 = arith.addf %175, %176 : vector<8x32xf32>
    %178 = arith.negf %177 : vector<8x32xf32>
    %179 = math.exp %178 : vector<8x32xf32>
    %cst_65 = arith.constant 1.000000e+00 : f32
    %180 = vector.broadcast %cst_65 : f32 to vector<8x32xf32>
    %181 = arith.addf %180, %179 : vector<8x32xf32>
    %182 = arith.divf %180, %181 : vector<8x32xf32>
    %183 = vector.extract_strided_slice %174 {offsets = [0, 32], sizes = [8, 32], strides = [1, 1]} : vector<8x96xf32> to vector<8x32xf32>
    %184 = vector.extract_strided_slice %144 {offsets = [0, 32], sizes = [8, 32], strides = [1, 1]} : vector<8x96xf32> to vector<8x32xf32>
    %185 = arith.addf %183, %184 : vector<8x32xf32>
    %186 = arith.negf %185 : vector<8x32xf32>
    %187 = math.exp %186 : vector<8x32xf32>
    %cst_66 = arith.constant 1.000000e+00 : f32
    %188 = vector.broadcast %cst_66 : f32 to vector<8x32xf32>
    %189 = arith.addf %188, %187 : vector<8x32xf32>
    %190 = arith.divf %188, %189 : vector<8x32xf32>
    %191 = vector.extract_strided_slice %174 {offsets = [0, 64], sizes = [8, 32], strides = [1, 1]} : vector<8x96xf32> to vector<8x32xf32>
    %192 = vector.extract_strided_slice %144 {offsets = [0, 64], sizes = [8, 32], strides = [1, 1]} : vector<8x96xf32> to vector<8x32xf32>
    %193 = arith.mulf %182, %192 : vector<8x32xf32>
    %194 = arith.addf %191, %193 : vector<8x32xf32>
    %195 = math.tanh %194 : vector<8x32xf32>
    %cst_67 = arith.constant 1.000000e+00 : f32
    %196 = vector.broadcast %cst_67 : f32 to vector<8x32xf32>
    %197 = arith.subf %196, %190 : vector<8x32xf32>
    %198 = arith.mulf %197, %195 : vector<8x32xf32>
    %199 = arith.mulf %190, %135 : vector<8x32xf32>
    %200 = arith.addf %198, %199 : vector<8x32xf32>
    %201 = arith.index_cast %c2_i32 : i32 to index
    %c0_68 = arith.constant 0 : index
    %c0_69 = arith.constant 0 : index
    %202 = vector.load %arg15[%201, %c0_68, %c0_69] : memref<6x8x32xf32, #tpu.memory_space<vmem>>, vector<1x8x32xf32>
    %203 = vector.shape_cast %202 : vector<1x8x32xf32> to vector<8x32xf32>
    %204 = vector.shape_cast %200 : vector<8x32xf32> to vector<1x8x32xf32>
    tpu.vector_store %arg15[%201, %c0_68, %c0_69], %204 {strides = array<i32>} : memref<6x8x32xf32, #tpu.memory_space<vmem>>, vector<1x8x32xf32>,
    %c3_i32 = arith.constant 3 : i32
    %cst_70 = arith.constant dense<0.000000e+00> : vector<8x128xf32>
    %205 = tpu.matmul %200, %0, %cst_70 {dimension_numbers = #tpu.dot_dimension_numbers<[1], [0], [0], [1], [0, 0, 1, 1], [], []>} : vector<8x32xf32>, vector<32x128xf32>, vector<8x128xf32> -> vector<8x128xf32>
    %206 = vector.extract_strided_slice %205 {offsets = [0, 0], sizes = [8, 32], strides = [1, 1]} : vector<8x128xf32> to vector<8x32xf32>
    %207 = vector.extract_strided_slice %205 {offsets = [0, 32], sizes = [8, 96], strides = [1, 1]} : vector<8x128xf32> to vector<8x96xf32>
    %208 = vector.broadcast %1 : vector<1x96xf32> to vector<8x96xf32>
    %209 = arith.addf %207, %208 : vector<8x96xf32>
    %c0_71 = arith.constant 0 : index
    %c0_72 = arith.constant 0 : index
    %c0_73 = arith.constant 0 : index
    %210 = vector.load %arg2[%c0_71, %c0_72, %c0_73] : memref<10x8x32xf32, #tpu.memory_space<vmem>>, vector<10x8x32xf32>
    %211 = vector.shape_cast %206 : vector<8x32xf32> to vector<1x8x32xf32>
    %212 = vector.broadcast %211 : vector<1x8x32xf32> to vector<10x8x32xf32>
    %213 = arith.addf %212, %210 : vector<10x8x32xf32>
    %214 = math.tanh %213 : vector<10x8x32xf32>
    %215 = vector.broadcast %4 : vector<1x1x32xf32> to vector<10x8x32xf32>
    %216 = arith.mulf %214, %215 : vector<10x8x32xf32>
    %cst_74 = arith.constant dense<0.000000e+00> : vector<10x8xf32>
    %217 = vector.multi_reduction <add>, %216, %cst_74 [2] : vector<10x8x32xf32> to vector<10x8xf32>
    %cst_75 = arith.constant -1.000000e+06 : f32
    %218 = vector.broadcast %cst_75 : f32 to vector<10x8xf32>
    %219 = arith.select %8, %217, %218 : vector<10x8xi1>, vector<10x8xf32>
    %220 = math.exp %219 : vector<10x8xf32>
    %221 = arith.index_cast %c3_i32 : i32 to index
    %c0_76 = arith.constant 0 : index
    %c0_77 = arith.constant 0 : index
    %222 = vector.load %arg13[%221, %c0_76, %c0_77] : memref<6x10x8xf32, #tpu.memory_space<vmem>>, vector<1x10x8xf32>
    %223 = vector.shape_cast %222 : vector<1x10x8xf32> to vector<10x8xf32>
    %224 = vector.shape_cast %220 : vector<10x8xf32> to vector<1x10x8xf32>
    tpu.vector_store %arg13[%221, %c0_76, %c0_77], %224 {strides = array<i32>} : memref<6x10x8xf32, #tpu.memory_space<vmem>>, vector<1x10x8xf32>,
    %225 = vector.shape_cast %220 : vector<10x8xf32> to vector<10x8x1xf32>
    %c0_78 = arith.constant 0 : index
    %c0_79 = arith.constant 0 : index
    %c0_80 = arith.constant 0 : index
    %226 = vector.load %arg3[%c0_78, %c0_79, %c0_80] : memref<10x8x33xf32, #tpu.memory_space<vmem>>, vector<10x8x33xf32>
    %227 = vector.broadcast %225 : vector<10x8x1xf32> to vector<10x8x33xf32>
    %228 = arith.mulf %227, %226 : vector<10x8x33xf32>
    %cst_81 = arith.constant dense<0.000000e+00> : vector<8x33xf32>
    %229 = vector.multi_reduction <add>, %228, %cst_81 [0] : vector<10x8x33xf32> to vector<8x33xf32>
    %230 = vector.extract_strided_slice %229 {offsets = [0, 32], sizes = [8, 1], strides = [1, 1]} : vector<8x33xf32> to vector<8x1xf32>
    %231 = tpu.reciprocal %230 : vector<8x1xf32> -> vector<8x1xf32>
    %232 = vector.extract_strided_slice %229 {offsets = [0, 0], sizes = [8, 32], strides = [1, 1]} : vector<8x33xf32> to vector<8x32xf32>
    %233 = vector.broadcast %231 : vector<8x1xf32> to vector<8x32xf32>
    %234 = arith.mulf %232, %233 : vector<8x32xf32>
    %cst_82 = arith.constant dense<0.000000e+00> : vector<8x96xf32>
    %235 = tpu.matmul %234, %2, %cst_82 {dimension_numbers = #tpu.dot_dimension_numbers<[1], [0], [0], [1], [0, 0, 1, 1], [], []>} : vector<8x32xf32>, vector<32x96xf32>, vector<8x96xf32> -> vector<8x96xf32>
    %236 = arith.index_cast %c3_i32 : i32 to index
    %c0_83 = arith.constant 0 : index
    %c0_84 = arith.constant 0 : index
    %237 = vector.load %arg1[%236, %c0_83, %c0_84] : memref<6x8x96xf32, #tpu.memory_space<vmem>>, vector<1x8x96xf32>
    %238 = vector.shape_cast %237 : vector<1x8x96xf32> to vector<8x96xf32>
    %239 = arith.addf %235, %238 : vector<8x96xf32>
    %240 = vector.extract_strided_slice %239 {offsets = [0, 0], sizes = [8, 32], strides = [1, 1]} : vector<8x96xf32> to vector<8x32xf32>
    %241 = vector.extract_strided_slice %209 {offsets = [0, 0], sizes = [8, 32], strides = [1, 1]} : vector<8x96xf32> to vector<8x32xf32>
    %242 = arith.addf %240, %241 : vector<8x32xf32>
    %243 = arith.negf %242 : vector<8x32xf32>
    %244 = math.exp %243 : vector<8x32xf32>
    %cst_85 = arith.constant 1.000000e+00 : f32
    %245 = vector.broadcast %cst_85 : f32 to vector<8x32xf32>
    %246 = arith.addf %245, %244 : vector<8x32xf32>
    %247 = arith.divf %245, %246 : vector<8x32xf32>
    %248 = vector.extract_strided_slice %239 {offsets = [0, 32], sizes = [8, 32], strides = [1, 1]} : vector<8x96xf32> to vector<8x32xf32>
    %249 = vector.extract_strided_slice %209 {offsets = [0, 32], sizes = [8, 32], strides = [1, 1]} : vector<8x96xf32> to vector<8x32xf32>
    %250 = arith.addf %248, %249 : vector<8x32xf32>
    %251 = arith.negf %250 : vector<8x32xf32>
    %252 = math.exp %251 : vector<8x32xf32>
    %cst_86 = arith.constant 1.000000e+00 : f32
    %253 = vector.broadcast %cst_86 : f32 to vector<8x32xf32>
    %254 = arith.addf %253, %252 : vector<8x32xf32>
    %255 = arith.divf %253, %254 : vector<8x32xf32>
    %256 = vector.extract_strided_slice %239 {offsets = [0, 64], sizes = [8, 32], strides = [1, 1]} : vector<8x96xf32> to vector<8x32xf32>
    %257 = vector.extract_strided_slice %209 {offsets = [0, 64], sizes = [8, 32], strides = [1, 1]} : vector<8x96xf32> to vector<8x32xf32>
    %258 = arith.mulf %247, %257 : vector<8x32xf32>
    %259 = arith.addf %256, %258 : vector<8x32xf32>
    %260 = math.tanh %259 : vector<8x32xf32>
    %cst_87 = arith.constant 1.000000e+00 : f32
    %261 = vector.broadcast %cst_87 : f32 to vector<8x32xf32>
    %262 = arith.subf %261, %255 : vector<8x32xf32>
    %263 = arith.mulf %262, %260 : vector<8x32xf32>
    %264 = arith.mulf %255, %200 : vector<8x32xf32>
    %265 = arith.addf %263, %264 : vector<8x32xf32>
    %266 = arith.index_cast %c3_i32 : i32 to index
    %c0_88 = arith.constant 0 : index
    %c0_89 = arith.constant 0 : index
    %267 = vector.load %arg15[%266, %c0_88, %c0_89] : memref<6x8x32xf32, #tpu.memory_space<vmem>>, vector<1x8x32xf32>
    %268 = vector.shape_cast %267 : vector<1x8x32xf32> to vector<8x32xf32>
    %269 = vector.shape_cast %265 : vector<8x32xf32> to vector<1x8x32xf32>
    tpu.vector_store %arg15[%266, %c0_88, %c0_89], %269 {strides = array<i32>} : memref<6x8x32xf32, #tpu.memory_space<vmem>>, vector<1x8x32xf32>,
    %c4_i32 = arith.constant 4 : i32
    %cst_90 = arith.constant dense<0.000000e+00> : vector<8x128xf32>
    %270 = tpu.matmul %265, %0, %cst_90 {dimension_numbers = #tpu.dot_dimension_numbers<[1], [0], [0], [1], [0, 0, 1, 1], [], []>} : vector<8x32xf32>, vector<32x128xf32>, vector<8x128xf32> -> vector<8x128xf32>
    %271 = vector.extract_strided_slice %270 {offsets = [0, 0], sizes = [8, 32], strides = [1, 1]} : vector<8x128xf32> to vector<8x32xf32>
    %272 = vector.extract_strided_slice %270 {offsets = [0, 32], sizes = [8, 96], strides = [1, 1]} : vector<8x128xf32> to vector<8x96xf32>
    %273 = vector.broadcast %1 : vector<1x96xf32> to vector<8x96xf32>
    %274 = arith.addf %272, %273 : vector<8x96xf32>
    %c0_91 = arith.constant 0 : index
    %c0_92 = arith.constant 0 : index
    %c0_93 = arith.constant 0 : index
    %275 = vector.load %arg2[%c0_91, %c0_92, %c0_93] : memref<10x8x32xf32, #tpu.memory_space<vmem>>, vector<10x8x32xf32>
    %276 = vector.shape_cast %271 : vector<8x32xf32> to vector<1x8x32xf32>
    %277 = vector.broadcast %276 : vector<1x8x32xf32> to vector<10x8x32xf32>
    %278 = arith.addf %277, %275 : vector<10x8x32xf32>
    %279 = math.tanh %278 : vector<10x8x32xf32>
    %280 = vector.broadcast %4 : vector<1x1x32xf32> to vector<10x8x32xf32>
    %281 = arith.mulf %279, %280 : vector<10x8x32xf32>
    %cst_94 = arith.constant dense<0.000000e+00> : vector<10x8xf32>
    %282 = vector.multi_reduction <add>, %281, %cst_94 [2] : vector<10x8x32xf32> to vector<10x8xf32>
    %cst_95 = arith.constant -1.000000e+06 : f32
    %283 = vector.broadcast %cst_95 : f32 to vector<10x8xf32>
    %284 = arith.select %8, %282, %283 : vector<10x8xi1>, vector<10x8xf32>
    %285 = math.exp %284 : vector<10x8xf32>
    %286 = arith.index_cast %c4_i32 : i32 to index
    %c0_96 = arith.constant 0 : index
    %c0_97 = arith.constant 0 : index
    %287 = vector.load %arg13[%286, %c0_96, %c0_97] : memref<6x10x8xf32, #tpu.memory_space<vmem>>, vector<1x10x8xf32>
    %288 = vector.shape_cast %287 : vector<1x10x8xf32> to vector<10x8xf32>
    %289 = vector.shape_cast %285 : vector<10x8xf32> to vector<1x10x8xf32>
    tpu.vector_store %arg13[%286, %c0_96, %c0_97], %289 {strides = array<i32>} : memref<6x10x8xf32, #tpu.memory_space<vmem>>, vector<1x10x8xf32>,
    %290 = vector.shape_cast %285 : vector<10x8xf32> to vector<10x8x1xf32>
    %c0_98 = arith.constant 0 : index
    %c0_99 = arith.constant 0 : index
    %c0_100 = arith.constant 0 : index
    %291 = vector.load %arg3[%c0_98, %c0_99, %c0_100] : memref<10x8x33xf32, #tpu.memory_space<vmem>>, vector<10x8x33xf32>
    %292 = vector.broadcast %290 : vector<10x8x1xf32> to vector<10x8x33xf32>
    %293 = arith.mulf %292, %291 : vector<10x8x33xf32>
    %cst_101 = arith.constant dense<0.000000e+00> : vector<8x33xf32>
    %294 = vector.multi_reduction <add>, %293, %cst_101 [0] : vector<10x8x33xf32> to vector<8x33xf32>
    %295 = vector.extract_strided_slice %294 {offsets = [0, 32], sizes = [8, 1], strides = [1, 1]} : vector<8x33xf32> to vector<8x1xf32>
    %296 = tpu.reciprocal %295 : vector<8x1xf32> -> vector<8x1xf32>
    %297 = vector.extract_strided_slice %294 {offsets = [0, 0], sizes = [8, 32], strides = [1, 1]} : vector<8x33xf32> to vector<8x32xf32>
    %298 = vector.broadcast %296 : vector<8x1xf32> to vector<8x32xf32>
    %299 = arith.mulf %297, %298 : vector<8x32xf32>
    %cst_102 = arith.constant dense<0.000000e+00> : vector<8x96xf32>
    %300 = tpu.matmul %299, %2, %cst_102 {dimension_numbers = #tpu.dot_dimension_numbers<[1], [0], [0], [1], [0, 0, 1, 1], [], []>} : vector<8x32xf32>, vector<32x96xf32>, vector<8x96xf32> -> vector<8x96xf32>
    %301 = arith.index_cast %c4_i32 : i32 to index
    %c0_103 = arith.constant 0 : index
    %c0_104 = arith.constant 0 : index
    %302 = vector.load %arg1[%301, %c0_103, %c0_104] : memref<6x8x96xf32, #tpu.memory_space<vmem>>, vector<1x8x96xf32>
    %303 = vector.shape_cast %302 : vector<1x8x96xf32> to vector<8x96xf32>
    %304 = arith.addf %300, %303 : vector<8x96xf32>
    %305 = vector.extract_strided_slice %304 {offsets = [0, 0], sizes = [8, 32], strides = [1, 1]} : vector<8x96xf32> to vector<8x32xf32>
    %306 = vector.extract_strided_slice %274 {offsets = [0, 0], sizes = [8, 32], strides = [1, 1]} : vector<8x96xf32> to vector<8x32xf32>
    %307 = arith.addf %305, %306 : vector<8x32xf32>
    %308 = arith.negf %307 : vector<8x32xf32>
    %309 = math.exp %308 : vector<8x32xf32>
    %cst_105 = arith.constant 1.000000e+00 : f32
    %310 = vector.broadcast %cst_105 : f32 to vector<8x32xf32>
    %311 = arith.addf %310, %309 : vector<8x32xf32>
    %312 = arith.divf %310, %311 : vector<8x32xf32>
    %313 = vector.extract_strided_slice %304 {offsets = [0, 32], sizes = [8, 32], strides = [1, 1]} : vector<8x96xf32> to vector<8x32xf32>
    %314 = vector.extract_strided_slice %274 {offsets = [0, 32], sizes = [8, 32], strides = [1, 1]} : vector<8x96xf32> to vector<8x32xf32>
    %315 = arith.addf %313, %314 : vector<8x32xf32>
    %316 = arith.negf %315 : vector<8x32xf32>
    %317 = math.exp %316 : vector<8x32xf32>
    %cst_106 = arith.constant 1.000000e+00 : f32
    %318 = vector.broadcast %cst_106 : f32 to vector<8x32xf32>
    %319 = arith.addf %318, %317 : vector<8x32xf32>
    %320 = arith.divf %318, %319 : vector<8x32xf32>
    %321 = vector.extract_strided_slice %304 {offsets = [0, 64], sizes = [8, 32], strides = [1, 1]} : vector<8x96xf32> to vector<8x32xf32>
    %322 = vector.extract_strided_slice %274 {offsets = [0, 64], sizes = [8, 32], strides = [1, 1]} : vector<8x96xf32> to vector<8x32xf32>
    %323 = arith.mulf %312, %322 : vector<8x32xf32>
    %324 = arith.addf %321, %323 : vector<8x32xf32>
    %325 = math.tanh %324 : vector<8x32xf32>
    %cst_107 = arith.constant 1.000000e+00 : f32
    %326 = vector.broadcast %cst_107 : f32 to vector<8x32xf32>
    %327 = arith.subf %326, %320 : vector<8x32xf32>
    %328 = arith.mulf %327, %325 : vector<8x32xf32>
    %329 = arith.mulf %320, %265 : vector<8x32xf32>
    %330 = arith.addf %328, %329 : vector<8x32xf32>
    %331 = arith.index_cast %c4_i32 : i32 to index
    %c0_108 = arith.constant 0 : index
    %c0_109 = arith.constant 0 : index
    %332 = vector.load %arg15[%331, %c0_108, %c0_109] : memref<6x8x32xf32, #tpu.memory_space<vmem>>, vector<1x8x32xf32>
    %333 = vector.shape_cast %332 : vector<1x8x32xf32> to vector<8x32xf32>
    %334 = vector.shape_cast %330 : vector<8x32xf32> to vector<1x8x32xf32>
    tpu.vector_store %arg15[%331, %c0_108, %c0_109], %334 {strides = array<i32>} : memref<6x8x32xf32, #tpu.memory_space<vmem>>, vector<1x8x32xf32>,
    %c5_i32 = arith.constant 5 : i32
    %cst_110 = arith.constant dense<0.000000e+00> : vector<8x128xf32>
    %335 = tpu.matmul %330, %0, %cst_110 {dimension_numbers = #tpu.dot_dimension_numbers<[1], [0], [0], [1], [0, 0, 1, 1], [], []>} : vector<8x32xf32>, vector<32x128xf32>, vector<8x128xf32> -> vector<8x128xf32>
    %336 = vector.extract_strided_slice %335 {offsets = [0, 0], sizes = [8, 32], strides = [1, 1]} : vector<8x128xf32> to vector<8x32xf32>
    %337 = vector.extract_strided_slice %335 {offsets = [0, 32], sizes = [8, 96], strides = [1, 1]} : vector<8x128xf32> to vector<8x96xf32>
    %338 = vector.broadcast %1 : vector<1x96xf32> to vector<8x96xf32>
    %339 = arith.addf %337, %338 : vector<8x96xf32>
    %c0_111 = arith.constant 0 : index
    %c0_112 = arith.constant 0 : index
    %c0_113 = arith.constant 0 : index
    %340 = vector.load %arg2[%c0_111, %c0_112, %c0_113] : memref<10x8x32xf32, #tpu.memory_space<vmem>>, vector<10x8x32xf32>
    %341 = vector.shape_cast %336 : vector<8x32xf32> to vector<1x8x32xf32>
    %342 = vector.broadcast %341 : vector<1x8x32xf32> to vector<10x8x32xf32>
    %343 = arith.addf %342, %340 : vector<10x8x32xf32>
    %344 = math.tanh %343 : vector<10x8x32xf32>
    %345 = vector.broadcast %4 : vector<1x1x32xf32> to vector<10x8x32xf32>
    %346 = arith.mulf %344, %345 : vector<10x8x32xf32>
    %cst_114 = arith.constant dense<0.000000e+00> : vector<10x8xf32>
    %347 = vector.multi_reduction <add>, %346, %cst_114 [2] : vector<10x8x32xf32> to vector<10x8xf32>
    %cst_115 = arith.constant -1.000000e+06 : f32
    %348 = vector.broadcast %cst_115 : f32 to vector<10x8xf32>
    %349 = arith.select %8, %347, %348 : vector<10x8xi1>, vector<10x8xf32>
    %350 = math.exp %349 : vector<10x8xf32>
    %351 = arith.index_cast %c5_i32 : i32 to index
    %c0_116 = arith.constant 0 : index
    %c0_117 = arith.constant 0 : index
    %352 = vector.load %arg13[%351, %c0_116, %c0_117] : memref<6x10x8xf32, #tpu.memory_space<vmem>>, vector<1x10x8xf32>
    %353 = vector.shape_cast %352 : vector<1x10x8xf32> to vector<10x8xf32>
    %354 = vector.shape_cast %350 : vector<10x8xf32> to vector<1x10x8xf32>
    tpu.vector_store %arg13[%351, %c0_116, %c0_117], %354 {strides = array<i32>} : memref<6x10x8xf32, #tpu.memory_space<vmem>>, vector<1x10x8xf32>,
    %355 = vector.shape_cast %350 : vector<10x8xf32> to vector<10x8x1xf32>
    %c0_118 = arith.constant 0 : index
    %c0_119 = arith.constant 0 : index
    %c0_120 = arith.constant 0 : index
    %356 = vector.load %arg3[%c0_118, %c0_119, %c0_120] : memref<10x8x33xf32, #tpu.memory_space<vmem>>, vector<10x8x33xf32>
    %357 = vector.broadcast %355 : vector<10x8x1xf32> to vector<10x8x33xf32>
    %358 = arith.mulf %357, %356 : vector<10x8x33xf32>
    %cst_121 = arith.constant dense<0.000000e+00> : vector<8x33xf32>
    %359 = vector.multi_reduction <add>, %358, %cst_121 [0] : vector<10x8x33xf32> to vector<8x33xf32>
    %360 = vector.extract_strided_slice %359 {offsets = [0, 32], sizes = [8, 1], strides = [1, 1]} : vector<8x33xf32> to vector<8x1xf32>
    %361 = tpu.reciprocal %360 : vector<8x1xf32> -> vector<8x1xf32>
    %362 = vector.extract_strided_slice %359 {offsets = [0, 0], sizes = [8, 32], strides = [1, 1]} : vector<8x33xf32> to vector<8x32xf32>
    %363 = vector.broadcast %361 : vector<8x1xf32> to vector<8x32xf32>
    %364 = arith.mulf %362, %363 : vector<8x32xf32>
    %cst_122 = arith.constant dense<0.000000e+00> : vector<8x96xf32>
    %365 = tpu.matmul %364, %2, %cst_122 {dimension_numbers = #tpu.dot_dimension_numbers<[1], [0], [0], [1], [0, 0, 1, 1], [], []>} : vector<8x32xf32>, vector<32x96xf32>, vector<8x96xf32> -> vector<8x96xf32>
    %366 = arith.index_cast %c5_i32 : i32 to index
    %c0_123 = arith.constant 0 : index
    %c0_124 = arith.constant 0 : index
    %367 = vector.load %arg1[%366, %c0_123, %c0_124] : memref<6x8x96xf32, #tpu.memory_space<vmem>>, vector<1x8x96xf32>
    %368 = vector.shape_cast %367 : vector<1x8x96xf32> to vector<8x96xf32>
    %369 = arith.addf %365, %368 : vector<8x96xf32>
    %370 = vector.extract_strided_slice %369 {offsets = [0, 0], sizes = [8, 32], strides = [1, 1]} : vector<8x96xf32> to vector<8x32xf32>
    %371 = vector.extract_strided_slice %339 {offsets = [0, 0], sizes = [8, 32], strides = [1, 1]} : vector<8x96xf32> to vector<8x32xf32>
    %372 = arith.addf %370, %371 : vector<8x32xf32>
    %373 = arith.negf %372 : vector<8x32xf32>
    %374 = math.exp %373 : vector<8x32xf32>
    %cst_125 = arith.constant 1.000000e+00 : f32
    %375 = vector.broadcast %cst_125 : f32 to vector<8x32xf32>
    %376 = arith.addf %375, %374 : vector<8x32xf32>
    %377 = arith.divf %375, %376 : vector<8x32xf32>
    %378 = vector.extract_strided_slice %369 {offsets = [0, 32], sizes = [8, 32], strides = [1, 1]} : vector<8x96xf32> to vector<8x32xf32>
    %379 = vector.extract_strided_slice %339 {offsets = [0, 32], sizes = [8, 32], strides = [1, 1]} : vector<8x96xf32> to vector<8x32xf32>
    %380 = arith.addf %378, %379 : vector<8x32xf32>
    %381 = arith.negf %380 : vector<8x32xf32>
    %382 = math.exp %381 : vector<8x32xf32>
    %cst_126 = arith.constant 1.000000e+00 : f32
    %383 = vector.broadcast %cst_126 : f32 to vector<8x32xf32>
    %384 = arith.addf %383, %382 : vector<8x32xf32>
    %385 = arith.divf %383, %384 : vector<8x32xf32>
    %386 = vector.extract_strided_slice %369 {offsets = [0, 64], sizes = [8, 32], strides = [1, 1]} : vector<8x96xf32> to vector<8x32xf32>
    %387 = vector.extract_strided_slice %339 {offsets = [0, 64], sizes = [8, 32], strides = [1, 1]} : vector<8x96xf32> to vector<8x32xf32>
    %388 = arith.mulf %377, %387 : vector<8x32xf32>
    %389 = arith.addf %386, %388 : vector<8x32xf32>
    %390 = math.tanh %389 : vector<8x32xf32>
    %cst_127 = arith.constant 1.000000e+00 : f32
    %391 = vector.broadcast %cst_127 : f32 to vector<8x32xf32>
    %392 = arith.subf %391, %385 : vector<8x32xf32>
    %393 = arith.mulf %392, %390 : vector<8x32xf32>
    %394 = arith.mulf %385, %330 : vector<8x32xf32>
    %395 = arith.addf %393, %394 : vector<8x32xf32>
    %396 = arith.index_cast %c5_i32 : i32 to index
    %c0_128 = arith.constant 0 : index
    %c0_129 = arith.constant 0 : index
    %397 = vector.load %arg15[%396, %c0_128, %c0_129] : memref<6x8x32xf32, #tpu.memory_space<vmem>>, vector<1x8x32xf32>
    %398 = vector.shape_cast %397 : vector<1x8x32xf32> to vector<8x32xf32>
    %399 = vector.shape_cast %395 : vector<8x32xf32> to vector<1x8x32xf32>
    tpu.vector_store %arg15[%396, %c0_128, %c0_129], %399 {strides = array<i32>} : memref<6x8x32xf32, #tpu.memory_space<vmem>>, vector<1x8x32xf32>,
    %c6_i32 = arith.constant 6 : i32
    %c0_130 = arith.constant 0 : index
    %c0_131 = arith.constant 0 : index
    %400 = vector.load %arg14[%c0_130, %c0_131] : memref<8x32xf32, #tpu.memory_space<vmem>>, vector<8x32xf32>
    tpu.vector_store %arg14[%c0_130, %c0_131], %395 {strides = array<i32>} : memref<8x32xf32, #tpu.memory_space<vmem>>, vector<8x32xf32>,
    %c0_132 = arith.constant 0 : index
    %c0_133 = arith.constant 0 : index
    %c0_134 = arith.constant 0 : index
    %401 = vector.load %arg15[%c0_132, %c0_133, %c0_134] : memref<6x8x32xf32, #tpu.memory_space<vmem>>, vector<6x8x32xf32>
    %402 = vector.shape_cast %401 : vector<6x8x32xf32> to vector<48x32xf32>
    %c0_135 = arith.constant 0 : index
    %c0_136 = arith.constant 0 : index
    %403 = vector.load %arg10[%c0_135, %c0_136] : memref<32x128xf32, #tpu.memory_space<vmem>>, vector<32x128xf32>
    %cst_137 = arith.constant dense<0.000000e+00> : vector<48x128xf32>
    %404 = tpu.matmul %402, %403, %cst_137 {dimension_numbers = #tpu.dot_dimension_numbers<[1], [0], [0], [1], [0, 0, 1, 1], [], []>} : vector<48x32xf32>, vector<32x128xf32>, vector<48x128xf32> -> vector<48x128xf32>
    %c0_138 = arith.constant 0 : index
    %c0_139 = arith.constant 0 : index
    %405 = vector.load %arg11[%c0_138, %c0_139] : memref<1x128xf32, #tpu.memory_space<vmem>>, vector<1x128xf32>
    %406 = vector.broadcast %405 : vector<1x128xf32> to vector<48x128xf32>
    %407 = arith.addf %404, %406 : vector<48x128xf32>
    %408 = vector.shape_cast %407 : vector<48x128xf32> to vector<6x8x128xf32>
    %c0_140 = arith.constant 0 : index
    %c0_141 = arith.constant 0 : index
    %c0_142 = arith.constant 0 : index
    %409 = vector.load %arg12[%c0_140, %c0_141, %c0_142] : memref<6x8x128xf32, #tpu.memory_space<vmem>>, vector<6x8x128xf32>
    tpu.vector_store %arg12[%c0_140, %c0_141, %c0_142], %408 {strides = array<i32>} : memref<6x8x128xf32, #tpu.memory_space<vmem>>, vector<6x8x128xf32>,
    return
  }
  func.func @transform_0(%arg0: i32) -> (i32, i32, i32) {
    %c0_i32 = arith.constant 0 : i32
    %c0_i32_0 = arith.constant 0 : i32
    %c0_i32_1 = arith.constant 0 : i32
    %c0_i32_2 = arith.constant 0 : i32
    return %c0_i32, %c0_i32_0, %c0_i32_1 : i32, i32, i32
  }
  func.func @transform_1(%arg0: i32) -> (i32, i32, i32) {
    %c0_i32 = arith.constant 0 : i32
    %c0_i32_0 = arith.constant 0 : i32
    %c0_i32_1 = arith.constant 0 : i32
    %c0_i32_2 = arith.constant 0 : i32
    return %c0_i32, %c0_i32_0, %c0_i32_1 : i32, i32, i32
  }
  func.func @transform_2(%arg0: i32) -> (i32, i32, i32) {
    %c0_i32 = arith.constant 0 : i32
    %c0_i32_0 = arith.constant 0 : i32
    %c0_i32_1 = arith.constant 0 : i32
    %c0_i32_2 = arith.constant 0 : i32
    return %c0_i32, %c0_i32_0, %c0_i32_1 : i32, i32, i32
  }
  func.func @transform_3(%arg0: i32) -> (i32, i32) {
    %c0_i32 = arith.constant 0 : i32
    %c0_i32_0 = arith.constant 0 : i32
    %c0_i32_1 = arith.constant 0 : i32
    return %c0_i32, %c0_i32_0 : i32, i32
  }
  func.func @transform_4(%arg0: i32) -> (i32, i32) {
    %c0_i32 = arith.constant 0 : i32
    %c0_i32_0 = arith.constant 0 : i32
    %c0_i32_1 = arith.constant 0 : i32
    return %c0_i32, %c0_i32_0 : i32, i32
  }
  func.func @transform_5(%arg0: i32) -> (i32, i32) {
    %c0_i32 = arith.constant 0 : i32
    %c0_i32_0 = arith.constant 0 : i32
    %c0_i32_1 = arith.constant 0 : i32
    return %c0_i32, %c0_i32_0 : i32, i32
  }
  func.func @transform_6(%arg0: i32) -> (i32, i32) {
    %c0_i32 = arith.constant 0 : i32
    %c0_i32_0 = arith.constant 0 : i32
    %c0_i32_1 = arith.constant 0 : i32
    return %c0_i32, %c0_i32_0 : i32, i32
  }
  func.func @transform_7(%arg0: i32) -> (i32, i32) {
    %c0_i32 = arith.constant 0 : i32
    %c0_i32_0 = arith.constant 0 : i32
    %c0_i32_1 = arith.constant 0 : i32
    return %c0_i32, %c0_i32_0 : i32, i32
  }
  func.func @transform_8(%arg0: i32) -> (i32, i32) {
    %c0_i32 = arith.constant 0 : i32
    %c0_i32_0 = arith.constant 0 : i32
    %c0_i32_1 = arith.constant 0 : i32
    return %c0_i32, %c0_i32_0 : i32, i32
  }
  func.func @transform_9(%arg0: i32) -> (i32, i32) {
    %c0_i32 = arith.constant 0 : i32
    %c0_i32_0 = arith.constant 0 : i32
    %c0_i32_1 = arith.constant 0 : i32
    return %c0_i32, %c0_i32_0 : i32, i32
  }
  func.func @transform_10(%arg0: i32) -> (i32, i32) {
    %c0_i32 = arith.constant 0 : i32
    %c0_i32_0 = arith.constant 0 : i32
    %c0_i32_1 = arith.constant 0 : i32
    return %c0_i32, %c0_i32_0 : i32, i32
  }
  func.func @transform_11(%arg0: i32) -> (i32, i32, i32) {
    %c0_i32 = arith.constant 0 : i32
    %c0_i32_0 = arith.constant 0 : i32
    %c0_i32_1 = arith.constant 0 : i32
    %c0_i32_2 = arith.constant 0 : i32
    return %c0_i32, %c0_i32_0, %c0_i32_1 : i32, i32, i32
  }
  func.func @transform_12(%arg0: i32) -> (i32, i32, i32) {
    %c0_i32 = arith.constant 0 : i32
    %c0_i32_0 = arith.constant 0 : i32
    %c0_i32_1 = arith.constant 0 : i32
    %c0_i32_2 = arith.constant 0 : i32
    return %c0_i32, %c0_i32_0, %c0_i32_1 : i32, i32, i32
  }
  func.func @transform_13(%arg0: i32) -> (i32, i32) {
    %c0_i32 = arith.constant 0 : i32
    %c0_i32_0 = arith.constant 0 : i32
    %c0_i32_1 = arith.constant 0 : i32
    return %c0_i32, %c0_i32_0 : i32, i32
  }
}

</mosaic_0001>

<llo_original>
// kernel: tpu_custom_call.1
$region0: #{tpu_custom_call.1}
  #allocation0 [shape = 'u32[]', space=smem, size = 0x4, offset = 0x4, fixed_abs, tag = 'smem constant byte address 0x4 - core index']
  #allocation1 [shape = 'u32[144,128]{1,0:T(1,128)}', space=vmem, size = 0x12000, scoped, tag = 'internal scratch']
  #allocation2 [shape = 'f32[6,8,32]{2,1,0:T(8,128)}', space=vmem, size = 0x6000, scoped, tag = 'scratch operand']
  %s0 = inlined_call_operand.hbm [shape: f32[6,8,96], index: 0, kind: input, shape index: {}]
  %s1 = inlined_call_operand.hbm [shape: f32[10,8,32], index: 1, kind: input, shape index: {}]
  %s2 = inlined_call_operand.hbm [shape: f32[10,8,33], index: 2, kind: input, shape index: {}]
  %s3 = inlined_call_operand.vmem [shape: s32[1,8], index: 3, kind: input, shape index: {}]
  %s4 = inlined_call_operand.hbm [shape: f32[8,32], index: 4, kind: input, shape index: {}]
  %s5 = inlined_call_operand.hbm [shape: f32[32,128], index: 5, kind: input, shape index: {}]
  %s6 = inlined_call_operand.vmem [shape: f32[1,96], index: 6, kind: input, shape index: {}]
  %s7 = inlined_call_operand.hbm [shape: f32[1,32], index: 7, kind: input, shape index: {}]
  %s8 = inlined_call_operand.hbm [shape: f32[32,96], index: 8, kind: input, shape index: {}]
  %s9 = inlined_call_operand.vmem [shape: f32[32,128], index: 9, kind: input, shape index: {}]
  %s10 = inlined_call_operand.vmem [shape: f32[1,128], index: 10, kind: input, shape index: {}]
  %s11 = inlined_call_operand.hbm [shape: f32[6,8,128], index: 11, kind: output, shape index: {0}]
  %s12 = inlined_call_operand.vmem [shape: f32[6,10,8], index: 12, kind: output, shape index: {1}]
  %s13 = inlined_call_operand.hbm [shape: f32[8,32], index: 13, kind: output, shape index: {2}]
  %14 = xla_tuple %s11, %s12, %s13
  %s15 = sld [smem:[#allocation0]]
  $region98: #{tpu_custom_call.1} parent=0
    _
  %s17 = ssub.s32 1, %s15
  %s18 = scalar_select 0, %s17, %s15
  $region1: #{tpu_custom_call.1} parent=0
    #allocation3 [shape = 'u8[24576]{0}', space=vmem, size = 0x6000, scoped, tag = 'input window, operand 0, single buffered']
    #allocation4 [shape = 's32[1]{0}', space=sflag, size = 0x4, scoped, tag = 'scoped memory for tpu_custom_call.1']
    #allocation5 [shape = 's32[1]{0}', space=sflag, size = 0x4, scoped, tag = 'scoped memory for tpu_custom_call.1']
    #allocation6 [shape = 'u8[40960]{0}', space=vmem, size = 0xa000, scoped, tag = 'input window, operand 1, single buffered']
    #allocation7 [shape = 's32[1]{0}', space=sflag, size = 0x4, scoped, tag = 'scoped memory for tpu_custom_call.1']
    #allocation8 [shape = 'u8[40960]{0}', space=vmem, size = 0xa000, scoped, tag = 'input window, operand 2, single buffered']
    #allocation9 [shape = 'u8[4096]{0}', space=vmem, size = 0x1000, scoped, tag = 'input window, operand 4, single buffered']
    #allocation10 [shape = 's32[1]{0}', space=sflag, size = 0x4, scoped, tag = 'scoped memory for tpu_custom_call.1']
    #allocation11 [shape = 'u8[16384]{0}', space=vmem, size = 0x4000, scoped, tag = 'input window, operand 5, single buffered']
    #allocation12 [shape = 'u8[512]{0}', space=vmem, size = 0x400, scoped, tag = 'input window, operand 7, single buffered']
    #allocation13 [shape = 's32[1]{0}', space=sflag, size = 0x4, scoped, tag = 'scoped memory for tpu_custom_call.1']
    #allocation14 [shape = 'u8[16384]{0}', space=vmem, size = 0x4000, scoped, tag = 'input window, operand 8, single buffered']
    #allocation15 [shape = 'u8[24576]{0}', space=vmem, size = 0x6000, scoped, tag = 'output window, operand 0, single buffered']
    #allocation16 [shape = 'u8[4096]{0}', space=vmem, size = 0x1000, scoped, tag = 'output window, operand 2, single buffered']
    #allocation17 [shape = 's32[1]{0}', space=sflag, size = 0x4, scoped, tag = 'scoped memory for tpu_custom_call.1']
    %19 = vsyncpa [#allocation4], 0
    %20 = vsyncpa [#allocation7], 0
    %21 = vsyncpa [#allocation10], 0
    %22 = vsyncpa [#allocation13], 0
    %23 = vsyncpa [#allocation5], 0
    %24 = vsyncpa [#allocation17], 0
    // Predicated region
    $region2: #{tpu_custom_call.1} parent=1 // pred_check
      _
    $region3: #{tpu_custom_call.1} parent=1 // pred_check_branch
      %26 = sbr.rel (0) target = $region5
    $region4: #{tpu_custom_call.1} parent=1 // pred_region
      %s28 = ssub.s32 768, 768
      %29 = vsyncadd [#allocation4], %s28
      %s30 = sshll.u32 [#allocation3], 4
      %s31 = int_to_ptr.vmem [resolvable:$true] %s30
      %36 = dma.hbm_to_vmem [thread:$0]  %s0, 768, %s31, [#allocation4], 128, 128, 8
    $region5: #{tpu_custom_call.1} parent=1 // pred_fallthru
      _
    // Predicated region
    $region6: #{tpu_custom_call.1} parent=1 // pred_check
      _
    $region7: #{tpu_custom_call.1} parent=1 // pred_check_branch
      %38 = sbr.rel (0) target = $region9
    $region8: #{tpu_custom_call.1} parent=1 // pred_region
      %s40 = ssub.s32 1280, 1280
      %41 = vsyncadd [#allocation7], %s40
      %s42 = sshll.u32 [#allocation6], 4
      %s43 = int_to_ptr.vmem [resolvable:$true] %s42
      %48 = dma.hbm_to_vmem [thread:$0]  %s1, 1280, %s43, [#allocation7], 128, 128, 8
    $region9: #{tpu_custom_call.1} parent=1 // pred_fallthru
      _
    // Predicated region
    $region10: #{tpu_custom_call.1} parent=1 // pred_check
      _
    $region11: #{tpu_custom_call.1} parent=1 // pred_check_branch
      %50 = sbr.rel (0) target = $region13
    $region12: #{tpu_custom_call.1} parent=1 // pred_region
      %s52 = ssub.s32 1280, 1280
      %53 = vsyncadd [#allocation7], %s52
      %s54 = sshll.u32 [#allocation8], 4
      %s55 = int_to_ptr.vmem [resolvable:$true] %s54
      %60 = dma.hbm_to_vmem [thread:$0]  %s2, 1280, %s55, [#allocation7], 128, 128, 8
    $region13: #{tpu_custom_call.1} parent=1 // pred_fallthru
      _
    // Predicated region
    $region14: #{tpu_custom_call.1} parent=1 // pred_check
      _
    $region15: #{tpu_custom_call.1} parent=1 // pred_check_branch
      %62 = sbr.rel (0) target = $region17
    $region16: #{tpu_custom_call.1} parent=1 // pred_region
      _
    $region17: #{tpu_custom_call.1} parent=1 // pred_fallthru
      _
    // Predicated region
    $region18: #{tpu_custom_call.1} parent=1 // pred_check
      _
    $region19: #{tpu_custom_call.1} parent=1 // pred_check_branch
      %64 = sbr.rel (0) target = $region21
    $region20: #{tpu_custom_call.1} parent=1 // pred_region
      %s66 = ssub.s32 128, 128
      %67 = vsyncadd [#allocation10], %s66
      %s69 = sshll.u32 [#allocation9], 4
      %s70 = int_to_ptr.vmem [resolvable:$true] %s69
      %72 = dma.hbm_to_vmem [thread:$0]  %s4, 128, %s70, [#allocation10]
    $region21: #{tpu_custom_call.1} parent=1 // pred_fallthru
      _
    // Predicated region
    $region22: #{tpu_custom_call.1} parent=1 // pred_check
      _
    $region23: #{tpu_custom_call.1} parent=1 // pred_check_branch
      %74 = sbr.rel (0) target = $region25
    $region24: #{tpu_custom_call.1} parent=1 // pred_region
      %s76 = ssub.s32 512, 512
      %77 = vsyncadd [#allocation10], %s76
      %s78 = sshll.u32 [#allocation11], 4
      %s79 = int_to_ptr.vmem [resolvable:$true] %s78
      %84 = dma.hbm_to_vmem [thread:$0]  %s5, 512, %s79, [#allocation10], 128, 128, 8
    $region25: #{tpu_custom_call.1} parent=1 // pred_fallthru
      _
    // Predicated region
    $region26: #{tpu_custom_call.1} parent=1 // pred_check
      _
    $region27: #{tpu_custom_call.1} parent=1 // pred_check_branch
      %86 = sbr.rel (0) target = $region29
    $region28: #{tpu_custom_call.1} parent=1 // pred_region
      _
    $region29: #{tpu_custom_call.1} parent=1 // pred_fallthru
      _
    // Predicated region
    $region30: #{tpu_custom_call.1} parent=1 // pred_check
      _
    $region31: #{tpu_custom_call.1} parent=1 // pred_check_branch
      %88 = sbr.rel (0) target = $region33
    $region32: #{tpu_custom_call.1} parent=1 // pred_region
      %s90 = ssub.s32 16, 16
      %91 = vsyncadd [#allocation13], %s90
      %s93 = sshll.u32 [#allocation12], 4
      %s94 = int_to_ptr.vmem [resolvable:$true] %s93
      %96 = dma.hbm_to_vmem [thread:$0]  %s7, 16, %s94, [#allocation13]
    $region33: #{tpu_custom_call.1} parent=1 // pred_fallthru
      _
    // Predicated region
    $region34: #{tpu_custom_call.1} parent=1 // pred_check
      _
    $region35: #{tpu_custom_call.1} parent=1 // pred_check_branch
      %98 = sbr.rel (0) target = $region37
    $region36: #{tpu_custom_call.1} parent=1 // pred_region
      %s100 = ssub.s32 512, 512
      %101 = vsyncadd [#allocation13], %s100
      %s102 = sshll.u32 [#allocation14], 4
      %s103 = int_to_ptr.vmem [resolvable:$true] %s102
      %108 = dma.hbm_to_vmem [thread:$0]  %s8, 512, %s103, [#allocation13], 128, 128, 8
    $region37: #{tpu_custom_call.1} parent=1 // pred_fallthru
      _
    // Predicated region
    $region38: #{tpu_custom_call.1} parent=1 // pred_check
      _
    $region39: #{tpu_custom_call.1} parent=1 // pred_check_branch
      %110 = sbr.rel (0) target = $region41
    $region40: #{tpu_custom_call.1} parent=1 // pred_region
      _
    $region41: #{tpu_custom_call.1} parent=1 // pred_fallthru
      _
    // Predicated region
    $region42: #{tpu_custom_call.1} parent=1 // pred_check
      _
    $region43: #{tpu_custom_call.1} parent=1 // pred_check_branch
      %112 = sbr.rel (0) target = $region45
    $region44: #{tpu_custom_call.1} parent=1 // pred_region
      _
    $region45: #{tpu_custom_call.1} parent=1 // pred_fallthru
      _
    // Predicated region
    $region46: #{tpu_custom_call.1} parent=1 // pred_check
      _
    $region47: #{tpu_custom_call.1} parent=1 // pred_check_branch
      %114 = sbr.rel (0) target = $region49
    $region48: #{tpu_custom_call.1} parent=1 // pred_region
      %115 = dma.done [#allocation4], 768
    $region49: #{tpu_custom_call.1} parent=1 // pred_fallthru
      _
    // Predicated region
    $region50: #{tpu_custom_call.1} parent=1 // pred_check
      _
    $region51: #{tpu_custom_call.1} parent=1 // pred_check_branch
      %117 = sbr.rel (0) target = $region53
    $region52: #{tpu_custom_call.1} parent=1 // pred_region
      %118 = dma.done [#allocation7], 1280
    $region53: #{tpu_custom_call.1} parent=1 // pred_fallthru
      _
    // Predicated region
    $region54: #{tpu_custom_call.1} parent=1 // pred_check
      _
    $region55: #{tpu_custom_call.1} parent=1 // pred_check_branch
      %120 = sbr.rel (0) target = $region57
    $region56: #{tpu_custom_call.1} parent=1 // pred_region
      %121 = dma.done [#allocation7], 1280
    $region57: #{tpu_custom_call.1} parent=1 // pred_fallthru
      _
    // Predicated region
    $region58: #{tpu_custom_call.1} parent=1 // pred_check
      _
    $region59: #{tpu_custom_call.1} parent=1 // pred_check_branch
      %123 = sbr.rel (0) target = $region61
    $region60: #{tpu_custom_call.1} parent=1 // pred_region
      %124 = dma.done [#allocation10], 128
    $region61: #{tpu_custom_call.1} parent=1 // pred_fallthru
      _
    // Predicated region
    $region62: #{tpu_custom_call.1} parent=1 // pred_check
      _
    $region63: #{tpu_custom_call.1} parent=1 // pred_check_branch
      %126 = sbr.rel (0) target = $region65
    $region64: #{tpu_custom_call.1} parent=1 // pred_region
      %127 = dma.done [#allocation10], 512
    $region65: #{tpu_custom_call.1} parent=1 // pred_fallthru
      _
    // Predicated region
    $region66: #{tpu_custom_call.1} parent=1 // pred_check
      _
    $region67: #{tpu_custom_call.1} parent=1 // pred_check_branch
      %129 = sbr.rel (0) target = $region69
    $region68: #{tpu_custom_call.1} parent=1 // pred_region
      %130 = dma.done [#allocation13], 16
    $region69: #{tpu_custom_call.1} parent=1 // pred_fallthru
      _
    // Predicated region
    $region70: #{tpu_custom_call.1} parent=1 // pred_check
      _
    $region71: #{tpu_custom_call.1} parent=1 // pred_check_branch
      %132 = sbr.rel (0) target = $region73
    $region72: #{tpu_custom_call.1} parent=1 // pred_region
      %133 = dma.done [#allocation13], 512
    $region73: #{tpu_custom_call.1} parent=1 // pred_fallthru
      _
    %v134 = vld [vmem:[#allocation11] sm:$0xff]
    %v135 = vld [vmem:[#allocation11 + $0x8] sm:$0xff]
    %v136 = vld [vmem:[#allocation11 + $0x10] sm:$0xff]
    %v137 = vld [vmem:[#allocation11 + $0x18] sm:$0xff]
    %v138 = vld [vmem:[%s6] sm:$0x1]
    %v139 = vld [vmem:[#allocation14] sm:$0xff]
    %v140 = vld [vmem:[#allocation14 + $0x8] sm:$0xff]
    %v141 = vld [vmem:[#allocation14 + $0x10] sm:$0xff]
    %v142 = vld [vmem:[#allocation14 + $0x18] sm:$0xff]
    %v143 = vld [vmem:[#allocation12] sm:$0x1]
    %v144 = vlaneseq
    %v145 = vshrl.u32 %v144, 7
    %v146 = vadd.s32 %v145, 8
    %v147 = vld [vmem:[%s3] sm:$0x1]
    %v148 = vlaneseq
    %v149 = vshrl.u32 %v148, 7
    %v150 = vsub.s32 0, %v149
    %v151 = vrot.slane %v147, %v150
    %vm152 = vcmp.lt.s32.totalorder %v145, %v151
    %vm153 = vcmp.lt.s32.totalorder %v146, %v151
    %v154 = vld [vmem:[#allocation9] sm:$0xff]
    %vm155 = vcmask 261120
    %v157 = vsel %vm155, %v154, 0
    %159 = vmatprep.subr.mxu0 0.0
    %160 = vmatpush1.msra.mxu0 %v134
    %161 = vmatprep.subr.mxu0 0.0
    %162 = vmatpush1.msra.mxu0 %v135
    %163 = vmatprep.subr.mxu0 0.0
    %164 = vmatpush1.msra.mxu0 %v136
    %165 = vmatprep.subr.mxu0 0.0
    %166 = vmatpush1.msra.mxu0 %v137
    %167 = vmatprep.subr.mxu0 0.0
    %168 = vmatpush1.msra.mxu0 0.0
    %169 = vmatprep.subr.mxu0 0.0
    %170 = vmatpush1.msra.mxu0 0.0
    %171 = vmatprep.subr.mxu0 0.0
    %172 = vmatpush1.msra.mxu0 0.0
    %173 = vmatprep.subr.mxu0 0.0
    %174 = vmatpush1.msra.mxu0 0.0
    %175 = vmatprep.subr.mxu0 0.0
    %176 = vmatpush1.msra.mxu0 0.0
    %177 = vmatprep.subr.mxu0 0.0
    %178 = vmatpush1.msra.mxu0 0.0
    %179 = vmatprep.subr.mxu0 0.0
    %180 = vmatpush1.msra.mxu0 0.0
    %181 = vmatprep.subr.mxu0 0.0
    %182 = vmatpush1.msra.mxu0 0.0
    %183 = vmatprep.subr.mxu0 0.0
    %184 = vmatpush1.msra.mxu0 0.0
    %185 = vmatprep.subr.mxu0 0.0
    %186 = vmatpush1.msra.mxu0 0.0
    %187 = vmatprep.subr.mxu0 0.0
    %188 = vmatpush1.msra.mxu0 0.0
    %189 = vmatprep.subr.mxu0 0.0
    %190 = vmatpush1.msra.mxu0 0.0
    %191 = vmatprep.subr.mxu0 0.0
    %192 = vmatpush1.msra.mxu0 0.0
    %193 = vmatprep.subr.mxu0 0.0
    %194 = vmatpush1.msra.mxu0 0.0
    %195 = vmatprep.subr.mxu0 0.0
    %196 = vmatpush1.msra.mxu0 0.0
    %197 = vmatprep.subr.mxu0 0.0
    %198 = vmatpush1.msra.mxu0 0.0
    %199 = vmatprep.subr.mxu0 0.0
    %200 = vmatpush1.msra.mxu0 0.0
    %201 = vmatprep.subr.mxu0 0.0
    %202 = vmatpush1.msra.mxu0 0.0
    %203 = vmatprep.subr.mxu0 0.0
    %204 = vmatpush1.msra.mxu0 0.0
    %205 = vmatprep.subr.mxu0 0.0
    %206 = vmatpush1.msra.mxu0 0.0
    %207 = vmatprep.subr.mxu0 0.0
    %208 = vmatpush1.msra.mxu0 0.0
    %209 = vmatprep.subr.mxu0 0.0
    %210 = vmatpush1.msra.mxu0 0.0
    %211 = vmatprep.subr.mxu0 0.0
    %212 = vmatpush1.msra.mxu0 0.0
    %213 = vmatprep.subr.mxu0 0.0
    %214 = vmatpush1.msra.mxu0 0.0
    %215 = vmatprep.subr.mxu0 0.0
    %216 = vmatpush1.msra.mxu0 0.0
    %217 = vmatprep.subr.mxu0 0.0
    %218 = vmatpush1.msra.mxu0 0.0
    %219 = vmatprep.subr.mxu0 0.0
    %220 = vmatpush1.msra.mxu0 0.0
    %221 = vmatprep.subr.mxu0 0.0
    %222 = vmatpush1.msra.mxu0 0.0
    %223 = vmatprep.mubr.f32.mxu0 0.0
    %224 = vmatmul.mubr.f32.gmra.mrb[0].mxu0 %v157
    %v225 = vpop.f32.mrb[0].mxu0
    %v226 = vadd.f32 0.0, %v225
    %v227 = vpop.f32.mrb[0].mxu0
    %228 = vdwg.mxu0
    %v230 = vlaneseq
    %v231 = vshrl.u32 %v230, 7
    %v232 = vsub.s32 0, %v231
    %v233 = vrot.slane %v138, %v232
    %234 = vrot.lane.b32.xlu0 %v233, 32
    %v235 = vpop.permute.xlu0 %234
    %v237 = vadd.f32 %v226, %v235
    %v238 = vld [vmem:[#allocation6] sm:$0xff]
    %v239 = vld [vmem:[#allocation6 + $0x8] sm:$0xff]
    %v240 = vld [vmem:[#allocation6 + $0x10] sm:$0xff]
    %v241 = vld [vmem:[#allocation6 + $0x18] sm:$0xff]
    %v242 = vld [vmem:[#allocation6 + $0x20] sm:$0xff]
    %v243 = vld [vmem:[#allocation6 + $0x28] sm:$0xff]
    %v244 = vld [vmem:[#allocation6 + $0x30] sm:$0xff]
    %v245 = vld [vmem:[#allocation6 + $0x38] sm:$0xff]
    %v246 = vld [vmem:[#allocation6 + $0x40] sm:$0xff]
    %v247 = vld [vmem:[#allocation6 + $0x48] sm:$0xff]
    %v248 = vadd.f32 %v226, %v238
    %v249 = vadd.f32 %v226, %v239
    %v250 = vadd.f32 %v226, %v240
    %v251 = vadd.f32 %v226, %v241
    %v252 = vadd.f32 %v226, %v242
    %v253 = vadd.f32 %v226, %v243
    %v254 = vadd.f32 %v226, %v244
    %v255 = vadd.f32 %v226, %v245
    %v256 = vadd.f32 %v226, %v246
    %v257 = vadd.f32 %v226, %v247
    %v258 = vtanh.pop %v248
    %v259 = vtanh.pop %v249
    %v260 = vtanh.pop %v250
    %v261 = vtanh.pop %v251
    %v262 = vtanh.pop %v252
    %v263 = vtanh.pop %v253
    %v264 = vtanh.pop %v254
    %v265 = vtanh.pop %v255
    %v266 = vtanh.pop %v256
    %v267 = vtanh.pop %v257
    %v269 = vlaneseq
    %v270 = vshrl.u32 %v269, 7
    %v271 = vsub.s32 0, %v270
    %v272 = vrot.slane %v143, %v271
    %v274 = vmul.f32 %v258, %v272
    %v275 = vmul.f32 %v259, %v272
    %v276 = vmul.f32 %v260, %v272
    %v277 = vmul.f32 %v261, %v272
    %v278 = vmul.f32 %v262, %v272
    %v279 = vmul.f32 %v263, %v272
    %v280 = vmul.f32 %v264, %v272
    %v281 = vmul.f32 %v265, %v272
    %v282 = vmul.f32 %v266, %v272
    %v283 = vmul.f32 %v267, %v272
    %v284 = vsel %vm155, %v274, 0.0
    %285 = vadd.xlane.f32.xlu0 %v284
    %v286 = vpop.xlane.xlu0 %285
    %v287 = vsel %vm155, %v275, 0.0
    %288 = vadd.xlane.f32.xlu0 %v287
    %v289 = vpop.xlane.xlu0 %288
    %v290 = vsel %vm155, %v276, 0.0
    %291 = vadd.xlane.f32.xlu0 %v290
    %v292 = vpop.xlane.xlu0 %291
    %v293 = vsel %vm155, %v277, 0.0
    %294 = vadd.xlane.f32.xlu0 %v293
    %v295 = vpop.xlane.xlu0 %294
    %v296 = vsel %vm155, %v278, 0.0
    %297 = vadd.xlane.f32.xlu0 %v296
    %v298 = vpop.xlane.xlu0 %297
    %v299 = vsel %vm155, %v279, 0.0
    %300 = vadd.xlane.f32.xlu0 %v299
    %v301 = vpop.xlane.xlu0 %300
    %v302 = vsel %vm155, %v280, 0.0
    %303 = vadd.xlane.f32.xlu0 %v302
    %v304 = vpop.xlane.xlu0 %303
    %v305 = vsel %vm155, %v281, 0.0
    %306 = vadd.xlane.f32.xlu0 %v305
    %v307 = vpop.xlane.xlu0 %306
    %v308 = vsel %vm155, %v282, 0.0
    %309 = vadd.xlane.f32.xlu0 %v308
    %v310 = vpop.xlane.xlu0 %309
    %v311 = vsel %vm155, %v283, 0.0
    %312 = vadd.xlane.f32.xlu0 %v311
    %v313 = vpop.xlane.xlu0 %312
    %v324 = vlaneseq
    %v325 = vand.u32 %v324, 127
    %v326 = vlaneseq
    %v327 = vshrl.u32 %v326, 7
    %v328 = vsub.s32 %v325, %v327
    %v329 = vrot.slane %v286, %v328
    %v330 = vlaneseq
    %v331 = vshrl.u32 %v330, 7
    %v332 = vsub.s32 %v325, %v331
    %v333 = vrot.slane %v289, %v332
    %v334 = vlaneseq
    %v335 = vshrl.u32 %v334, 7
    %v336 = vsub.s32 %v325, %v335
    %v337 = vrot.slane %v292, %v336
    %v338 = vlaneseq
    %v339 = vshrl.u32 %v338, 7
    %v340 = vsub.s32 %v325, %v339
    %v341 = vrot.slane %v295, %v340
    %v342 = vlaneseq
    %v343 = vshrl.u32 %v342, 7
    %v344 = vsub.s32 %v325, %v343
    %v345 = vrot.slane %v298, %v344
    %v346 = vlaneseq
    %v347 = vshrl.u32 %v346, 7
    %v348 = vsub.s32 %v325, %v347
    %v349 = vrot.slane %v301, %v348
    %v350 = vlaneseq
    %v351 = vshrl.u32 %v350, 7
    %v352 = vsub.s32 %v325, %v351
    %v353 = vrot.slane %v304, %v352
    %v354 = vlaneseq
    %v355 = vshrl.u32 %v354, 7
    %v356 = vsub.s32 %v325, %v355
    %v357 = vrot.slane %v307, %v356
    %v358 = vlaneseq
    %v359 = vshrl.u32 %v358, 7
    %v360 = vsub.s32 %v325, %v359
    %v361 = vrot.slane %v310, %v360
    %v362 = vlaneseq
    %v363 = vshrl.u32 %v362, 7
    %v364 = vsub.s32 %v325, %v363
    %v365 = vrot.slane %v313, %v364
    %vm366 = vcmask 1041409
    %v367 = vsel %vm366, %v333, %v329
    %vm368 = vcmask 1042434
    %v369 = vsel %vm368, %v337, %v367
    %vm370 = vcmask 1043459
    %v371 = vsel %vm370, %v341, %v369
    %vm372 = vcmask 1044484
    %v373 = vsel %vm372, %v345, %v371
    %vm374 = vcmask 1045509
    %v375 = vsel %vm374, %v349, %v373
    %vm376 = vcmask 1046534
    %v377 = vsel %vm376, %v353, %v375
    %vm378 = vcmask 1047559
    %v379 = vsel %vm378, %v357, %v377
    %v380 = vsel %vm366, %v365, %v361
    %v383 = vsel %vm152, %v379, -1000000.0
    %v384 = vsel %vm153, %v380, -1000000.0
    %v385 = vmul.f32 %v383, 1.442695
    %v386 = vpow.pop %v385
    %v387 = vmul.f32 %v384, 1.442695
    %v388 = vpow.pop %v387
    %vm389 = vcmask 64512
    %390 = vst.msk [vmem:[%s12] sm:$0xff] %vm389, %v386
    %vm391 = vcmask 58368
    %392 = vst.msk [vmem:[%s12 + $0x8] sm:$0x3] %vm391, %v388
    %v393 = vlaneseq
    %v394 = vshrl.u32 %v393, 7
    %v395 = vsub.s32 0, %v394
    %v396 = vrot.slane %v386, %v395
    %398 = vbcast.lane.b32.xlu0 %v396, 256
    %v399 = vpop.permute.xlu0 %398
    %v400 = vlaneseq
    %v401 = vshrl.u32 %v400, 7
    %v402 = vsub.s32 1, %v401
    %v403 = vrot.slane %v386, %v402
    %405 = vbcast.lane.b32.xlu0 %v403, 256
    %v406 = vpop.permute.xlu0 %405
    %v407 = vlaneseq
    %v408 = vshrl.u32 %v407, 7
    %v409 = vsub.s32 2, %v408
    %v410 = vrot.slane %v386, %v409
    %412 = vbcast.lane.b32.xlu0 %v410, 256
    %v413 = vpop.permute.xlu0 %412
    %v414 = vlaneseq
    %v415 = vshrl.u32 %v414, 7
    %v416 = vsub.s32 3, %v415
    %v417 = vrot.slane %v386, %v416
    %419 = vbcast.lane.b32.xlu0 %v417, 256
    %v420 = vpop.permute.xlu0 %419
    %v421 = vlaneseq
    %v422 = vshrl.u32 %v421, 7
    %v423 = vsub.s32 4, %v422
    %v424 = vrot.slane %v386, %v423
    %426 = vbcast.lane.b32.xlu0 %v424, 256
    %v427 = vpop.permute.xlu0 %426
    %v428 = vlaneseq
    %v429 = vshrl.u32 %v428, 7
    %v430 = vsub.s32 5, %v429
    %v431 = vrot.slane %v386, %v430
    %433 = vbcast.lane.b32.xlu0 %v431, 256
    %v434 = vpop.permute.xlu0 %433
    %v435 = vlaneseq
    %v436 = vshrl.u32 %v435, 7
    %v437 = vsub.s32 6, %v436
    %v438 = vrot.slane %v386, %v437
    %440 = vbcast.lane.b32.xlu0 %v438, 256
    %v441 = vpop.permute.xlu0 %440
    %v442 = vlaneseq
    %v443 = vshrl.u32 %v442, 7
    %v444 = vsub.s32 7, %v443
    %v445 = vrot.slane %v386, %v444
    %447 = vbcast.lane.b32.xlu0 %v445, 256
    %v448 = vpop.permute.xlu0 %447
    %v449 = vlaneseq
    %v450 = vshrl.u32 %v449, 7
    %v451 = vsub.s32 0, %v450
    %v452 = vrot.slane %v388, %v451
    %454 = vbcast.lane.b32.xlu0 %v452, 256
    %v455 = vpop.permute.xlu0 %454
    %v456 = vlaneseq
    %v457 = vshrl.u32 %v456, 7
    %v458 = vsub.s32 1, %v457
    %v459 = vrot.slane %v388, %v458
    %461 = vbcast.lane.b32.xlu0 %v459, 256
    %v462 = vpop.permute.xlu0 %461
    %v463 = vld [vmem:[#allocation8] sm:$0xff]
    %v464 = vld [vmem:[#allocation8 + $0x8] sm:$0xff]
    %v465 = vld [vmem:[#allocation8 + $0x10] sm:$0xff]
    %v466 = vld [vmem:[#allocation8 + $0x18] sm:$0xff]
    %v467 = vld [vmem:[#allocation8 + $0x20] sm:$0xff]
    %v468 = vld [vmem:[#allocation8 + $0x28] sm:$0xff]
    %v469 = vld [vmem:[#allocation8 + $0x30] sm:$0xff]
    %v470 = vld [vmem:[#allocation8 + $0x38] sm:$0xff]
    %v471 = vld [vmem:[#allocation8 + $0x40] sm:$0xff]
    %v472 = vld [vmem:[#allocation8 + $0x48] sm:$0xff]
    %v473 = vmul.f32 %v399, %v463
    %v474 = vmul.f32 %v406, %v464
    %v475 = vmul.f32 %v413, %v465
    %v476 = vmul.f32 %v420, %v466
    %v477 = vmul.f32 %v427, %v467
    %v478 = vmul.f32 %v434, %v468
    %v479 = vmul.f32 %v441, %v469
    %v480 = vmul.f32 %v448, %v470
    %v481 = vmul.f32 %v455, %v471
    %v482 = vmul.f32 %v462, %v472
    %vm483 = vcmask 269312
    %v484 = vsel %vm483, %v473, 0.0
    %v485 = vsel %vm483, %v474, 0.0
    %v486 = vadd.f32 %v484, %v485
    %v487 = vsel %vm483, %v475, 0.0
    %v488 = vadd.f32 %v486, %v487
    %v489 = vsel %vm483, %v476, 0.0
    %v490 = vadd.f32 %v488, %v489
    %v491 = vsel %vm483, %v477, 0.0
    %v492 = vadd.f32 %v490, %v491
    %v493 = vsel %vm483, %v478, 0.0
    %v494 = vadd.f32 %v492, %v493
    %v495 = vsel %vm483, %v479, 0.0
    %v496 = vadd.f32 %v494, %v495
    %v497 = vsel %vm483, %v480, 0.0
    %v498 = vadd.f32 %v496, %v497
    %v499 = vsel %vm483, %v481, 0.0
    %v500 = vadd.f32 %v498, %v499
    %v501 = vsel %vm483, %v482, 0.0
    %v502 = vadd.f32 %v500, %v501
    %v503 = vrcp.pop %v502
    %505 = vset.pattern.permute.xlu0 32
    %506 = vperm.xlu0 %505, %v503
    %v507 = vpop.permute.xlu0 %506
    %v509 = vmul.f32 %v502, %v507
    %v510 = vld [vmem:[#allocation3] sm:$0xff]
    %v512 = vsel %vm155, %v509, 0
    %514 = vmatprep.subr.mxu0 0.0
    %515 = vmatpush1.msra.mxu0 %v139
    %516 = vmatprep.subr.mxu0 0.0
    %517 = vmatpush1.msra.mxu0 %v140
    %518 = vmatprep.subr.mxu0 0.0
    %519 = vmatpush1.msra.mxu0 %v141
    %520 = vmatprep.subr.mxu0 0.0
    %521 = vmatpush1.msra.mxu0 %v142
    %522 = vmatprep.subr.mxu0 0.0
    %523 = vmatpush1.msra.mxu0 0.0
    %524 = vmatprep.subr.mxu0 0.0
    %525 = vmatpush1.msra.mxu0 0.0
    %526 = vmatprep.subr.mxu0 0.0
    %527 = vmatpush1.msra.mxu0 0.0
    %528 = vmatprep.subr.mxu0 0.0
    %529 = vmatpush1.msra.mxu0 0.0
    %530 = vmatprep.subr.mxu0 0.0
    %531 = vmatpush1.msra.mxu0 0.0
    %532 = vmatprep.subr.mxu0 0.0
    %533 = vmatpush1.msra.mxu0 0.0
    %534 = vmatprep.subr.mxu0 0.0
    %535 = vmatpush1.msra.mxu0 0.0
    %536 = vmatprep.subr.mxu0 0.0
    %537 = vmatpush1.msra.mxu0 0.0
    %538 = vmatprep.subr.mxu0 0.0
    %539 = vmatpush1.msra.mxu0 0.0
    %540 = vmatprep.subr.mxu0 0.0
    %541 = vmatpush1.msra.mxu0 0.0
    %542 = vmatprep.subr.mxu0 0.0
    %543 = vmatpush1.msra.mxu0 0.0
    %544 = vmatprep.subr.mxu0 0.0
    %545 = vmatpush1.msra.mxu0 0.0
    %546 = vmatprep.subr.mxu0 0.0
    %547 = vmatpush1.msra.mxu0 0.0
    %548 = vmatprep.subr.mxu0 0.0
    %549 = vmatpush1.msra.mxu0 0.0
    %550 = vmatprep.subr.mxu0 0.0
    %551 = vmatpush1.msra.mxu0 0.0
    %552 = vmatprep.subr.mxu0 0.0
    %553 = vmatpush1.msra.mxu0 0.0
    %554 = vmatprep.subr.mxu0 0.0
    %555 = vmatpush1.msra.mxu0 0.0
    %556 = vmatprep.subr.mxu0 0.0
    %557 = vmatpush1.msra.mxu0 0.0
    %558 = vmatprep.subr.mxu0 0.0
    %559 = vmatpush1.msra.mxu0 0.0
    %560 = vmatprep.subr.mxu0 0.0
    %561 = vmatpush1.msra.mxu0 0.0
    %562 = vmatprep.subr.mxu0 0.0
    %563 = vmatpush1.msra.mxu0 0.0
    %564 = vmatprep.subr.mxu0 0.0
    %565 = vmatpush1.msra.mxu0 0.0
    %566 = vmatprep.subr.mxu0 0.0
    %567 = vmatpush1.msra.mxu0 0.0
    %568 = vmatprep.subr.mxu0 0.0
    %569 = vmatpush1.msra.mxu0 0.0
    %570 = vmatprep.subr.mxu0 0.0
    %571 = vmatpush1.msra.mxu0 0.0
    %572 = vmatprep.subr.mxu0 0.0
    %573 = vmatpush1.msra.mxu0 0.0
    %574 = vmatprep.subr.mxu0 0.0
    %575 = vmatpush1.msra.mxu0 0.0
    %576 = vmatprep.subr.mxu0 0.0
    %577 = vmatpush1.msra.mxu0 0.0
    %578 = vmatprep.mubr.f32.mxu0 0.0
    %579 = vmatmul.mubr.f32.gmra.mrb[0].mxu0 %v512
    %v580 = vpop.f32.mrb[0].mxu0
    %v581 = vadd.f32 %v510, %v580
    %v582 = vpop.f32.mrb[0].mxu0
    %583 = vdwg.mxu0
    %585 = vrot.lane.b32.xlu0 %v237, 96
    %v586 = vpop.permute.xlu0 %585
    %v588 = vadd.f32 %v581, %v586
    %v589 = vxor.u32 %v588, 2147483648
    %v590 = vmul.f32 %v589, 1.442695
    %v591 = vpow.pop %v590
    %v592 = vadd.f32 %v591, 1.0
    %v593 = vrcp.pop %v592
    %v594 = vmul.f32 1.0, %v593
    %595 = vrot.lane.b32.xlu0 %v237, 32
    %v596 = vpop.permute.xlu0 %595
    %v598 = vmul.f32 %v594, %v596
    %600 = vrot.lane.b32.xlu0 %v598, 64
    %v601 = vpop.permute.xlu0 %600
    %v603 = vadd.f32 %v581, %v601
    %v604 = vtanh.pop %v603
    %v605 = vsub.f32 1.0, %v594
    %607 = vrot.lane.b32.xlu0 %v604, 96
    %v608 = vpop.permute.xlu0 %607
    %v610 = vmul.f32 %v605, %v608
    %611 = vrot.lane.b32.xlu0 %v154, 32
    %v612 = vpop.permute.xlu0 %611
    %v614 = vmul.f32 %v594, %v612
    %v615 = vadd.f32 %v610, %v614
    %617 = vrot.lane.b32.xlu0 %v615, 96
    %v618 = vpop.permute.xlu0 %617
    %620 = vst.msk [vmem:[#allocation2] sm:$0xff] %vm155, %v618
    %v621 = vsel %vm155, %v618, 0
    %623 = vmatprep.subr.mxu0 0.0
    %624 = vmatpush1.msra.mxu0 %v134
    %625 = vmatprep.subr.mxu0 0.0
    %626 = vmatpush1.msra.mxu0 %v135
    %627 = vmatprep.subr.mxu0 0.0
    %628 = vmatpush1.msra.mxu0 %v136
    %629 = vmatprep.subr.mxu0 0.0
    %630 = vmatpush1.msra.mxu0 %v137
    %631 = vmatprep.subr.mxu0 0.0
    %632 = vmatpush1.msra.mxu0 0.0
    %633 = vmatprep.subr.mxu0 0.0
    %634 = vmatpush1.msra.mxu0 0.0
    %635 = vmatprep.subr.mxu0 0.0
    %636 = vmatpush1.msra.mxu0 0.0
    %637 = vmatprep.subr.mxu0 0.0
    %638 = vmatpush1.msra.mxu0 0.0
    %639 = vmatprep.subr.mxu0 0.0
    %640 = vmatpush1.msra.mxu0 0.0
    %641 = vmatprep.subr.mxu0 0.0
    %642 = vmatpush1.msra.mxu0 0.0
    %643 = vmatprep.subr.mxu0 0.0
    %644 = vmatpush1.msra.mxu0 0.0
    %645 = vmatprep.subr.mxu0 0.0
    %646 = vmatpush1.msra.mxu0 0.0
    %647 = vmatprep.subr.mxu0 0.0
    %648 = vmatpush1.msra.mxu0 0.0
    %649 = vmatprep.subr.mxu0 0.0
    %650 = vmatpush1.msra.mxu0 0.0
    %651 = vmatprep.subr.mxu0 0.0
    %652 = vmatpush1.msra.mxu0 0.0
    %653 = vmatprep.subr.mxu0 0.0
    %654 = vmatpush1.msra.mxu0 0.0
    %655 = vmatprep.subr.mxu0 0.0
    %656 = vmatpush1.msra.mxu0 0.0
    %657 = vmatprep.subr.mxu0 0.0
    %658 = vmatpush1.msra.mxu0 0.0
    %659 = vmatprep.subr.mxu0 0.0
    %660 = vmatpush1.msra.mxu0 0.0
    %661 = vmatprep.subr.mxu0 0.0
    %662 = vmatpush1.msra.mxu0 0.0
    %663 = vmatprep.subr.mxu0 0.0
    %664 = vmatpush1.msra.mxu0 0.0
    %665 = vmatprep.subr.mxu0 0.0
    %666 = vmatpush1.msra.mxu0 0.0
    %667 = vmatprep.subr.mxu0 0.0
    %668 = vmatpush1.msra.mxu0 0.0
    %669 = vmatprep.subr.mxu0 0.0
    %670 = vmatpush1.msra.mxu0 0.0
    %671 = vmatprep.subr.mxu0 0.0
    %672 = vmatpush1.msra.mxu0 0.0
    %673 = vmatprep.subr.mxu0 0.0
    %674 = vmatpush1.msra.mxu0 0.0
    %675 = vmatprep.subr.mxu0 0.0
    %676 = vmatpush1.msra.mxu0 0.0
    %677 = vmatprep.subr.mxu0 0.0
    %678 = vmatpush1.msra.mxu0 0.0
    %679 = vmatprep.subr.mxu0 0.0
    %680 = vmatpush1.msra.mxu0 0.0
    %681 = vmatprep.subr.mxu0 0.0
    %682 = vmatpush1.msra.mxu0 0.0
    %683 = vmatprep.subr.mxu0 0.0
    %684 = vmatpush1.msra.mxu0 0.0
    %685 = vmatprep.subr.mxu0 0.0
    %686 = vmatpush1.msra.mxu0 0.0
    %687 = vmatprep.mubr.f32.mxu0 0.0
    %688 = vmatmul.mubr.f32.gmra.mrb[0].mxu0 %v621
    %v689 = vpop.f32.mrb[0].mxu0
    %v690 = vadd.f32 0.0, %v689
    %v691 = vpop.f32.mrb[0].mxu0
    %692 = vdwg.mxu0
    %v693 = vadd.f32 %v690, %v235
    %v694 = vld [vmem:[#allocation6] sm:$0xff]
    %v695 = vld [vmem:[#allocation6 + $0x8] sm:$0xff]
    %v696 = vld [vmem:[#allocation6 + $0x10] sm:$0xff]
    %v697 = vld [vmem:[#allocation6 + $0x18] sm:$0xff]
    %v698 = vld [vmem:[#allocation6 + $0x20] sm:$0xff]
    %v699 = vld [vmem:[#allocation6 + $0x28] sm:$0xff]
    %v700 = vld [vmem:[#allocation6 + $0x30] sm:$0xff]
    %v701 = vld [vmem:[#allocation6 + $0x38] sm:$0xff]
    %v702 = vld [vmem:[#allocation6 + $0x40] sm:$0xff]
    %v703 = vld [vmem:[#allocation6 + $0x48] sm:$0xff]
    %v704 = vadd.f32 %v690, %v694
    %v705 = vadd.f32 %v690, %v695
    %v706 = vadd.f32 %v690, %v696
    %v707 = vadd.f32 %v690, %v697
    %v708 = vadd.f32 %v690, %v698
    %v709 = vadd.f32 %v690, %v699
    %v710 = vadd.f32 %v690, %v700
    %v711 = vadd.f32 %v690, %v701
    %v712 = vadd.f32 %v690, %v702
    %v713 = vadd.f32 %v690, %v703
    %v714 = vtanh.pop %v704
    %v715 = vtanh.pop %v705
    %v716 = vtanh.pop %v706
    %v717 = vtanh.pop %v707
    %v718 = vtanh.pop %v708
    %v719 = vtanh.pop %v709
    %v720 = vtanh.pop %v710
    %v721 = vtanh.pop %v711
    %v722 = vtanh.pop %v712
    %v723 = vtanh.pop %v713
    %v724 = vmul.f32 %v714, %v272
    %v725 = vmul.f32 %v715, %v272
    %v726 = vmul.f32 %v716, %v272
    %v727 = vmul.f32 %v717, %v272
    %v728 = vmul.f32 %v718, %v272
    %v729 = vmul.f32 %v719, %v272
    %v730 = vmul.f32 %v720, %v272
    %v731 = vmul.f32 %v721, %v272
    %v732 = vmul.f32 %v722, %v272
    %v733 = vmul.f32 %v723, %v272
    %v734 = vsel %vm155, %v724, 0.0
    %735 = vadd.xlane.f32.xlu0 %v734
    %v736 = vpop.xlane.xlu0 %735
    %v737 = vsel %vm155, %v725, 0.0
    %738 = vadd.xlane.f32.xlu0 %v737
    %v739 = vpop.xlane.xlu0 %738
    %v740 = vsel %vm155, %v726, 0.0
    %741 = vadd.xlane.f32.xlu0 %v740
    %v742 = vpop.xlane.xlu0 %741
    %v743 = vsel %vm155, %v727, 0.0
    %744 = vadd.xlane.f32.xlu0 %v743
    %v745 = vpop.xlane.xlu0 %744
    %v746 = vsel %vm155, %v728, 0.0
    %747 = vadd.xlane.f32.xlu0 %v746
    %v748 = vpop.xlane.xlu0 %747
    %v749 = vsel %vm155, %v729, 0.0
    %750 = vadd.xlane.f32.xlu0 %v749
    %v751 = vpop.xlane.xlu0 %750
    %v752 = vsel %vm155, %v730, 0.0
    %753 = vadd.xlane.f32.xlu0 %v752
    %v754 = vpop.xlane.xlu0 %753
    %v755 = vsel %vm155, %v731, 0.0
    %756 = vadd.xlane.f32.xlu0 %v755
    %v757 = vpop.xlane.xlu0 %756
    %v758 = vsel %vm155, %v732, 0.0
    %759 = vadd.xlane.f32.xlu0 %v758
    %v760 = vpop.xlane.xlu0 %759
    %v761 = vsel %vm155, %v733, 0.0
    %762 = vadd.xlane.f32.xlu0 %v761
    %v763 = vpop.xlane.xlu0 %762
    %v774 = vlaneseq
    %v775 = vshrl.u32 %v774, 7
    %v776 = vsub.s32 %v325, %v775
    %v777 = vrot.slane %v736, %v776
    %v778 = vlaneseq
    %v779 = vshrl.u32 %v778, 7
    %v780 = vsub.s32 %v325, %v779
    %v781 = vrot.slane %v739, %v780
    %v782 = vlaneseq
    %v783 = vshrl.u32 %v782, 7
    %v784 = vsub.s32 %v325, %v783
    %v785 = vrot.slane %v742, %v784
    %v786 = vlaneseq
    %v787 = vshrl.u32 %v786, 7
    %v788 = vsub.s32 %v325, %v787
    %v789 = vrot.slane %v745, %v788
    %v790 = vlaneseq
    %v791 = vshrl.u32 %v790, 7
    %v792 = vsub.s32 %v325, %v791
    %v793 = vrot.slane %v748, %v792
    %v794 = vlaneseq
    %v795 = vshrl.u32 %v794, 7
    %v796 = vsub.s32 %v325, %v795
    %v797 = vrot.slane %v751, %v796
    %v798 = vlaneseq
    %v799 = vshrl.u32 %v798, 7
    %v800 = vsub.s32 %v325, %v799
    %v801 = vrot.slane %v754, %v800
    %v802 = vlaneseq
    %v803 = vshrl.u32 %v802, 7
    %v804 = vsub.s32 %v325, %v803
    %v805 = vrot.slane %v757, %v804
    %v806 = vlaneseq
    %v807 = vshrl.u32 %v806, 7
    %v808 = vsub.s32 %v325, %v807
    %v809 = vrot.slane %v760, %v808
    %v810 = vlaneseq
    %v811 = vshrl.u32 %v810, 7
    %v812 = vsub.s32 %v325, %v811
    %v813 = vrot.slane %v763, %v812
    %v814 = vsel %vm366, %v781, %v777
    %v815 = vsel %vm368, %v785, %v814
    %v816 = vsel %vm370, %v789, %v815
    %v817 = vsel %vm372, %v793, %v816
    %v818 = vsel %vm374, %v797, %v817
    %v819 = vsel %vm376, %v801, %v818
    %v820 = vsel %vm378, %v805, %v819
    %v821 = vsel %vm366, %v813, %v809
    %v824 = vsel %vm152, %v820, -1000000.0
    %v825 = vsel %vm153, %v821, -1000000.0
    %v826 = vmul.f32 %v824, 1.442695
    %v827 = vpow.pop %v826
    %v828 = vmul.f32 %v825, 1.442695
    %v829 = vpow.pop %v828
    %s830 = scalar_lea.vmem %s12, 16
    %831 = vst.msk [vmem:[%s830] sm:$0xff] %vm389, %v827
    %832 = vst.msk [vmem:[%s830 + $0x8] sm:$0x3] %vm391, %v829
    %v833 = vlaneseq
    %v834 = vshrl.u32 %v833, 7
    %v835 = vsub.s32 0, %v834
    %v836 = vrot.slane %v827, %v835
    %838 = vbcast.lane.b32.xlu0 %v836, 256
    %v839 = vpop.permute.xlu0 %838
    %v840 = vlaneseq
    %v841 = vshrl.u32 %v840, 7
    %v842 = vsub.s32 1, %v841
    %v843 = vrot.slane %v827, %v842
    %845 = vbcast.lane.b32.xlu0 %v843, 256
    %v846 = vpop.permute.xlu0 %845
    %v847 = vlaneseq
    %v848 = vshrl.u32 %v847, 7
    %v849 = vsub.s32 2, %v848
    %v850 = vrot.slane %v827, %v849
    %852 = vbcast.lane.b32.xlu0 %v850, 256
    %v853 = vpop.permute.xlu0 %852
    %v854 = vlaneseq
    %v855 = vshrl.u32 %v854, 7
    %v856 = vsub.s32 3, %v855
    %v857 = vrot.slane %v827, %v856
    %859 = vbcast.lane.b32.xlu0 %v857, 256
    %v860 = vpop.permute.xlu0 %859
    %v861 = vlaneseq
    %v862 = vshrl.u32 %v861, 7
    %v863 = vsub.s32 4, %v862
    %v864 = vrot.slane %v827, %v863
    %866 = vbcast.lane.b32.xlu0 %v864, 256
    %v867 = vpop.permute.xlu0 %866
    %v868 = vlaneseq
    %v869 = vshrl.u32 %v868, 7
    %v870 = vsub.s32 5, %v869
    %v871 = vrot.slane %v827, %v870
    %873 = vbcast.lane.b32.xlu0 %v871, 256
    %v874 = vpop.permute.xlu0 %873
    %v875 = vlaneseq
    %v876 = vshrl.u32 %v875, 7
    %v877 = vsub.s32 6, %v876
    %v878 = vrot.slane %v827, %v877
    %880 = vbcast.lane.b32.xlu0 %v878, 256
    %v881 = vpop.permute.xlu0 %880
    %v882 = vlaneseq
    %v883 = vshrl.u32 %v882, 7
    %v884 = vsub.s32 7, %v883
    %v885 = vrot.slane %v827, %v884
    %887 = vbcast.lane.b32.xlu0 %v885, 256
    %v888 = vpop.permute.xlu0 %887
    %v889 = vlaneseq
    %v890 = vshrl.u32 %v889, 7
    %v891 = vsub.s32 0, %v890
    %v892 = vrot.slane %v829, %v891
    %894 = vbcast.lane.b32.xlu0 %v892, 256
    %v895 = vpop.permute.xlu0 %894
    %v896 = vlaneseq
    %v897 = vshrl.u32 %v896, 7
    %v898 = vsub.s32 1, %v897
    %v899 = vrot.slane %v829, %v898
    %901 = vbcast.lane.b32.xlu0 %v899, 256
    %v902 = vpop.permute.xlu0 %901
    %v903 = vld [vmem:[#allocation8] sm:$0xff]
    %v904 = vld [vmem:[#allocation8 + $0x8] sm:$0xff]
    %v905 = vld [vmem:[#allocation8 + $0x10] sm:$0xff]
    %v906 = vld [vmem:[#allocation8 + $0x18] sm:$0xff]
    %v907 = vld [vmem:[#allocation8 + $0x20] sm:$0xff]
    %v908 = vld [vmem:[#allocation8 + $0x28] sm:$0xff]
    %v909 = vld [vmem:[#allocation8 + $0x30] sm:$0xff]
    %v910 = vld [vmem:[#allocation8 + $0x38] sm:$0xff]
    %v911 = vld [vmem:[#allocation8 + $0x40] sm:$0xff]
    %v912 = vld [vmem:[#allocation8 + $0x48] sm:$0xff]
    %v913 = vmul.f32 %v839, %v903
    %v914 = vmul.f32 %v846, %v904
    %v915 = vmul.f32 %v853, %v905
    %v916 = vmul.f32 %v860, %v906
    %v917 = vmul.f32 %v867, %v907
    %v918 = vmul.f32 %v874, %v908
    %v919 = vmul.f32 %v881, %v909
    %v920 = vmul.f32 %v888, %v910
    %v921 = vmul.f32 %v895, %v911
    %v922 = vmul.f32 %v902, %v912
    %v923 = vsel %vm483, %v913, 0.0
    %v924 = vsel %vm483, %v914, 0.0
    %v925 = vadd.f32 %v923, %v924
    %v926 = vsel %vm483, %v915, 0.0
    %v927 = vadd.f32 %v925, %v926
    %v928 = vsel %vm483, %v916, 0.0
    %v929 = vadd.f32 %v927, %v928
    %v930 = vsel %vm483, %v917, 0.0
    %v931 = vadd.f32 %v929, %v930
    %v932 = vsel %vm483, %v918, 0.0
    %v933 = vadd.f32 %v931, %v932
    %v934 = vsel %vm483, %v919, 0.0
    %v935 = vadd.f32 %v933, %v934
    %v936 = vsel %vm483, %v920, 0.0
    %v937 = vadd.f32 %v935, %v936
    %v938 = vsel %vm483, %v921, 0.0
    %v939 = vadd.f32 %v937, %v938
    %v940 = vsel %vm483, %v922, 0.0
    %v941 = vadd.f32 %v939, %v940
    %v942 = vrcp.pop %v941
    %944 = vset.pattern.permute.xlu0 32
    %945 = vperm.xlu0 %944, %v942
    %v946 = vpop.permute.xlu0 %945
    %v948 = vmul.f32 %v941, %v946
    %s949 = scalar_lea.vmem [#allocation3], 8
    %v950 = vld [vmem:[%s949] sm:$0xff]
    %v952 = vsel %vm155, %v948, 0
    %954 = vmatprep.subr.mxu0 0.0
    %955 = vmatpush1.msra.mxu0 %v139
    %956 = vmatprep.subr.mxu0 0.0
    %957 = vmatpush1.msra.mxu0 %v140
    %958 = vmatprep.subr.mxu0 0.0
    %959 = vmatpush1.msra.mxu0 %v141
    %960 = vmatprep.subr.mxu0 0.0
    %961 = vmatpush1.msra.mxu0 %v142
    %962 = vmatprep.subr.mxu0 0.0
    %963 = vmatpush1.msra.mxu0 0.0
    %964 = vmatprep.subr.mxu0 0.0
    %965 = vmatpush1.msra.mxu0 0.0
    %966 = vmatprep.subr.mxu0 0.0
    %967 = vmatpush1.msra.mxu0 0.0
    %968 = vmatprep.subr.mxu0 0.0
    %969 = vmatpush1.msra.mxu0 0.0
    %970 = vmatprep.subr.mxu0 0.0
    %971 = vmatpush1.msra.mxu0 0.0
    %972 = vmatprep.subr.mxu0 0.0
    %973 = vmatpush1.msra.mxu0 0.0
    %974 = vmatprep.subr.mxu0 0.0
    %975 = vmatpush1.msra.mxu0 0.0
    %976 = vmatprep.subr.mxu0 0.0
    %977 = vmatpush1.msra.mxu0 0.0
    %978 = vmatprep.subr.mxu0 0.0
    %979 = vmatpush1.msra.mxu0 0.0
    %980 = vmatprep.subr.mxu0 0.0
    %981 = vmatpush1.msra.mxu0 0.0
    %982 = vmatprep.subr.mxu0 0.0
    %983 = vmatpush1.msra.mxu0 0.0
    %984 = vmatprep.subr.mxu0 0.0
    %985 = vmatpush1.msra.mxu0 0.0
    %986 = vmatprep.subr.mxu0 0.0
    %987 = vmatpush1.msra.mxu0 0.0
    %988 = vmatprep.subr.mxu0 0.0
    %989 = vmatpush1.msra.mxu0 0.0
    %990 = vmatprep.subr.mxu0 0.0
    %991 = vmatpush1.msra.mxu0 0.0
    %992 = vmatprep.subr.mxu0 0.0
    %993 = vmatpush1.msra.mxu0 0.0
    %994 = vmatprep.subr.mxu0 0.0
    %995 = vmatpush1.msra.mxu0 0.0
    %996 = vmatprep.subr.mxu0 0.0
    %997 = vmatpush1.msra.mxu0 0.0
    %998 = vmatprep.subr.mxu0 0.0
    %999 = vmatpush1.msra.mxu0 0.0
    %1000 = vmatprep.subr.mxu0 0.0
    %1001 = vmatpush1.msra.mxu0 0.0
    %1002 = vmatprep.subr.mxu0 0.0
    %1003 = vmatpush1.msra.mxu0 0.0
    %1004 = vmatprep.subr.mxu0 0.0
    %1005 = vmatpush1.msra.mxu0 0.0
    %1006 = vmatprep.subr.mxu0 0.0
    %1007 = vmatpush1.msra.mxu0 0.0
    %1008 = vmatprep.subr.mxu0 0.0
    %1009 = vmatpush1.msra.mxu0 0.0
    %1010 = vmatprep.subr.mxu0 0.0
    %1011 = vmatpush1.msra.mxu0 0.0
    %1012 = vmatprep.subr.mxu0 0.0
    %1013 = vmatpush1.msra.mxu0 0.0
    %1014 = vmatprep.subr.mxu0 0.0
    %1015 = vmatpush1.msra.mxu0 0.0
    %1016 = vmatprep.subr.mxu0 0.0
    %1017 = vmatpush1.msra.mxu0 0.0
    %1018 = vmatprep.mubr.f32.mxu0 0.0
    %1019 = vmatmul.mubr.f32.gmra.mrb[0].mxu0 %v952
    %v1020 = vpop.f32.mrb[0].mxu0
    %v1021 = vadd.f32 %v950, %v1020
    %v1022 = vpop.f32.mrb[0].mxu0
    %1023 = vdwg.mxu0
    %1025 = vrot.lane.b32.xlu0 %v693, 96
    %v1026 = vpop.permute.xlu0 %1025
    %v1028 = vadd.f32 %v1021, %v1026
    %v1029 = vxor.u32 %v1028, 2147483648
    %v1030 = vmul.f32 %v1029, 1.442695
    %v1031 = vpow.pop %v1030
    %v1032 = vadd.f32 %v1031, 1.0
    %v1033 = vrcp.pop %v1032
    %v1034 = vmul.f32 1.0, %v1033
    %1035 = vrot.lane.b32.xlu0 %v693, 32
    %v1036 = vpop.permute.xlu0 %1035
    %v1038 = vmul.f32 %v1034, %v1036
    %1040 = vrot.lane.b32.xlu0 %v1038, 64
    %v1041 = vpop.permute.xlu0 %1040
    %v1043 = vadd.f32 %v1021, %v1041
    %v1044 = vtanh.pop %v1043
    %v1045 = vsub.f32 1.0, %v1034
    %1047 = vrot.lane.b32.xlu0 %v1044, 96
    %v1048 = vpop.permute.xlu0 %1047
    %v1050 = vmul.f32 %v1045, %v1048
    %v1051 = vmul.f32 %v1034, %v615
    %v1052 = vadd.f32 %v1050, %v1051
    %1054 = vrot.lane.b32.xlu0 %v1052, 96
    %v1055 = vpop.permute.xlu0 %1054
    %s1057 = scalar_lea.vmem [#allocation2], 8
    %1058 = vst.msk [vmem:[%s1057] sm:$0xff] %vm155, %v1055
    %v1059 = vsel %vm155, %v1055, 0
    %1061 = vmatprep.subr.mxu0 0.0
    %1062 = vmatpush1.msra.mxu0 %v134
    %1063 = vmatprep.subr.mxu0 0.0
    %1064 = vmatpush1.msra.mxu0 %v135
    %1065 = vmatprep.subr.mxu0 0.0
    %1066 = vmatpush1.msra.mxu0 %v136
    %1067 = vmatprep.subr.mxu0 0.0
    %1068 = vmatpush1.msra.mxu0 %v137
    %1069 = vmatprep.subr.mxu0 0.0
    %1070 = vmatpush1.msra.mxu0 0.0
    %1071 = vmatprep.subr.mxu0 0.0
    %1072 = vmatpush1.msra.mxu0 0.0
    %1073 = vmatprep.subr.mxu0 0.0
    %1074 = vmatpush1.msra.mxu0 0.0
    %1075 = vmatprep.subr.mxu0 0.0
    %1076 = vmatpush1.msra.mxu0 0.0
    %1077 = vmatprep.subr.mxu0 0.0
    %1078 = vmatpush1.msra.mxu0 0.0
    %1079 = vmatprep.subr.mxu0 0.0
    %1080 = vmatpush1.msra.mxu0 0.0
    %1081 = vmatprep.subr.mxu0 0.0
    %1082 = vmatpush1.msra.mxu0 0.0
    %1083 = vmatprep.subr.mxu0 0.0
    %1084 = vmatpush1.msra.mxu0 0.0
    %1085 = vmatprep.subr.mxu0 0.0
    %1086 = vmatpush1.msra.mxu0 0.0
    %1087 = vmatprep.subr.mxu0 0.0
    %1088 = vmatpush1.msra.mxu0 0.0
    %1089 = vmatprep.subr.mxu0 0.0
    %1090 = vmatpush1.msra.mxu0 0.0
    %1091 = vmatprep.subr.mxu0 0.0
    %1092 = vmatpush1.msra.mxu0 0.0
    %1093 = vmatprep.subr.mxu0 0.0
    %1094 = vmatpush1.msra.mxu0 0.0
    %1095 = vmatprep.subr.mxu0 0.0
    %1096 = vmatpush1.msra.mxu0 0.0
    %1097 = vmatprep.subr.mxu0 0.0
    %1098 = vmatpush1.msra.mxu0 0.0
    %1099 = vmatprep.subr.mxu0 0.0
    %1100 = vmatpush1.msra.mxu0 0.0
    %1101 = vmatprep.subr.mxu0 0.0
    %1102 = vmatpush1.msra.mxu0 0.0
    %1103 = vmatprep.subr.mxu0 0.0
    %1104 = vmatpush1.msra.mxu0 0.0
    %1105 = vmatprep.subr.mxu0 0.0
    %1106 = vmatpush1.msra.mxu0 0.0
    %1107 = vmatprep.subr.mxu0 0.0
    %1108 = vmatpush1.msra.mxu0 0.0
    %1109 = vmatprep.subr.mxu0 0.0
    %1110 = vmatpush1.msra.mxu0 0.0
    %1111 = vmatprep.subr.mxu0 0.0
    %1112 = vmatpush1.msra.mxu0 0.0
    %1113 = vmatprep.subr.mxu0 0.0
    %1114 = vmatpush1.msra.mxu0 0.0
    %1115 = vmatprep.subr.mxu0 0.0
    %1116 = vmatpush1.msra.mxu0 0.0
    %1117 = vmatprep.subr.mxu0 0.0
    %1118 = vmatpush1.msra.mxu0 0.0
    %1119 = vmatprep.subr.mxu0 0.0
    %1120 = vmatpush1.msra.mxu0 0.0
    %1121 = vmatprep.subr.mxu0 0.0
    %1122 = vmatpush1.msra.mxu0 0.0
    %1123 = vmatprep.subr.mxu0 0.0
    %1124 = vmatpush1.msra.mxu0 0.0
    %1125 = vmatprep.mubr.f32.mxu0 0.0
    %1126 = vmatmul.mubr.f32.gmra.mrb[0].mxu0 %v1059
    %v1127 = vpop.f32.mrb[0].mxu0
    %v1128 = vadd.f32 0.0, %v1127
    %v1129 = vpop.f32.mrb[0].mxu0
    %1130 = vdwg.mxu0
    %v1131 = vadd.f32 %v1128, %v235
    %v1132 = vld [vmem:[#allocation6] sm:$0xff]
    %v1133 = vld [vmem:[#allocation6 + $0x8] sm:$0xff]
    %v1134 = vld [vmem:[#allocation6 + $0x10] sm:$0xff]
    %v1135 = vld [vmem:[#allocation6 + $0x18] sm:$0xff]
    %v1136 = vld [vmem:[#allocation6 + $0x20] sm:$0xff]
    %v1137 = vld [vmem:[#allocation6 + $0x28] sm:$0xff]
    %v1138 = vld [vmem:[#allocation6 + $0x30] sm:$0xff]
    %v1139 = vld [vmem:[#allocation6 + $0x38] sm:$0xff]
    %v1140 = vld [vmem:[#allocation6 + $0x40] sm:$0xff]
    %v1141 = vld [vmem:[#allocation6 + $0x48] sm:$0xff]
    %v1142 = vadd.f32 %v1128, %v1132
    %v1143 = vadd.f32 %v1128, %v1133
    %v1144 = vadd.f32 %v1128, %v1134
    %v1145 = vadd.f32 %v1128, %v1135
    %v1146 = vadd.f32 %v1128, %v1136
    %v1147 = vadd.f32 %v1128, %v1137
    %v1148 = vadd.f32 %v1128, %v1138
    %v1149 = vadd.f32 %v1128, %v1139
    %v1150 = vadd.f32 %v1128, %v1140
    %v1151 = vadd.f32 %v1128, %v1141
    %v1152 = vtanh.pop %v1142
    %v1153 = vtanh.pop %v1143
    %v1154 = vtanh.pop %v1144
    %v1155 = vtanh.pop %v1145
    %v1156 = vtanh.pop %v1146
    %v1157 = vtanh.pop %v1147
    %v1158 = vtanh.pop %v1148
    %v1159 = vtanh.pop %v1149
    %v1160 = vtanh.pop %v1150
    %v1161 = vtanh.pop %v1151
    %v1162 = vmul.f32 %v1152, %v272
    %v1163 = vmul.f32 %v1153, %v272
    %v1164 = vmul.f32 %v1154, %v272
    %v1165 = vmul.f32 %v1155, %v272
    %v1166 = vmul.f32 %v1156, %v272
    %v1167 = vmul.f32 %v1157, %v272
    %v1168 = vmul.f32 %v1158, %v272
    %v1169 = vmul.f32 %v1159, %v272
    %v1170 = vmul.f32 %v1160, %v272
    %v1171 = vmul.f32 %v1161, %v272
    %v1172 = vsel %vm155, %v1162, 0.0
    %1173 = vadd.xlane.f32.xlu0 %v1172
    %v1174 = vpop.xlane.xlu0 %1173
    %v1175 = vsel %vm155, %v1163, 0.0
    %1176 = vadd.xlane.f32.xlu0 %v1175
    %v1177 = vpop.xlane.xlu0 %1176
    %v1178 = vsel %vm155, %v1164, 0.0
    %1179 = vadd.xlane.f32.xlu0 %v1178
    %v1180 = vpop.xlane.xlu0 %1179
    %v1181 = vsel %vm155, %v1165, 0.0
    %1182 = vadd.xlane.f32.xlu0 %v1181
    %v1183 = vpop.xlane.xlu0 %1182
    %v1184 = vsel %vm155, %v1166, 0.0
    %1185 = vadd.xlane.f32.xlu0 %v1184
    %v1186 = vpop.xlane.xlu0 %1185
    %v1187 = vsel %vm155, %v1167, 0.0
    %1188 = vadd.xlane.f32.xlu0 %v1187
    %v1189 = vpop.xlane.xlu0 %1188
    %v1190 = vsel %vm155, %v1168, 0.0
    %1191 = vadd.xlane.f32.xlu0 %v1190
    %v1192 = vpop.xlane.xlu0 %1191
    %v1193 = vsel %vm155, %v1169, 0.0
    %1194 = vadd.xlane.f32.xlu0 %v1193
    %v1195 = vpop.xlane.xlu0 %1194
    %v1196 = vsel %vm155, %v1170, 0.0
    %1197 = vadd.xlane.f32.xlu0 %v1196
    %v1198 = vpop.xlane.xlu0 %1197
    %v1199 = vsel %vm155, %v1171, 0.0
    %1200 = vadd.xlane.f32.xlu0 %v1199
    %v1201 = vpop.xlane.xlu0 %1200
    %v1212 = vlaneseq
    %v1213 = vshrl.u32 %v1212, 7
    %v1214 = vsub.s32 %v325, %v1213
    %v1215 = vrot.slane %v1174, %v1214
    %v1216 = vlaneseq
    %v1217 = vshrl.u32 %v1216, 7
    %v1218 = vsub.s32 %v325, %v1217
    %v1219 = vrot.slane %v1177, %v1218
    %v1220 = vlaneseq
    %v1221 = vshrl.u32 %v1220, 7
    %v1222 = vsub.s32 %v325, %v1221
    %v1223 = vrot.slane %v1180, %v1222
    %v1224 = vlaneseq
    %v1225 = vshrl.u32 %v1224, 7
    %v1226 = vsub.s32 %v325, %v1225
    %v1227 = vrot.slane %v1183, %v1226
    %v1228 = vlaneseq
    %v1229 = vshrl.u32 %v1228, 7
    %v1230 = vsub.s32 %v325, %v1229
    %v1231 = vrot.slane %v1186, %v1230
    %v1232 = vlaneseq
    %v1233 = vshrl.u32 %v1232, 7
    %v1234 = vsub.s32 %v325, %v1233
    %v1235 = vrot.slane %v1189, %v1234
    %v1236 = vlaneseq
    %v1237 = vshrl.u32 %v1236, 7
    %v1238 = vsub.s32 %v325, %v1237
    %v1239 = vrot.slane %v1192, %v1238
    %v1240 = vlaneseq
    %v1241 = vshrl.u32 %v1240, 7
    %v1242 = vsub.s32 %v325, %v1241
    %v1243 = vrot.slane %v1195, %v1242
    %v1244 = vlaneseq
    %v1245 = vshrl.u32 %v1244, 7
    %v1246 = vsub.s32 %v325, %v1245
    %v1247 = vrot.slane %v1198, %v1246
    %v1248 = vlaneseq
    %v1249 = vshrl.u32 %v1248, 7
    %v1250 = vsub.s32 %v325, %v1249
    %v1251 = vrot.slane %v1201, %v1250
    %v1252 = vsel %vm366, %v1219, %v1215
    %v1253 = vsel %vm368, %v1223, %v1252
    %v1254 = vsel %vm370, %v1227, %v1253
    %v1255 = vsel %vm372, %v1231, %v1254
    %v1256 = vsel %vm374, %v1235, %v1255
    %v1257 = vsel %vm376, %v1239, %v1256
    %v1258 = vsel %vm378, %v1243, %v1257
    %v1259 = vsel %vm366, %v1251, %v1247
    %v1262 = vsel %vm152, %v1258, -1000000.0
    %v1263 = vsel %vm153, %v1259, -1000000.0
    %v1264 = vmul.f32 %v1262, 1.442695
    %v1265 = vpow.pop %v1264
    %v1266 = vmul.f32 %v1263, 1.442695
    %v1267 = vpow.pop %v1266
    %s1268 = scalar_lea.vmem %s12, 32
    %1269 = vst.msk [vmem:[%s1268] sm:$0xff] %vm389, %v1265
    %1270 = vst.msk [vmem:[%s1268 + $0x8] sm:$0x3] %vm391, %v1267
    %v1271 = vlaneseq
    %v1272 = vshrl.u32 %v1271, 7
    %v1273 = vsub.s32 0, %v1272
    %v1274 = vrot.slane %v1265, %v1273
    %1276 = vbcast.lane.b32.xlu0 %v1274, 256
    %v1277 = vpop.permute.xlu0 %1276
    %v1278 = vlaneseq
    %v1279 = vshrl.u32 %v1278, 7
    %v1280 = vsub.s32 1, %v1279
    %v1281 = vrot.slane %v1265, %v1280
    %1283 = vbcast.lane.b32.xlu0 %v1281, 256
    %v1284 = vpop.permute.xlu0 %1283
    %v1285 = vlaneseq
    %v1286 = vshrl.u32 %v1285, 7
    %v1287 = vsub.s32 2, %v1286
    %v1288 = vrot.slane %v1265, %v1287
    %1290 = vbcast.lane.b32.xlu0 %v1288, 256
    %v1291 = vpop.permute.xlu0 %1290
    %v1292 = vlaneseq
    %v1293 = vshrl.u32 %v1292, 7
    %v1294 = vsub.s32 3, %v1293
    %v1295 = vrot.slane %v1265, %v1294
    %1297 = vbcast.lane.b32.xlu0 %v1295, 256
    %v1298 = vpop.permute.xlu0 %1297
    %v1299 = vlaneseq
    %v1300 = vshrl.u32 %v1299, 7
    %v1301 = vsub.s32 4, %v1300
    %v1302 = vrot.slane %v1265, %v1301
    %1304 = vbcast.lane.b32.xlu0 %v1302, 256
    %v1305 = vpop.permute.xlu0 %1304
    %v1306 = vlaneseq
    %v1307 = vshrl.u32 %v1306, 7
    %v1308 = vsub.s32 5, %v1307
    %v1309 = vrot.slane %v1265, %v1308
    %1311 = vbcast.lane.b32.xlu0 %v1309, 256
    %v1312 = vpop.permute.xlu0 %1311
    %v1313 = vlaneseq
    %v1314 = vshrl.u32 %v1313, 7
    %v1315 = vsub.s32 6, %v1314
    %v1316 = vrot.slane %v1265, %v1315
    %1318 = vbcast.lane.b32.xlu0 %v1316, 256
    %v1319 = vpop.permute.xlu0 %1318
    %v1320 = vlaneseq
    %v1321 = vshrl.u32 %v1320, 7
    %v1322 = vsub.s32 7, %v1321
    %v1323 = vrot.slane %v1265, %v1322
    %1325 = vbcast.lane.b32.xlu0 %v1323, 256
    %v1326 = vpop.permute.xlu0 %1325
    %v1327 = vlaneseq
    %v1328 = vshrl.u32 %v1327, 7
    %v1329 = vsub.s32 0, %v1328
    %v1330 = vrot.slane %v1267, %v1329
    %1332 = vbcast.lane.b32.xlu0 %v1330, 256
    %v1333 = vpop.permute.xlu0 %1332
    %v1334 = vlaneseq
    %v1335 = vshrl.u32 %v1334, 7
    %v1336 = vsub.s32 1, %v1335
    %v1337 = vrot.slane %v1267, %v1336
    %1339 = vbcast.lane.b32.xlu0 %v1337, 256
    %v1340 = vpop.permute.xlu0 %1339
    %v1341 = vld [vmem:[#allocation8] sm:$0xff]
    %v1342 = vld [vmem:[#allocation8 + $0x8] sm:$0xff]
    %v1343 = vld [vmem:[#allocation8 + $0x10] sm:$0xff]
    %v1344 = vld [vmem:[#allocation8 + $0x18] sm:$0xff]
    %v1345 = vld [vmem:[#allocation8 + $0x20] sm:$0xff]
    %v1346 = vld [vmem:[#allocation8 + $0x28] sm:$0xff]
    %v1347 = vld [vmem:[#allocation8 + $0x30] sm:$0xff]
    %v1348 = vld [vmem:[#allocation8 + $0x38] sm:$0xff]
    %v1349 = vld [vmem:[#allocation8 + $0x40] sm:$0xff]
    %v1350 = vld [vmem:[#allocation8 + $0x48] sm:$0xff]
    %v1351 = vmul.f32 %v1277, %v1341
    %v1352 = vmul.f32 %v1284, %v1342
    %v1353 = vmul.f32 %v1291, %v1343
    %v1354 = vmul.f32 %v1298, %v1344
    %v1355 = vmul.f32 %v1305, %v1345
    %v1356 = vmul.f32 %v1312, %v1346
    %v1357 = vmul.f32 %v1319, %v1347
    %v1358 = vmul.f32 %v1326, %v1348
    %v1359 = vmul.f32 %v1333, %v1349
    %v1360 = vmul.f32 %v1340, %v1350
    %v1361 = vsel %vm483, %v1351, 0.0
    %v1362 = vsel %vm483, %v1352, 0.0
    %v1363 = vadd.f32 %v1361, %v1362
    %v1364 = vsel %vm483, %v1353, 0.0
    %v1365 = vadd.f32 %v1363, %v1364
    %v1366 = vsel %vm483, %v1354, 0.0
    %v1367 = vadd.f32 %v1365, %v1366
    %v1368 = vsel %vm483, %v1355, 0.0
    %v1369 = vadd.f32 %v1367, %v1368
    %v1370 = vsel %vm483, %v1356, 0.0
    %v1371 = vadd.f32 %v1369, %v1370
    %v1372 = vsel %vm483, %v1357, 0.0
    %v1373 = vadd.f32 %v1371, %v1372
    %v1374 = vsel %vm483, %v1358, 0.0
    %v1375 = vadd.f32 %v1373, %v1374
    %v1376 = vsel %vm483, %v1359, 0.0
    %v1377 = vadd.f32 %v1375, %v1376
    %v1378 = vsel %vm483, %v1360, 0.0
    %v1379 = vadd.f32 %v1377, %v1378
    %v1380 = vrcp.pop %v1379
    %1382 = vset.pattern.permute.xlu0 32
    %1383 = vperm.xlu0 %1382, %v1380
    %v1384 = vpop.permute.xlu0 %1383
    %v1386 = vmul.f32 %v1379, %v1384
    %s1387 = scalar_lea.vmem [#allocation3], 16
    %v1388 = vld [vmem:[%s1387] sm:$0xff]
    %v1390 = vsel %vm155, %v1386, 0
    %1392 = vmatprep.subr.mxu0 0.0
    %1393 = vmatpush1.msra.mxu0 %v139
    %1394 = vmatprep.subr.mxu0 0.0
    %1395 = vmatpush1.msra.mxu0 %v140
    %1396 = vmatprep.subr.mxu0 0.0
    %1397 = vmatpush1.msra.mxu0 %v141
    %1398 = vmatprep.subr.mxu0 0.0
    %1399 = vmatpush1.msra.mxu0 %v142
    %1400 = vmatprep.subr.mxu0 0.0
    %1401 = vmatpush1.msra.mxu0 0.0
    %1402 = vmatprep.subr.mxu0 0.0
    %1403 = vmatpush1.msra.mxu0 0.0
    %1404 = vmatprep.subr.mxu0 0.0
    %1405 = vmatpush1.msra.mxu0 0.0
    %1406 = vmatprep.subr.mxu0 0.0
    %1407 = vmatpush1.msra.mxu0 0.0
    %1408 = vmatprep.subr.mxu0 0.0
    %1409 = vmatpush1.msra.mxu0 0.0
    %1410 = vmatprep.subr.mxu0 0.0
    %1411 = vmatpush1.msra.mxu0 0.0
    %1412 = vmatprep.subr.mxu0 0.0
    %1413 = vmatpush1.msra.mxu0 0.0
    %1414 = vmatprep.subr.mxu0 0.0
    %1415 = vmatpush1.msra.mxu0 0.0
    %1416 = vmatprep.subr.mxu0 0.0
    %1417 = vmatpush1.msra.mxu0 0.0
    %1418 = vmatprep.subr.mxu0 0.0
    %1419 = vmatpush1.msra.mxu0 0.0
    %1420 = vmatprep.subr.mxu0 0.0
    %1421 = vmatpush1.msra.mxu0 0.0
    %1422 = vmatprep.subr.mxu0 0.0
    %1423 = vmatpush1.msra.mxu0 0.0
    %1424 = vmatprep.subr.mxu0 0.0
    %1425 = vmatpush1.msra.mxu0 0.0
    %1426 = vmatprep.subr.mxu0 0.0
    %1427 = vmatpush1.msra.mxu0 0.0
    %1428 = vmatprep.subr.mxu0 0.0
    %1429 = vmatpush1.msra.mxu0 0.0
    %1430 = vmatprep.subr.mxu0 0.0
    %1431 = vmatpush1.msra.mxu0 0.0
    %1432 = vmatprep.subr.mxu0 0.0
    %1433 = vmatpush1.msra.mxu0 0.0
    %1434 = vmatprep.subr.mxu0 0.0
    %1435 = vmatpush1.msra.mxu0 0.0
    %1436 = vmatprep.subr.mxu0 0.0
    %1437 = vmatpush1.msra.mxu0 0.0
    %1438 = vmatprep.subr.mxu0 0.0
    %1439 = vmatpush1.msra.mxu0 0.0
    %1440 = vmatprep.subr.mxu0 0.0
    %1441 = vmatpush1.msra.mxu0 0.0
    %1442 = vmatprep.subr.mxu0 0.0
    %1443 = vmatpush1.msra.mxu0 0.0
    %1444 = vmatprep.subr.mxu0 0.0
    %1445 = vmatpush1.msra.mxu0 0.0
    %1446 = vmatprep.subr.mxu0 0.0
    %1447 = vmatpush1.msra.mxu0 0.0
    %1448 = vmatprep.subr.mxu0 0.0
    %1449 = vmatpush1.msra.mxu0 0.0
    %1450 = vmatprep.subr.mxu0 0.0
    %1451 = vmatpush1.msra.mxu0 0.0
    %1452 = vmatprep.subr.mxu0 0.0
    %1453 = vmatpush1.msra.mxu0 0.0
    %1454 = vmatprep.subr.mxu0 0.0
    %1455 = vmatpush1.msra.mxu0 0.0
    %1456 = vmatprep.mubr.f32.mxu0 0.0
    %1457 = vmatmul.mubr.f32.gmra.mrb[0].mxu0 %v1390
    %v1458 = vpop.f32.mrb[0].mxu0
    %v1459 = vadd.f32 %v1388, %v1458
    %v1460 = vpop.f32.mrb[0].mxu0
    %1461 = vdwg.mxu0
    %1463 = vrot.lane.b32.xlu0 %v1131, 96
    %v1464 = vpop.permute.xlu0 %1463
    %v1466 = vadd.f32 %v1459, %v1464
    %v1467 = vxor.u32 %v1466, 2147483648
    %v1468 = vmul.f32 %v1467, 1.442695
    %v1469 = vpow.pop %v1468
    %v1470 = vadd.f32 %v1469, 1.0
    %v1471 = vrcp.pop %v1470
    %v1472 = vmul.f32 1.0, %v1471
    %1473 = vrot.lane.b32.xlu0 %v1131, 32
    %v1474 = vpop.permute.xlu0 %1473
    %v1476 = vmul.f32 %v1472, %v1474
    %1478 = vrot.lane.b32.xlu0 %v1476, 64
    %v1479 = vpop.permute.xlu0 %1478
    %v1481 = vadd.f32 %v1459, %v1479
    %v1482 = vtanh.pop %v1481
    %v1483 = vsub.f32 1.0, %v1472
    %1485 = vrot.lane.b32.xlu0 %v1482, 96
    %v1486 = vpop.permute.xlu0 %1485
    %v1488 = vmul.f32 %v1483, %v1486
    %v1489 = vmul.f32 %v1472, %v1052
    %v1490 = vadd.f32 %v1488, %v1489
    %1492 = vrot.lane.b32.xlu0 %v1490, 96
    %v1493 = vpop.permute.xlu0 %1492
    %s1495 = scalar_lea.vmem [#allocation2], 16
    %1496 = vst.msk [vmem:[%s1495] sm:$0xff] %vm155, %v1493
    %v1497 = vsel %vm155, %v1493, 0
    %1499 = vmatprep.subr.mxu0 0.0
    %1500 = vmatpush1.msra.mxu0 %v134
    %1501 = vmatprep.subr.mxu0 0.0
    %1502 = vmatpush1.msra.mxu0 %v135
    %1503 = vmatprep.subr.mxu0 0.0
    %1504 = vmatpush1.msra.mxu0 %v136
    %1505 = vmatprep.subr.mxu0 0.0
    %1506 = vmatpush1.msra.mxu0 %v137
    %1507 = vmatprep.subr.mxu0 0.0
    %1508 = vmatpush1.msra.mxu0 0.0
    %1509 = vmatprep.subr.mxu0 0.0
    %1510 = vmatpush1.msra.mxu0 0.0
    %1511 = vmatprep.subr.mxu0 0.0
    %1512 = vmatpush1.msra.mxu0 0.0
    %1513 = vmatprep.subr.mxu0 0.0
    %1514 = vmatpush1.msra.mxu0 0.0
    %1515 = vmatprep.subr.mxu0 0.0
    %1516 = vmatpush1.msra.mxu0 0.0
    %1517 = vmatprep.subr.mxu0 0.0
    %1518 = vmatpush1.msra.mxu0 0.0
    %1519 = vmatprep.subr.mxu0 0.0
    %1520 = vmatpush1.msra.mxu0 0.0
    %1521 = vmatprep.subr.mxu0 0.0
    %1522 = vmatpush1.msra.mxu0 0.0
    %1523 = vmatprep.subr.mxu0 0.0
    %1524 = vmatpush1.msra.mxu0 0.0
    %1525 = vmatprep.subr.mxu0 0.0
    %1526 = vmatpush1.msra.mxu0 0.0
    %1527 = vmatprep.subr.mxu0 0.0
    %1528 = vmatpush1.msra.mxu0 0.0
    %1529 = vmatprep.subr.mxu0 0.0
    %1530 = vmatpush1.msra.mxu0 0.0
    %1531 = vmatprep.subr.mxu0 0.0
    %1532 = vmatpush1.msra.mxu0 0.0
    %1533 = vmatprep.subr.mxu0 0.0
    %1534 = vmatpush1.msra.mxu0 0.0
    %1535 = vmatprep.subr.mxu0 0.0
    %1536 = vmatpush1.msra.mxu0 0.0
    %1537 = vmatprep.subr.mxu0 0.0
    %1538 = vmatpush1.msra.mxu0 0.0
    %1539 = vmatprep.subr.mxu0 0.0
    %1540 = vmatpush1.msra.mxu0 0.0
    %1541 = vmatprep.subr.mxu0 0.0
    %1542 = vmatpush1.msra.mxu0 0.0
    %1543 = vmatprep.subr.mxu0 0.0
    %1544 = vmatpush1.msra.mxu0 0.0
    %1545 = vmatprep.subr.mxu0 0.0
    %1546 = vmatpush1.msra.mxu0 0.0
    %1547 = vmatprep.subr.mxu0 0.0
    %1548 = vmatpush1.msra.mxu0 0.0
    %1549 = vmatprep.subr.mxu0 0.0
    %1550 = vmatpush1.msra.mxu0 0.0
    %1551 = vmatprep.subr.mxu0 0.0
    %1552 = vmatpush1.msra.mxu0 0.0
    %1553 = vmatprep.subr.mxu0 0.0
    %1554 = vmatpush1.msra.mxu0 0.0
    %1555 = vmatprep.subr.mxu0 0.0
    %1556 = vmatpush1.msra.mxu0 0.0
    %1557 = vmatprep.subr.mxu0 0.0
    %1558 = vmatpush1.msra.mxu0 0.0
    %1559 = vmatprep.subr.mxu0 0.0
    %1560 = vmatpush1.msra.mxu0 0.0
    %1561 = vmatprep.subr.mxu0 0.0
    %1562 = vmatpush1.msra.mxu0 0.0
    %1563 = vmatprep.mubr.f32.mxu0 0.0
    %1564 = vmatmul.mubr.f32.gmra.mrb[0].mxu0 %v1497
    %v1565 = vpop.f32.mrb[0].mxu0
    %v1566 = vadd.f32 0.0, %v1565
    %v1567 = vpop.f32.mrb[0].mxu0
    %1568 = vdwg.mxu0
    %v1569 = vadd.f32 %v1566, %v235
    %v1570 = vld [vmem:[#allocation6] sm:$0xff]
    %v1571 = vld [vmem:[#allocation6 + $0x8] sm:$0xff]
    %v1572 = vld [vmem:[#allocation6 + $0x10] sm:$0xff]
    %v1573 = vld [vmem:[#allocation6 + $0x18] sm:$0xff]
    %v1574 = vld [vmem:[#allocation6 + $0x20] sm:$0xff]
    %v1575 = vld [vmem:[#allocation6 + $0x28] sm:$0xff]
    %v1576 = vld [vmem:[#allocation6 + $0x30] sm:$0xff]
    %v1577 = vld [vmem:[#allocation6 + $0x38] sm:$0xff]
    %v1578 = vld [vmem:[#allocation6 + $0x40] sm:$0xff]
    %v1579 = vld [vmem:[#allocation6 + $0x48] sm:$0xff]
    %v1580 = vadd.f32 %v1566, %v1570
    %v1581 = vadd.f32 %v1566, %v1571
    %v1582 = vadd.f32 %v1566, %v1572
    %v1583 = vadd.f32 %v1566, %v1573
    %v1584 = vadd.f32 %v1566, %v1574
    %v1585 = vadd.f32 %v1566, %v1575
    %v1586 = vadd.f32 %v1566, %v1576
    %v1587 = vadd.f32 %v1566, %v1577
    %v1588 = vadd.f32 %v1566, %v1578
    %v1589 = vadd.f32 %v1566, %v1579
    %v1590 = vtanh.pop %v1580
    %v1591 = vtanh.pop %v1581
    %v1592 = vtanh.pop %v1582
    %v1593 = vtanh.pop %v1583
    %v1594 = vtanh.pop %v1584
    %v1595 = vtanh.pop %v1585
    %v1596 = vtanh.pop %v1586
    %v1597 = vtanh.pop %v1587
    %v1598 = vtanh.pop %v1588
    %v1599 = vtanh.pop %v1589
    %v1600 = vmul.f32 %v1590, %v272
    %v1601 = vmul.f32 %v1591, %v272
    %v1602 = vmul.f32 %v1592, %v272
    %v1603 = vmul.f32 %v1593, %v272
    %v1604 = vmul.f32 %v1594, %v272
    %v1605 = vmul.f32 %v1595, %v272
    %v1606 = vmul.f32 %v1596, %v272
    %v1607 = vmul.f32 %v1597, %v272
    %v1608 = vmul.f32 %v1598, %v272
    %v1609 = vmul.f32 %v1599, %v272
    %v1610 = vsel %vm155, %v1600, 0.0
    %1611 = vadd.xlane.f32.xlu0 %v1610
    %v1612 = vpop.xlane.xlu0 %1611
    %v1613 = vsel %vm155, %v1601, 0.0
    %1614 = vadd.xlane.f32.xlu0 %v1613
    %v1615 = vpop.xlane.xlu0 %1614
    %v1616 = vsel %vm155, %v1602, 0.0
    %1617 = vadd.xlane.f32.xlu0 %v1616
    %v1618 = vpop.xlane.xlu0 %1617
    %v1619 = vsel %vm155, %v1603, 0.0
    %1620 = vadd.xlane.f32.xlu0 %v1619
    %v1621 = vpop.xlane.xlu0 %1620
    %v1622 = vsel %vm155, %v1604, 0.0
    %1623 = vadd.xlane.f32.xlu0 %v1622
    %v1624 = vpop.xlane.xlu0 %1623
    %v1625 = vsel %vm155, %v1605, 0.0
    %1626 = vadd.xlane.f32.xlu0 %v1625
    %v1627 = vpop.xlane.xlu0 %1626
    %v1628 = vsel %vm155, %v1606, 0.0
    %1629 = vadd.xlane.f32.xlu0 %v1628
    %v1630 = vpop.xlane.xlu0 %1629
    %v1631 = vsel %vm155, %v1607, 0.0
    %1632 = vadd.xlane.f32.xlu0 %v1631
    %v1633 = vpop.xlane.xlu0 %1632
    %v1634 = vsel %vm155, %v1608, 0.0
    %1635 = vadd.xlane.f32.xlu0 %v1634
    %v1636 = vpop.xlane.xlu0 %1635
    %v1637 = vsel %vm155, %v1609, 0.0
    %1638 = vadd.xlane.f32.xlu0 %v1637
    %v1639 = vpop.xlane.xlu0 %1638
    %v1650 = vlaneseq
    %v1651 = vshrl.u32 %v1650, 7
    %v1652 = vsub.s32 %v325, %v1651
    %v1653 = vrot.slane %v1612, %v1652
    %v1654 = vlaneseq
    %v1655 = vshrl.u32 %v1654, 7
    %v1656 = vsub.s32 %v325, %v1655
    %v1657 = vrot.slane %v1615, %v1656
    %v1658 = vlaneseq
    %v1659 = vshrl.u32 %v1658, 7
    %v1660 = vsub.s32 %v325, %v1659
    %v1661 = vrot.slane %v1618, %v1660
    %v1662 = vlaneseq
    %v1663 = vshrl.u32 %v1662, 7
    %v1664 = vsub.s32 %v325, %v1663
    %v1665 = vrot.slane %v1621, %v1664
    %v1666 = vlaneseq
    %v1667 = vshrl.u32 %v1666, 7
    %v1668 = vsub.s32 %v325, %v1667
    %v1669 = vrot.slane %v1624, %v1668
    %v1670 = vlaneseq
    %v1671 = vshrl.u32 %v1670, 7
    %v1672 = vsub.s32 %v325, %v1671
    %v1673 = vrot.slane %v1627, %v1672
    %v1674 = vlaneseq
    %v1675 = vshrl.u32 %v1674, 7
    %v1676 = vsub.s32 %v325, %v1675
    %v1677 = vrot.slane %v1630, %v1676
    %v1678 = vlaneseq
    %v1679 = vshrl.u32 %v1678, 7
    %v1680 = vsub.s32 %v325, %v1679
    %v1681 = vrot.slane %v1633, %v1680
    %v1682 = vlaneseq
    %v1683 = vshrl.u32 %v1682, 7
    %v1684 = vsub.s32 %v325, %v1683
    %v1685 = vrot.slane %v1636, %v1684
    %v1686 = vlaneseq
    %v1687 = vshrl.u32 %v1686, 7
    %v1688 = vsub.s32 %v325, %v1687
    %v1689 = vrot.slane %v1639, %v1688
    %v1690 = vsel %vm366, %v1657, %v1653
    %v1691 = vsel %vm368, %v1661, %v1690
    %v1692 = vsel %vm370, %v1665, %v1691
    %v1693 = vsel %vm372, %v1669, %v1692
    %v1694 = vsel %vm374, %v1673, %v1693
    %v1695 = vsel %vm376, %v1677, %v1694
    %v1696 = vsel %vm378, %v1681, %v1695
    %v1697 = vsel %vm366, %v1689, %v1685
    %v1700 = vsel %vm152, %v1696, -1000000.0
    %v1701 = vsel %vm153, %v1697, -1000000.0
    %v1702 = vmul.f32 %v1700, 1.442695
    %v1703 = vpow.pop %v1702
    %v1704 = vmul.f32 %v1701, 1.442695
    %v1705 = vpow.pop %v1704
    %s1706 = scalar_lea.vmem %s12, 48
    %1707 = vst.msk [vmem:[%s1706] sm:$0xff] %vm389, %v1703
    %1708 = vst.msk [vmem:[%s1706 + $0x8] sm:$0x3] %vm391, %v1705
    %v1709 = vlaneseq
    %v1710 = vshrl.u32 %v1709, 7
    %v1711 = vsub.s32 0, %v1710
    %v1712 = vrot.slane %v1703, %v1711
    %1714 = vbcast.lane.b32.xlu0 %v1712, 256
    %v1715 = vpop.permute.xlu0 %1714
    %v1716 = vlaneseq
    %v1717 = vshrl.u32 %v1716, 7
    %v1718 = vsub.s32 1, %v1717
    %v1719 = vrot.slane %v1703, %v1718
    %1721 = vbcast.lane.b32.xlu0 %v1719, 256
    %v1722 = vpop.permute.xlu0 %1721
    %v1723 = vlaneseq
    %v1724 = vshrl.u32 %v1723, 7
    %v1725 = vsub.s32 2, %v1724
    %v1726 = vrot.slane %v1703, %v1725
    %1728 = vbcast.lane.b32.xlu0 %v1726, 256
    %v1729 = vpop.permute.xlu0 %1728
    %v1730 = vlaneseq
    %v1731 = vshrl.u32 %v1730, 7
    %v1732 = vsub.s32 3, %v1731
    %v1733 = vrot.slane %v1703, %v1732
    %1735 = vbcast.lane.b32.xlu0 %v1733, 256
    %v1736 = vpop.permute.xlu0 %1735
    %v1737 = vlaneseq
    %v1738 = vshrl.u32 %v1737, 7
    %v1739 = vsub.s32 4, %v1738
    %v1740 = vrot.slane %v1703, %v1739
    %1742 = vbcast.lane.b32.xlu0 %v1740, 256
    %v1743 = vpop.permute.xlu0 %1742
    %v1744 = vlaneseq
    %v1745 = vshrl.u32 %v1744, 7
    %v1746 = vsub.s32 5, %v1745
    %v1747 = vrot.slane %v1703, %v1746
    %1749 = vbcast.lane.b32.xlu0 %v1747, 256
    %v1750 = vpop.permute.xlu0 %1749
    %v1751 = vlaneseq
    %v1752 = vshrl.u32 %v1751, 7
    %v1753 = vsub.s32 6, %v1752
    %v1754 = vrot.slane %v1703, %v1753
    %1756 = vbcast.lane.b32.xlu0 %v1754, 256
    %v1757 = vpop.permute.xlu0 %1756
    %v1758 = vlaneseq
    %v1759 = vshrl.u32 %v1758, 7
    %v1760 = vsub.s32 7, %v1759
    %v1761 = vrot.slane %v1703, %v1760
    %1763 = vbcast.lane.b32.xlu0 %v1761, 256
    %v1764 = vpop.permute.xlu0 %1763
    %v1765 = vlaneseq
    %v1766 = vshrl.u32 %v1765, 7
    %v1767 = vsub.s32 0, %v1766
    %v1768 = vrot.slane %v1705, %v1767
    %1770 = vbcast.lane.b32.xlu0 %v1768, 256
    %v1771 = vpop.permute.xlu0 %1770
    %v1772 = vlaneseq
    %v1773 = vshrl.u32 %v1772, 7
    %v1774 = vsub.s32 1, %v1773
    %v1775 = vrot.slane %v1705, %v1774
    %1777 = vbcast.lane.b32.xlu0 %v1775, 256
    %v1778 = vpop.permute.xlu0 %1777
    %v1779 = vld [vmem:[#allocation8] sm:$0xff]
    %v1780 = vld [vmem:[#allocation8 + $0x8] sm:$0xff]
    %v1781 = vld [vmem:[#allocation8 + $0x10] sm:$0xff]
    %v1782 = vld [vmem:[#allocation8 + $0x18] sm:$0xff]
    %v1783 = vld [vmem:[#allocation8 + $0x20] sm:$0xff]
    %v1784 = vld [vmem:[#allocation8 + $0x28] sm:$0xff]
    %v1785 = vld [vmem:[#allocation8 + $0x30] sm:$0xff]
    %v1786 = vld [vmem:[#allocation8 + $0x38] sm:$0xff]
    %v1787 = vld [vmem:[#allocation8 + $0x40] sm:$0xff]
    %v1788 = vld [vmem:[#allocation8 + $0x48] sm:$0xff]
    %v1789 = vmul.f32 %v1715, %v1779
    %v1790 = vmul.f32 %v1722, %v1780
    %v1791 = vmul.f32 %v1729, %v1781
    %v1792 = vmul.f32 %v1736, %v1782
    %v1793 = vmul.f32 %v1743, %v1783
    %v1794 = vmul.f32 %v1750, %v1784
    %v1795 = vmul.f32 %v1757, %v1785
    %v1796 = vmul.f32 %v1764, %v1786
    %v1797 = vmul.f32 %v1771, %v1787
    %v1798 = vmul.f32 %v1778, %v1788
    %v1799 = vsel %vm483, %v1789, 0.0
    %v1800 = vsel %vm483, %v1790, 0.0
    %v1801 = vadd.f32 %v1799, %v1800
    %v1802 = vsel %vm483, %v1791, 0.0
    %v1803 = vadd.f32 %v1801, %v1802
    %v1804 = vsel %vm483, %v1792, 0.0
    %v1805 = vadd.f32 %v1803, %v1804
    %v1806 = vsel %vm483, %v1793, 0.0
    %v1807 = vadd.f32 %v1805, %v1806
    %v1808 = vsel %vm483, %v1794, 0.0
    %v1809 = vadd.f32 %v1807, %v1808
    %v1810 = vsel %vm483, %v1795, 0.0
    %v1811 = vadd.f32 %v1809, %v1810
    %v1812 = vsel %vm483, %v1796, 0.0
    %v1813 = vadd.f32 %v1811, %v1812
    %v1814 = vsel %vm483, %v1797, 0.0
    %v1815 = vadd.f32 %v1813, %v1814
    %v1816 = vsel %vm483, %v1798, 0.0
    %v1817 = vadd.f32 %v1815, %v1816
    %v1818 = vrcp.pop %v1817
    %1820 = vset.pattern.permute.xlu0 32
    %1821 = vperm.xlu0 %1820, %v1818
    %v1822 = vpop.permute.xlu0 %1821
    %v1824 = vmul.f32 %v1817, %v1822
    %s1825 = scalar_lea.vmem [#allocation3], 24
    %v1826 = vld [vmem:[%s1825] sm:$0xff]
    %v1828 = vsel %vm155, %v1824, 0
    %1830 = vmatprep.subr.mxu0 0.0
    %1831 = vmatpush1.msra.mxu0 %v139
    %1832 = vmatprep.subr.mxu0 0.0
    %1833 = vmatpush1.msra.mxu0 %v140
    %1834 = vmatprep.subr.mxu0 0.0
    %1835 = vmatpush1.msra.mxu0 %v141
    %1836 = vmatprep.subr.mxu0 0.0
    %1837 = vmatpush1.msra.mxu0 %v142
    %1838 = vmatprep.subr.mxu0 0.0
    %1839 = vmatpush1.msra.mxu0 0.0
    %1840 = vmatprep.subr.mxu0 0.0
    %1841 = vmatpush1.msra.mxu0 0.0
    %1842 = vmatprep.subr.mxu0 0.0
    %1843 = vmatpush1.msra.mxu0 0.0
    %1844 = vmatprep.subr.mxu0 0.0
    %1845 = vmatpush1.msra.mxu0 0.0
    %1846 = vmatprep.subr.mxu0 0.0
    %1847 = vmatpush1.msra.mxu0 0.0
    %1848 = vmatprep.subr.mxu0 0.0
    %1849 = vmatpush1.msra.mxu0 0.0
    %1850 = vmatprep.subr.mxu0 0.0
    %1851 = vmatpush1.msra.mxu0 0.0
    %1852 = vmatprep.subr.mxu0 0.0
    %1853 = vmatpush1.msra.mxu0 0.0
    %1854 = vmatprep.subr.mxu0 0.0
    %1855 = vmatpush1.msra.mxu0 0.0
    %1856 = vmatprep.subr.mxu0 0.0
    %1857 = vmatpush1.msra.mxu0 0.0
    %1858 = vmatprep.subr.mxu0 0.0
    %1859 = vmatpush1.msra.mxu0 0.0
    %1860 = vmatprep.subr.mxu0 0.0
    %1861 = vmatpush1.msra.mxu0 0.0
    %1862 = vmatprep.subr.mxu0 0.0
    %1863 = vmatpush1.msra.mxu0 0.0
    %1864 = vmatprep.subr.mxu0 0.0
    %1865 = vmatpush1.msra.mxu0 0.0
    %1866 = vmatprep.subr.mxu0 0.0
    %1867 = vmatpush1.msra.mxu0 0.0
    %1868 = vmatprep.subr.mxu0 0.0
    %1869 = vmatpush1.msra.mxu0 0.0
    %1870 = vmatprep.subr.mxu0 0.0
    %1871 = vmatpush1.msra.mxu0 0.0
    %1872 = vmatprep.subr.mxu0 0.0
    %1873 = vmatpush1.msra.mxu0 0.0
    %1874 = vmatprep.subr.mxu0 0.0
    %1875 = vmatpush1.msra.mxu0 0.0
    %1876 = vmatprep.subr.mxu0 0.0
    %1877 = vmatpush1.msra.mxu0 0.0
    %1878 = vmatprep.subr.mxu0 0.0
    %1879 = vmatpush1.msra.mxu0 0.0
    %1880 = vmatprep.subr.mxu0 0.0
    %1881 = vmatpush1.msra.mxu0 0.0
    %1882 = vmatprep.subr.mxu0 0.0
    %1883 = vmatpush1.msra.mxu0 0.0
    %1884 = vmatprep.subr.mxu0 0.0
    %1885 = vmatpush1.msra.mxu0 0.0
    %1886 = vmatprep.subr.mxu0 0.0
    %1887 = vmatpush1.msra.mxu0 0.0
    %1888 = vmatprep.subr.mxu0 0.0
    %1889 = vmatpush1.msra.mxu0 0.0
    %1890 = vmatprep.subr.mxu0 0.0
    %1891 = vmatpush1.msra.mxu0 0.0
    %1892 = vmatprep.subr.mxu0 0.0
    %1893 = vmatpush1.msra.mxu0 0.0
    %1894 = vmatprep.mubr.f32.mxu0 0.0
    %1895 = vmatmul.mubr.f32.gmra.mrb[0].mxu0 %v1828
    %v1896 = vpop.f32.mrb[0].mxu0
    %v1897 = vadd.f32 %v1826, %v1896
    %v1898 = vpop.f32.mrb[0].mxu0
    %1899 = vdwg.mxu0
    %1901 = vrot.lane.b32.xlu0 %v1569, 96
    %v1902 = vpop.permute.xlu0 %1901
    %v1904 = vadd.f32 %v1897, %v1902
    %v1905 = vxor.u32 %v1904, 2147483648
    %v1906 = vmul.f32 %v1905, 1.442695
    %v1907 = vpow.pop %v1906
    %v1908 = vadd.f32 %v1907, 1.0
    %v1909 = vrcp.pop %v1908
    %v1910 = vmul.f32 1.0, %v1909
    %1911 = vrot.lane.b32.xlu0 %v1569, 32
    %v1912 = vpop.permute.xlu0 %1911
    %v1914 = vmul.f32 %v1910, %v1912
    %1916 = vrot.lane.b32.xlu0 %v1914, 64
    %v1917 = vpop.permute.xlu0 %1916
    %v1919 = vadd.f32 %v1897, %v1917
    %v1920 = vtanh.pop %v1919
    %v1921 = vsub.f32 1.0, %v1910
    %1923 = vrot.lane.b32.xlu0 %v1920, 96
    %v1924 = vpop.permute.xlu0 %1923
    %v1926 = vmul.f32 %v1921, %v1924
    %v1927 = vmul.f32 %v1910, %v1490
    %v1928 = vadd.f32 %v1926, %v1927
    %1930 = vrot.lane.b32.xlu0 %v1928, 96
    %v1931 = vpop.permute.xlu0 %1930
    %s1933 = scalar_lea.vmem [#allocation2], 24
    %1934 = vst.msk [vmem:[%s1933] sm:$0xff] %vm155, %v1931
    %v1935 = vsel %vm155, %v1931, 0
    %1937 = vmatprep.subr.mxu0 0.0
    %1938 = vmatpush1.msra.mxu0 %v134
    %1939 = vmatprep.subr.mxu0 0.0
    %1940 = vmatpush1.msra.mxu0 %v135
    %1941 = vmatprep.subr.mxu0 0.0
    %1942 = vmatpush1.msra.mxu0 %v136
    %1943 = vmatprep.subr.mxu0 0.0
    %1944 = vmatpush1.msra.mxu0 %v137
    %1945 = vmatprep.subr.mxu0 0.0
    %1946 = vmatpush1.msra.mxu0 0.0
    %1947 = vmatprep.subr.mxu0 0.0
    %1948 = vmatpush1.msra.mxu0 0.0
    %1949 = vmatprep.subr.mxu0 0.0
    %1950 = vmatpush1.msra.mxu0 0.0
    %1951 = vmatprep.subr.mxu0 0.0
    %1952 = vmatpush1.msra.mxu0 0.0
    %1953 = vmatprep.subr.mxu0 0.0
    %1954 = vmatpush1.msra.mxu0 0.0
    %1955 = vmatprep.subr.mxu0 0.0
    %1956 = vmatpush1.msra.mxu0 0.0
    %1957 = vmatprep.subr.mxu0 0.0
    %1958 = vmatpush1.msra.mxu0 0.0
    %1959 = vmatprep.subr.mxu0 0.0
    %1960 = vmatpush1.msra.mxu0 0.0
    %1961 = vmatprep.subr.mxu0 0.0
    %1962 = vmatpush1.msra.mxu0 0.0
    %1963 = vmatprep.subr.mxu0 0.0
    %1964 = vmatpush1.msra.mxu0 0.0
    %1965 = vmatprep.subr.mxu0 0.0
    %1966 = vmatpush1.msra.mxu0 0.0
    %1967 = vmatprep.subr.mxu0 0.0
    %1968 = vmatpush1.msra.mxu0 0.0
    %1969 = vmatprep.subr.mxu0 0.0
    %1970 = vmatpush1.msra.mxu0 0.0
    %1971 = vmatprep.subr.mxu0 0.0
    %1972 = vmatpush1.msra.mxu0 0.0
    %1973 = vmatprep.subr.mxu0 0.0
    %1974 = vmatpush1.msra.mxu0 0.0
    %1975 = vmatprep.subr.mxu0 0.0
    %1976 = vmatpush1.msra.mxu0 0.0
    %1977 = vmatprep.subr.mxu0 0.0
    %1978 = vmatpush1.msra.mxu0 0.0
    %1979 = vmatprep.subr.mxu0 0.0
    %1980 = vmatpush1.msra.mxu0 0.0
    %1981 = vmatprep.subr.mxu0 0.0
    %1982 = vmatpush1.msra.mxu0 0.0
    %1983 = vmatprep.subr.mxu0 0.0
    %1984 = vmatpush1.msra.mxu0 0.0
    %1985 = vmatprep.subr.mxu0 0.0
    %1986 = vmatpush1.msra.mxu0 0.0
    %1987 = vmatprep.subr.mxu0 0.0
    %1988 = vmatpush1.msra.mxu0 0.0
    %1989 = vmatprep.subr.mxu0 0.0
    %1990 = vmatpush1.msra.mxu0 0.0
    %1991 = vmatprep.subr.mxu0 0.0
    %1992 = vmatpush1.msra.mxu0 0.0
    %1993 = vmatprep.subr.mxu0 0.0
    %1994 = vmatpush1.msra.mxu0 0.0
    %1995 = vmatprep.subr.mxu0 0.0
    %1996 = vmatpush1.msra.mxu0 0.0
    %1997 = vmatprep.subr.mxu0 0.0
    %1998 = vmatpush1.msra.mxu0 0.0
    %1999 = vmatprep.subr.mxu0 0.0
    %2000 = vmatpush1.msra.mxu0 0.0
    %2001 = vmatprep.mubr.f32.mxu0 0.0
    %2002 = vmatmul.mubr.f32.gmra.mrb[0].mxu0 %v1935
    %v2003 = vpop.f32.mrb[0].mxu0
    %v2004 = vadd.f32 0.0, %v2003
    %v2005 = vpop.f32.mrb[0].mxu0
    %2006 = vdwg.mxu0
    %v2007 = vadd.f32 %v2004, %v235
    %v2008 = vld [vmem:[#allocation6] sm:$0xff]
    %v2009 = vld [vmem:[#allocation6 + $0x8] sm:$0xff]
    %v2010 = vld [vmem:[#allocation6 + $0x10] sm:$0xff]
    %v2011 = vld [vmem:[#allocation6 + $0x18] sm:$0xff]
    %v2012 = vld [vmem:[#allocation6 + $0x20] sm:$0xff]
    %v2013 = vld [vmem:[#allocation6 + $0x28] sm:$0xff]
    %v2014 = vld [vmem:[#allocation6 + $0x30] sm:$0xff]
    %v2015 = vld [vmem:[#allocation6 + $0x38] sm:$0xff]
    %v2016 = vld [vmem:[#allocation6 + $0x40] sm:$0xff]
    %v2017 = vld [vmem:[#allocation6 + $0x48] sm:$0xff]
    %v2018 = vadd.f32 %v2004, %v2008
    %v2019 = vadd.f32 %v2004, %v2009
    %v2020 = vadd.f32 %v2004, %v2010
    %v2021 = vadd.f32 %v2004, %v2011
    %v2022 = vadd.f32 %v2004, %v2012
    %v2023 = vadd.f32 %v2004, %v2013
    %v2024 = vadd.f32 %v2004, %v2014
    %v2025 = vadd.f32 %v2004, %v2015
    %v2026 = vadd.f32 %v2004, %v2016
    %v2027 = vadd.f32 %v2004, %v2017
    %v2028 = vtanh.pop %v2018
    %v2029 = vtanh.pop %v2019
    %v2030 = vtanh.pop %v2020
    %v2031 = vtanh.pop %v2021
    %v2032 = vtanh.pop %v2022
    %v2033 = vtanh.pop %v2023
    %v2034 = vtanh.pop %v2024
    %v2035 = vtanh.pop %v2025
    %v2036 = vtanh.pop %v2026
    %v2037 = vtanh.pop %v2027
    %v2038 = vmul.f32 %v2028, %v272
    %v2039 = vmul.f32 %v2029, %v272
    %v2040 = vmul.f32 %v2030, %v272
    %v2041 = vmul.f32 %v2031, %v272
    %v2042 = vmul.f32 %v2032, %v272
    %v2043 = vmul.f32 %v2033, %v272
    %v2044 = vmul.f32 %v2034, %v272
    %v2045 = vmul.f32 %v2035, %v272
    %v2046 = vmul.f32 %v2036, %v272
    %v2047 = vmul.f32 %v2037, %v272
    %v2048 = vsel %vm155, %v2038, 0.0
    %2049 = vadd.xlane.f32.xlu0 %v2048
    %v2050 = vpop.xlane.xlu0 %2049
    %v2051 = vsel %vm155, %v2039, 0.0
    %2052 = vadd.xlane.f32.xlu0 %v2051
    %v2053 = vpop.xlane.xlu0 %2052
    %v2054 = vsel %vm155, %v2040, 0.0
    %2055 = vadd.xlane.f32.xlu0 %v2054
    %v2056 = vpop.xlane.xlu0 %2055
    %v2057 = vsel %vm155, %v2041, 0.0
    %2058 = vadd.xlane.f32.xlu0 %v2057
    %v2059 = vpop.xlane.xlu0 %2058
    %v2060 = vsel %vm155, %v2042, 0.0
    %2061 = vadd.xlane.f32.xlu0 %v2060
    %v2062 = vpop.xlane.xlu0 %2061
    %v2063 = vsel %vm155, %v2043, 0.0
    %2064 = vadd.xlane.f32.xlu0 %v2063
    %v2065 = vpop.xlane.xlu0 %2064
    %v2066 = vsel %vm155, %v2044, 0.0
    %2067 = vadd.xlane.f32.xlu0 %v2066
    %v2068 = vpop.xlane.xlu0 %2067
    %v2069 = vsel %vm155, %v2045, 0.0
    %2070 = vadd.xlane.f32.xlu0 %v2069
    %v2071 = vpop.xlane.xlu0 %2070
    %v2072 = vsel %vm155, %v2046, 0.0
    %2073 = vadd.xlane.f32.xlu0 %v2072
    %v2074 = vpop.xlane.xlu0 %2073
    %v2075 = vsel %vm155, %v2047, 0.0
    %2076 = vadd.xlane.f32.xlu0 %v2075
    %v2077 = vpop.xlane.xlu0 %2076
    %v2088 = vlaneseq
    %v2089 = vshrl.u32 %v2088, 7
    %v2090 = vsub.s32 %v325, %v2089
    %v2091 = vrot.slane %v2050, %v2090
    %v2092 = vlaneseq
    %v2093 = vshrl.u32 %v2092, 7
    %v2094 = vsub.s32 %v325, %v2093
    %v2095 = vrot.slane %v2053, %v2094
    %v2096 = vlaneseq
    %v2097 = vshrl.u32 %v2096, 7
    %v2098 = vsub.s32 %v325, %v2097
    %v2099 = vrot.slane %v2056, %v2098
    %v2100 = vlaneseq
    %v2101 = vshrl.u32 %v2100, 7
    %v2102 = vsub.s32 %v325, %v2101
    %v2103 = vrot.slane %v2059, %v2102
    %v2104 = vlaneseq
    %v2105 = vshrl.u32 %v2104, 7
    %v2106 = vsub.s32 %v325, %v2105
    %v2107 = vrot.slane %v2062, %v2106
    %v2108 = vlaneseq
    %v2109 = vshrl.u32 %v2108, 7
    %v2110 = vsub.s32 %v325, %v2109
    %v2111 = vrot.slane %v2065, %v2110
    %v2112 = vlaneseq
    %v2113 = vshrl.u32 %v2112, 7
    %v2114 = vsub.s32 %v325, %v2113
    %v2115 = vrot.slane %v2068, %v2114
    %v2116 = vlaneseq
    %v2117 = vshrl.u32 %v2116, 7
    %v2118 = vsub.s32 %v325, %v2117
    %v2119 = vrot.slane %v2071, %v2118
    %v2120 = vlaneseq
    %v2121 = vshrl.u32 %v2120, 7
    %v2122 = vsub.s32 %v325, %v2121
    %v2123 = vrot.slane %v2074, %v2122
    %v2124 = vlaneseq
    %v2125 = vshrl.u32 %v2124, 7
    %v2126 = vsub.s32 %v325, %v2125
    %v2127 = vrot.slane %v2077, %v2126
    %v2128 = vsel %vm366, %v2095, %v2091
    %v2129 = vsel %vm368, %v2099, %v2128
    %v2130 = vsel %vm370, %v2103, %v2129
    %v2131 = vsel %vm372, %v2107, %v2130
    %v2132 = vsel %vm374, %v2111, %v2131
    %v2133 = vsel %vm376, %v2115, %v2132
    %v2134 = vsel %vm378, %v2119, %v2133
    %v2135 = vsel %vm366, %v2127, %v2123
    %v2138 = vsel %vm152, %v2134, -1000000.0
    %v2139 = vsel %vm153, %v2135, -1000000.0
    %v2140 = vmul.f32 %v2138, 1.442695
    %v2141 = vpow.pop %v2140
    %v2142 = vmul.f32 %v2139, 1.442695
    %v2143 = vpow.pop %v2142
    %s2144 = scalar_lea.vmem %s12, 64
    %2145 = vst.msk [vmem:[%s2144] sm:$0xff] %vm389, %v2141
    %2146 = vst.msk [vmem:[%s2144 + $0x8] sm:$0x3] %vm391, %v2143
    %v2147 = vlaneseq
    %v2148 = vshrl.u32 %v2147, 7
    %v2149 = vsub.s32 0, %v2148
    %v2150 = vrot.slane %v2141, %v2149
    %2152 = vbcast.lane.b32.xlu0 %v2150, 256
    %v2153 = vpop.permute.xlu0 %2152
    %v2154 = vlaneseq
    %v2155 = vshrl.u32 %v2154, 7
    %v2156 = vsub.s32 1, %v2155
    %v2157 = vrot.slane %v2141, %v2156
    %2159 = vbcast.lane.b32.xlu0 %v2157, 256
    %v2160 = vpop.permute.xlu0 %2159
    %v2161 = vlaneseq
    %v2162 = vshrl.u32 %v2161, 7
    %v2163 = vsub.s32 2, %v2162
    %v2164 = vrot.slane %v2141, %v2163
    %2166 = vbcast.lane.b32.xlu0 %v2164, 256
    %v2167 = vpop.permute.xlu0 %2166
    %v2168 = vlaneseq
    %v2169 = vshrl.u32 %v2168, 7
    %v2170 = vsub.s32 3, %v2169
    %v2171 = vrot.slane %v2141, %v2170
    %2173 = vbcast.lane.b32.xlu0 %v2171, 256
    %v2174 = vpop.permute.xlu0 %2173
    %v2175 = vlaneseq
    %v2176 = vshrl.u32 %v2175, 7
    %v2177 = vsub.s32 4, %v2176
    %v2178 = vrot.slane %v2141, %v2177
    %2180 = vbcast.lane.b32.xlu0 %v2178, 256
    %v2181 = vpop.permute.xlu0 %2180
    %v2182 = vlaneseq
    %v2183 = vshrl.u32 %v2182, 7
    %v2184 = vsub.s32 5, %v2183
    %v2185 = vrot.slane %v2141, %v2184
    %2187 = vbcast.lane.b32.xlu0 %v2185, 256
    %v2188 = vpop.permute.xlu0 %2187
    %v2189 = vlaneseq
    %v2190 = vshrl.u32 %v2189, 7
    %v2191 = vsub.s32 6, %v2190
    %v2192 = vrot.slane %v2141, %v2191
    %2194 = vbcast.lane.b32.xlu0 %v2192, 256
    %v2195 = vpop.permute.xlu0 %2194
    %v2196 = vlaneseq
    %v2197 = vshrl.u32 %v2196, 7
    %v2198 = vsub.s32 7, %v2197
    %v2199 = vrot.slane %v2141, %v2198
    %2201 = vbcast.lane.b32.xlu0 %v2199, 256
    %v2202 = vpop.permute.xlu0 %2201
    %v2203 = vlaneseq
    %v2204 = vshrl.u32 %v2203, 7
    %v2205 = vsub.s32 0, %v2204
    %v2206 = vrot.slane %v2143, %v2205
    %2208 = vbcast.lane.b32.xlu0 %v2206, 256
    %v2209 = vpop.permute.xlu0 %2208
    %v2210 = vlaneseq
    %v2211 = vshrl.u32 %v2210, 7
    %v2212 = vsub.s32 1, %v2211
    %v2213 = vrot.slane %v2143, %v2212
    %2215 = vbcast.lane.b32.xlu0 %v2213, 256
    %v2216 = vpop.permute.xlu0 %2215
    %v2217 = vld [vmem:[#allocation8] sm:$0xff]
    %v2218 = vld [vmem:[#allocation8 + $0x8] sm:$0xff]
    %v2219 = vld [vmem:[#allocation8 + $0x10] sm:$0xff]
    %v2220 = vld [vmem:[#allocation8 + $0x18] sm:$0xff]
    %v2221 = vld [vmem:[#allocation8 + $0x20] sm:$0xff]
    %v2222 = vld [vmem:[#allocation8 + $0x28] sm:$0xff]
    %v2223 = vld [vmem:[#allocation8 + $0x30] sm:$0xff]
    %v2224 = vld [vmem:[#allocation8 + $0x38] sm:$0xff]
    %v2225 = vld [vmem:[#allocation8 + $0x40] sm:$0xff]
    %v2226 = vld [vmem:[#allocation8 + $0x48] sm:$0xff]
    %v2227 = vmul.f32 %v2153, %v2217
    %v2228 = vmul.f32 %v2160, %v2218
    %v2229 = vmul.f32 %v2167, %v2219
    %v2230 = vmul.f32 %v2174, %v2220
    %v2231 = vmul.f32 %v2181, %v2221
    %v2232 = vmul.f32 %v2188, %v2222
    %v2233 = vmul.f32 %v2195, %v2223
    %v2234 = vmul.f32 %v2202, %v2224
    %v2235 = vmul.f32 %v2209, %v2225
    %v2236 = vmul.f32 %v2216, %v2226
    %v2237 = vsel %vm483, %v2227, 0.0
    %v2238 = vsel %vm483, %v2228, 0.0
    %v2239 = vadd.f32 %v2237, %v2238
    %v2240 = vsel %vm483, %v2229, 0.0
    %v2241 = vadd.f32 %v2239, %v2240
    %v2242 = vsel %vm483, %v2230, 0.0
    %v2243 = vadd.f32 %v2241, %v2242
    %v2244 = vsel %vm483, %v2231, 0.0
    %v2245 = vadd.f32 %v2243, %v2244
    %v2246 = vsel %vm483, %v2232, 0.0
    %v2247 = vadd.f32 %v2245, %v2246
    %v2248 = vsel %vm483, %v2233, 0.0
    %v2249 = vadd.f32 %v2247, %v2248
    %v2250 = vsel %vm483, %v2234, 0.0
    %v2251 = vadd.f32 %v2249, %v2250
    %v2252 = vsel %vm483, %v2235, 0.0
    %v2253 = vadd.f32 %v2251, %v2252
    %v2254 = vsel %vm483, %v2236, 0.0
    %v2255 = vadd.f32 %v2253, %v2254
    %v2256 = vrcp.pop %v2255
    %2258 = vset.pattern.permute.xlu0 32
    %2259 = vperm.xlu0 %2258, %v2256
    %v2260 = vpop.permute.xlu0 %2259
    %v2262 = vmul.f32 %v2255, %v2260
    %s2263 = scalar_lea.vmem [#allocation3], 32
    %v2264 = vld [vmem:[%s2263] sm:$0xff]
    %v2266 = vsel %vm155, %v2262, 0
    %2268 = vmatprep.subr.mxu0 0.0
    %2269 = vmatpush1.msra.mxu0 %v139
    %2270 = vmatprep.subr.mxu0 0.0
    %2271 = vmatpush1.msra.mxu0 %v140
    %2272 = vmatprep.subr.mxu0 0.0
    %2273 = vmatpush1.msra.mxu0 %v141
    %2274 = vmatprep.subr.mxu0 0.0
    %2275 = vmatpush1.msra.mxu0 %v142
    %2276 = vmatprep.subr.mxu0 0.0
    %2277 = vmatpush1.msra.mxu0 0.0
    %2278 = vmatprep.subr.mxu0 0.0
    %2279 = vmatpush1.msra.mxu0 0.0
    %2280 = vmatprep.subr.mxu0 0.0
    %2281 = vmatpush1.msra.mxu0 0.0
    %2282 = vmatprep.subr.mxu0 0.0
    %2283 = vmatpush1.msra.mxu0 0.0
    %2284 = vmatprep.subr.mxu0 0.0
    %2285 = vmatpush1.msra.mxu0 0.0
    %2286 = vmatprep.subr.mxu0 0.0
    %2287 = vmatpush1.msra.mxu0 0.0
    %2288 = vmatprep.subr.mxu0 0.0
    %2289 = vmatpush1.msra.mxu0 0.0
    %2290 = vmatprep.subr.mxu0 0.0
    %2291 = vmatpush1.msra.mxu0 0.0
    %2292 = vmatprep.subr.mxu0 0.0
    %2293 = vmatpush1.msra.mxu0 0.0
    %2294 = vmatprep.subr.mxu0 0.0
    %2295 = vmatpush1.msra.mxu0 0.0
    %2296 = vmatprep.subr.mxu0 0.0
    %2297 = vmatpush1.msra.mxu0 0.0
    %2298 = vmatprep.subr.mxu0 0.0
    %2299 = vmatpush1.msra.mxu0 0.0
    %2300 = vmatprep.subr.mxu0 0.0
    %2301 = vmatpush1.msra.mxu0 0.0
    %2302 = vmatprep.subr.mxu0 0.0
    %2303 = vmatpush1.msra.mxu0 0.0
    %2304 = vmatprep.subr.mxu0 0.0
    %2305 = vmatpush1.msra.mxu0 0.0
    %2306 = vmatprep.subr.mxu0 0.0
    %2307 = vmatpush1.msra.mxu0 0.0
    %2308 = vmatprep.subr.mxu0 0.0
    %2309 = vmatpush1.msra.mxu0 0.0
    %2310 = vmatprep.subr.mxu0 0.0
    %2311 = vmatpush1.msra.mxu0 0.0
    %2312 = vmatprep.subr.mxu0 0.0
    %2313 = vmatpush1.msra.mxu0 0.0
    %2314 = vmatprep.subr.mxu0 0.0
    %2315 = vmatpush1.msra.mxu0 0.0
    %2316 = vmatprep.subr.mxu0 0.0
    %2317 = vmatpush1.msra.mxu0 0.0
    %2318 = vmatprep.subr.mxu0 0.0
    %2319 = vmatpush1.msra.mxu0 0.0
    %2320 = vmatprep.subr.mxu0 0.0
    %2321 = vmatpush1.msra.mxu0 0.0
    %2322 = vmatprep.subr.mxu0 0.0
    %2323 = vmatpush1.msra.mxu0 0.0
    %2324 = vmatprep.subr.mxu0 0.0
    %2325 = vmatpush1.msra.mxu0 0.0
    %2326 = vmatprep.subr.mxu0 0.0
    %2327 = vmatpush1.msra.mxu0 0.0
    %2328 = vmatprep.subr.mxu0 0.0
    %2329 = vmatpush1.msra.mxu0 0.0
    %2330 = vmatprep.subr.mxu0 0.0
    %2331 = vmatpush1.msra.mxu0 0.0
    %2332 = vmatprep.mubr.f32.mxu0 0.0
    %2333 = vmatmul.mubr.f32.gmra.mrb[0].mxu0 %v2266
    %v2334 = vpop.f32.mrb[0].mxu0
    %v2335 = vadd.f32 %v2264, %v2334
    %v2336 = vpop.f32.mrb[0].mxu0
    %2337 = vdwg.mxu0
    %2339 = vrot.lane.b32.xlu0 %v2007, 96
    %v2340 = vpop.permute.xlu0 %2339
    %v2342 = vadd.f32 %v2335, %v2340
    %v2343 = vxor.u32 %v2342, 2147483648
    %v2344 = vmul.f32 %v2343, 1.442695
    %v2345 = vpow.pop %v2344
    %v2346 = vadd.f32 %v2345, 1.0
    %v2347 = vrcp.pop %v2346
    %v2348 = vmul.f32 1.0, %v2347
    %2349 = vrot.lane.b32.xlu0 %v2007, 32
    %v2350 = vpop.permute.xlu0 %2349
    %v2352 = vmul.f32 %v2348, %v2350
    %2354 = vrot.lane.b32.xlu0 %v2352, 64
    %v2355 = vpop.permute.xlu0 %2354
    %v2357 = vadd.f32 %v2335, %v2355
    %v2358 = vtanh.pop %v2357
    %v2359 = vsub.f32 1.0, %v2348
    %2361 = vrot.lane.b32.xlu0 %v2358, 96
    %v2362 = vpop.permute.xlu0 %2361
    %v2364 = vmul.f32 %v2359, %v2362
    %v2365 = vmul.f32 %v2348, %v1928
    %v2366 = vadd.f32 %v2364, %v2365
    %2368 = vrot.lane.b32.xlu0 %v2366, 96
    %v2369 = vpop.permute.xlu0 %2368
    %s2371 = scalar_lea.vmem [#allocation2], 32
    %2372 = vst.msk [vmem:[%s2371] sm:$0xff] %vm155, %v2369
    %v2373 = vsel %vm155, %v2369, 0
    %2375 = vmatprep.subr.mxu0 0.0
    %2376 = vmatpush1.msra.mxu0 %v134
    %2377 = vmatprep.subr.mxu0 0.0
    %2378 = vmatpush1.msra.mxu0 %v135
    %2379 = vmatprep.subr.mxu0 0.0
    %2380 = vmatpush1.msra.mxu0 %v136
    %2381 = vmatprep.subr.mxu0 0.0
    %2382 = vmatpush1.msra.mxu0 %v137
    %2383 = vmatprep.subr.mxu0 0.0
    %2384 = vmatpush1.msra.mxu0 0.0
    %2385 = vmatprep.subr.mxu0 0.0
    %2386 = vmatpush1.msra.mxu0 0.0
    %2387 = vmatprep.subr.mxu0 0.0
    %2388 = vmatpush1.msra.mxu0 0.0
    %2389 = vmatprep.subr.mxu0 0.0
    %2390 = vmatpush1.msra.mxu0 0.0
    %2391 = vmatprep.subr.mxu0 0.0
    %2392 = vmatpush1.msra.mxu0 0.0
    %2393 = vmatprep.subr.mxu0 0.0
    %2394 = vmatpush1.msra.mxu0 0.0
    %2395 = vmatprep.subr.mxu0 0.0
    %2396 = vmatpush1.msra.mxu0 0.0
    %2397 = vmatprep.subr.mxu0 0.0
    %2398 = vmatpush1.msra.mxu0 0.0
    %2399 = vmatprep.subr.mxu0 0.0
    %2400 = vmatpush1.msra.mxu0 0.0
    %2401 = vmatprep.subr.mxu0 0.0
    %2402 = vmatpush1.msra.mxu0 0.0
    %2403 = vmatprep.subr.mxu0 0.0
    %2404 = vmatpush1.msra.mxu0 0.0
    %2405 = vmatprep.subr.mxu0 0.0
    %2406 = vmatpush1.msra.mxu0 0.0
    %2407 = vmatprep.subr.mxu0 0.0
    %2408 = vmatpush1.msra.mxu0 0.0
    %2409 = vmatprep.subr.mxu0 0.0
    %2410 = vmatpush1.msra.mxu0 0.0
    %2411 = vmatprep.subr.mxu0 0.0
    %2412 = vmatpush1.msra.mxu0 0.0
    %2413 = vmatprep.subr.mxu0 0.0
    %2414 = vmatpush1.msra.mxu0 0.0
    %2415 = vmatprep.subr.mxu0 0.0
    %2416 = vmatpush1.msra.mxu0 0.0
    %2417 = vmatprep.subr.mxu0 0.0
    %2418 = vmatpush1.msra.mxu0 0.0
    %2419 = vmatprep.subr.mxu0 0.0
    %2420 = vmatpush1.msra.mxu0 0.0
    %2421 = vmatprep.subr.mxu0 0.0
    %2422 = vmatpush1.msra.mxu0 0.0
    %2423 = vmatprep.subr.mxu0 0.0
    %2424 = vmatpush1.msra.mxu0 0.0
    %2425 = vmatprep.subr.mxu0 0.0
    %2426 = vmatpush1.msra.mxu0 0.0
    %2427 = vmatprep.subr.mxu0 0.0
    %2428 = vmatpush1.msra.mxu0 0.0
    %2429 = vmatprep.subr.mxu0 0.0
    %2430 = vmatpush1.msra.mxu0 0.0
    %2431 = vmatprep.subr.mxu0 0.0
    %2432 = vmatpush1.msra.mxu0 0.0
    %2433 = vmatprep.subr.mxu0 0.0
    %2434 = vmatpush1.msra.mxu0 0.0
    %2435 = vmatprep.subr.mxu0 0.0
    %2436 = vmatpush1.msra.mxu0 0.0
    %2437 = vmatprep.subr.mxu0 0.0
    %2438 = vmatpush1.msra.mxu0 0.0
    %2439 = vmatprep.mubr.f32.mxu0 0.0
    %2440 = vmatmul.mubr.f32.gmra.mrb[0].mxu0 %v2373
    %v2441 = vpop.f32.mrb[0].mxu0
    %v2442 = vadd.f32 0.0, %v2441
    %v2443 = vpop.f32.mrb[0].mxu0
    %2444 = vdwg.mxu0
    %v2445 = vadd.f32 %v2442, %v235
    %v2446 = vld [vmem:[#allocation6] sm:$0xff]
    %v2447 = vld [vmem:[#allocation6 + $0x8] sm:$0xff]
    %v2448 = vld [vmem:[#allocation6 + $0x10] sm:$0xff]
    %v2449 = vld [vmem:[#allocation6 + $0x18] sm:$0xff]
    %v2450 = vld [vmem:[#allocation6 + $0x20] sm:$0xff]
    %v2451 = vld [vmem:[#allocation6 + $0x28] sm:$0xff]
    %v2452 = vld [vmem:[#allocation6 + $0x30] sm:$0xff]
    %v2453 = vld [vmem:[#allocation6 + $0x38] sm:$0xff]
    %v2454 = vld [vmem:[#allocation6 + $0x40] sm:$0xff]
    %v2455 = vld [vmem:[#allocation6 + $0x48] sm:$0xff]
    %v2456 = vadd.f32 %v2442, %v2446
    %v2457 = vadd.f32 %v2442, %v2447
    %v2458 = vadd.f32 %v2442, %v2448
    %v2459 = vadd.f32 %v2442, %v2449
    %v2460 = vadd.f32 %v2442, %v2450
    %v2461 = vadd.f32 %v2442, %v2451
    %v2462 = vadd.f32 %v2442, %v2452
    %v2463 = vadd.f32 %v2442, %v2453
    %v2464 = vadd.f32 %v2442, %v2454
    %v2465 = vadd.f32 %v2442, %v2455
    %v2466 = vtanh.pop %v2456
    %v2467 = vtanh.pop %v2457
    %v2468 = vtanh.pop %v2458
    %v2469 = vtanh.pop %v2459
    %v2470 = vtanh.pop %v2460
    %v2471 = vtanh.pop %v2461
    %v2472 = vtanh.pop %v2462
    %v2473 = vtanh.pop %v2463
    %v2474 = vtanh.pop %v2464
    %v2475 = vtanh.pop %v2465
    %v2476 = vmul.f32 %v2466, %v272
    %v2477 = vmul.f32 %v2467, %v272
    %v2478 = vmul.f32 %v2468, %v272
    %v2479 = vmul.f32 %v2469, %v272
    %v2480 = vmul.f32 %v2470, %v272
    %v2481 = vmul.f32 %v2471, %v272
    %v2482 = vmul.f32 %v2472, %v272
    %v2483 = vmul.f32 %v2473, %v272
    %v2484 = vmul.f32 %v2474, %v272
    %v2485 = vmul.f32 %v2475, %v272
    %v2486 = vsel %vm155, %v2476, 0.0
    %2487 = vadd.xlane.f32.xlu0 %v2486
    %v2488 = vpop.xlane.xlu0 %2487
    %v2489 = vsel %vm155, %v2477, 0.0
    %2490 = vadd.xlane.f32.xlu0 %v2489
    %v2491 = vpop.xlane.xlu0 %2490
    %v2492 = vsel %vm155, %v2478, 0.0
    %2493 = vadd.xlane.f32.xlu0 %v2492
    %v2494 = vpop.xlane.xlu0 %2493
    %v2495 = vsel %vm155, %v2479, 0.0
    %2496 = vadd.xlane.f32.xlu0 %v2495
    %v2497 = vpop.xlane.xlu0 %2496
    %v2498 = vsel %vm155, %v2480, 0.0
    %2499 = vadd.xlane.f32.xlu0 %v2498
    %v2500 = vpop.xlane.xlu0 %2499
    %v2501 = vsel %vm155, %v2481, 0.0
    %2502 = vadd.xlane.f32.xlu0 %v2501
    %v2503 = vpop.xlane.xlu0 %2502
    %v2504 = vsel %vm155, %v2482, 0.0
    %2505 = vadd.xlane.f32.xlu0 %v2504
    %v2506 = vpop.xlane.xlu0 %2505
    %v2507 = vsel %vm155, %v2483, 0.0
    %2508 = vadd.xlane.f32.xlu0 %v2507
    %v2509 = vpop.xlane.xlu0 %2508
    %v2510 = vsel %vm155, %v2484, 0.0
    %2511 = vadd.xlane.f32.xlu0 %v2510
    %v2512 = vpop.xlane.xlu0 %2511
    %v2513 = vsel %vm155, %v2485, 0.0
    %2514 = vadd.xlane.f32.xlu0 %v2513
    %v2515 = vpop.xlane.xlu0 %2514
    %v2526 = vlaneseq
    %v2527 = vshrl.u32 %v2526, 7
    %v2528 = vsub.s32 %v325, %v2527
    %v2529 = vrot.slane %v2488, %v2528
    %v2530 = vlaneseq
    %v2531 = vshrl.u32 %v2530, 7
    %v2532 = vsub.s32 %v325, %v2531
    %v2533 = vrot.slane %v2491, %v2532
    %v2534 = vlaneseq
    %v2535 = vshrl.u32 %v2534, 7
    %v2536 = vsub.s32 %v325, %v2535
    %v2537 = vrot.slane %v2494, %v2536
    %v2538 = vlaneseq
    %v2539 = vshrl.u32 %v2538, 7
    %v2540 = vsub.s32 %v325, %v2539
    %v2541 = vrot.slane %v2497, %v2540
    %v2542 = vlaneseq
    %v2543 = vshrl.u32 %v2542, 7
    %v2544 = vsub.s32 %v325, %v2543
    %v2545 = vrot.slane %v2500, %v2544
    %v2546 = vlaneseq
    %v2547 = vshrl.u32 %v2546, 7
    %v2548 = vsub.s32 %v325, %v2547
    %v2549 = vrot.slane %v2503, %v2548
    %v2550 = vlaneseq
    %v2551 = vshrl.u32 %v2550, 7
    %v2552 = vsub.s32 %v325, %v2551
    %v2553 = vrot.slane %v2506, %v2552
    %v2554 = vlaneseq
    %v2555 = vshrl.u32 %v2554, 7
    %v2556 = vsub.s32 %v325, %v2555
    %v2557 = vrot.slane %v2509, %v2556
    %v2558 = vlaneseq
    %v2559 = vshrl.u32 %v2558, 7
    %v2560 = vsub.s32 %v325, %v2559
    %v2561 = vrot.slane %v2512, %v2560
    %v2562 = vlaneseq
    %v2563 = vshrl.u32 %v2562, 7
    %v2564 = vsub.s32 %v325, %v2563
    %v2565 = vrot.slane %v2515, %v2564
    %v2566 = vsel %vm366, %v2533, %v2529
    %v2567 = vsel %vm368, %v2537, %v2566
    %v2568 = vsel %vm370, %v2541, %v2567
    %v2569 = vsel %vm372, %v2545, %v2568
    %v2570 = vsel %vm374, %v2549, %v2569
    %v2571 = vsel %vm376, %v2553, %v2570
    %v2572 = vsel %vm378, %v2557, %v2571
    %v2573 = vsel %vm366, %v2565, %v2561
    %v2576 = vsel %vm152, %v2572, -1000000.0
    %v2577 = vsel %vm153, %v2573, -1000000.0
    %v2578 = vmul.f32 %v2576, 1.442695
    %v2579 = vpow.pop %v2578
    %v2580 = vmul.f32 %v2577, 1.442695
    %v2581 = vpow.pop %v2580
    %s2582 = scalar_lea.vmem %s12, 80
    %2583 = vst.msk [vmem:[%s2582] sm:$0xff] %vm389, %v2579
    %2584 = vst.msk [vmem:[%s2582 + $0x8] sm:$0x3] %vm391, %v2581
    %v2585 = vlaneseq
    %v2586 = vshrl.u32 %v2585, 7
    %v2587 = vsub.s32 0, %v2586
    %v2588 = vrot.slane %v2579, %v2587
    %2590 = vbcast.lane.b32.xlu0 %v2588, 256
    %v2591 = vpop.permute.xlu0 %2590
    %v2592 = vlaneseq
    %v2593 = vshrl.u32 %v2592, 7
    %v2594 = vsub.s32 1, %v2593
    %v2595 = vrot.slane %v2579, %v2594
    %2597 = vbcast.lane.b32.xlu0 %v2595, 256
    %v2598 = vpop.permute.xlu0 %2597
    %v2599 = vlaneseq
    %v2600 = vshrl.u32 %v2599, 7
    %v2601 = vsub.s32 2, %v2600
    %v2602 = vrot.slane %v2579, %v2601
    %2604 = vbcast.lane.b32.xlu0 %v2602, 256
    %v2605 = vpop.permute.xlu0 %2604
    %v2606 = vlaneseq
    %v2607 = vshrl.u32 %v2606, 7
    %v2608 = vsub.s32 3, %v2607
    %v2609 = vrot.slane %v2579, %v2608
    %2611 = vbcast.lane.b32.xlu0 %v2609, 256
    %v2612 = vpop.permute.xlu0 %2611
    %v2613 = vlaneseq
    %v2614 = vshrl.u32 %v2613, 7
    %v2615 = vsub.s32 4, %v2614
    %v2616 = vrot.slane %v2579, %v2615
    %2618 = vbcast.lane.b32.xlu0 %v2616, 256
    %v2619 = vpop.permute.xlu0 %2618
    %v2620 = vlaneseq
    %v2621 = vshrl.u32 %v2620, 7
    %v2622 = vsub.s32 5, %v2621
    %v2623 = vrot.slane %v2579, %v2622
    %2625 = vbcast.lane.b32.xlu0 %v2623, 256
    %v2626 = vpop.permute.xlu0 %2625
    %v2627 = vlaneseq
    %v2628 = vshrl.u32 %v2627, 7
    %v2629 = vsub.s32 6, %v2628
    %v2630 = vrot.slane %v2579, %v2629
    %2632 = vbcast.lane.b32.xlu0 %v2630, 256
    %v2633 = vpop.permute.xlu0 %2632
    %v2634 = vlaneseq
    %v2635 = vshrl.u32 %v2634, 7
    %v2636 = vsub.s32 7, %v2635
    %v2637 = vrot.slane %v2579, %v2636
    %2639 = vbcast.lane.b32.xlu0 %v2637, 256
    %v2640 = vpop.permute.xlu0 %2639
    %v2641 = vlaneseq
    %v2642 = vshrl.u32 %v2641, 7
    %v2643 = vsub.s32 0, %v2642
    %v2644 = vrot.slane %v2581, %v2643
    %2646 = vbcast.lane.b32.xlu0 %v2644, 256
    %v2647 = vpop.permute.xlu0 %2646
    %v2648 = vlaneseq
    %v2649 = vshrl.u32 %v2648, 7
    %v2650 = vsub.s32 1, %v2649
    %v2651 = vrot.slane %v2581, %v2650
    %2653 = vbcast.lane.b32.xlu0 %v2651, 256
    %v2654 = vpop.permute.xlu0 %2653
    %v2655 = vld [vmem:[#allocation8] sm:$0xff]
    %v2656 = vld [vmem:[#allocation8 + $0x8] sm:$0xff]
    %v2657 = vld [vmem:[#allocation8 + $0x10] sm:$0xff]
    %v2658 = vld [vmem:[#allocation8 + $0x18] sm:$0xff]
    %v2659 = vld [vmem:[#allocation8 + $0x20] sm:$0xff]
    %v2660 = vld [vmem:[#allocation8 + $0x28] sm:$0xff]
    %v2661 = vld [vmem:[#allocation8 + $0x30] sm:$0xff]
    %v2662 = vld [vmem:[#allocation8 + $0x38] sm:$0xff]
    %v2663 = vld [vmem:[#allocation8 + $0x40] sm:$0xff]
    %v2664 = vld [vmem:[#allocation8 + $0x48] sm:$0xff]
    %v2665 = vmul.f32 %v2591, %v2655
    %v2666 = vmul.f32 %v2598, %v2656
    %v2667 = vmul.f32 %v2605, %v2657
    %v2668 = vmul.f32 %v2612, %v2658
    %v2669 = vmul.f32 %v2619, %v2659
    %v2670 = vmul.f32 %v2626, %v2660
    %v2671 = vmul.f32 %v2633, %v2661
    %v2672 = vmul.f32 %v2640, %v2662
    %v2673 = vmul.f32 %v2647, %v2663
    %v2674 = vmul.f32 %v2654, %v2664
    %v2675 = vsel %vm483, %v2665, 0.0
    %v2676 = vsel %vm483, %v2666, 0.0
    %v2677 = vadd.f32 %v2675, %v2676
    %v2678 = vsel %vm483, %v2667, 0.0
    %v2679 = vadd.f32 %v2677, %v2678
    %v2680 = vsel %vm483, %v2668, 0.0
    %v2681 = vadd.f32 %v2679, %v2680
    %v2682 = vsel %vm483, %v2669, 0.0
    %v2683 = vadd.f32 %v2681, %v2682
    %v2684 = vsel %vm483, %v2670, 0.0
    %v2685 = vadd.f32 %v2683, %v2684
    %v2686 = vsel %vm483, %v2671, 0.0
    %v2687 = vadd.f32 %v2685, %v2686
    %v2688 = vsel %vm483, %v2672, 0.0
    %v2689 = vadd.f32 %v2687, %v2688
    %v2690 = vsel %vm483, %v2673, 0.0
    %v2691 = vadd.f32 %v2689, %v2690
    %v2692 = vsel %vm483, %v2674, 0.0
    %v2693 = vadd.f32 %v2691, %v2692
    %v2694 = vrcp.pop %v2693
    %2696 = vset.pattern.permute.xlu0 32
    %2697 = vperm.xlu0 %2696, %v2694
    %v2698 = vpop.permute.xlu0 %2697
    %v2700 = vmul.f32 %v2693, %v2698
    %s2701 = scalar_lea.vmem [#allocation3], 40
    %v2702 = vld [vmem:[%s2701] sm:$0xff]
    %v2704 = vsel %vm155, %v2700, 0
    %2706 = vmatprep.subr.mxu0 0.0
    %2707 = vmatpush1.msra.mxu0 %v139
    %2708 = vmatprep.subr.mxu0 0.0
    %2709 = vmatpush1.msra.mxu0 %v140
    %2710 = vmatprep.subr.mxu0 0.0
    %2711 = vmatpush1.msra.mxu0 %v141
    %2712 = vmatprep.subr.mxu0 0.0
    %2713 = vmatpush1.msra.mxu0 %v142
    %2714 = vmatprep.subr.mxu0 0.0
    %2715 = vmatpush1.msra.mxu0 0.0
    %2716 = vmatprep.subr.mxu0 0.0
    %2717 = vmatpush1.msra.mxu0 0.0
    %2718 = vmatprep.subr.mxu0 0.0
    %2719 = vmatpush1.msra.mxu0 0.0
    %2720 = vmatprep.subr.mxu0 0.0
    %2721 = vmatpush1.msra.mxu0 0.0
    %2722 = vmatprep.subr.mxu0 0.0
    %2723 = vmatpush1.msra.mxu0 0.0
    %2724 = vmatprep.subr.mxu0 0.0
    %2725 = vmatpush1.msra.mxu0 0.0
    %2726 = vmatprep.subr.mxu0 0.0
    %2727 = vmatpush1.msra.mxu0 0.0
    %2728 = vmatprep.subr.mxu0 0.0
    %2729 = vmatpush1.msra.mxu0 0.0
    %2730 = vmatprep.subr.mxu0 0.0
    %2731 = vmatpush1.msra.mxu0 0.0
    %2732 = vmatprep.subr.mxu0 0.0
    %2733 = vmatpush1.msra.mxu0 0.0
    %2734 = vmatprep.subr.mxu0 0.0
    %2735 = vmatpush1.msra.mxu0 0.0
    %2736 = vmatprep.subr.mxu0 0.0
    %2737 = vmatpush1.msra.mxu0 0.0
    %2738 = vmatprep.subr.mxu0 0.0
    %2739 = vmatpush1.msra.mxu0 0.0
    %2740 = vmatprep.subr.mxu0 0.0
    %2741 = vmatpush1.msra.mxu0 0.0
    %2742 = vmatprep.subr.mxu0 0.0
    %2743 = vmatpush1.msra.mxu0 0.0
    %2744 = vmatprep.subr.mxu0 0.0
    %2745 = vmatpush1.msra.mxu0 0.0
    %2746 = vmatprep.subr.mxu0 0.0
    %2747 = vmatpush1.msra.mxu0 0.0
    %2748 = vmatprep.subr.mxu0 0.0
    %2749 = vmatpush1.msra.mxu0 0.0
    %2750 = vmatprep.subr.mxu0 0.0
    %2751 = vmatpush1.msra.mxu0 0.0
    %2752 = vmatprep.subr.mxu0 0.0
    %2753 = vmatpush1.msra.mxu0 0.0
    %2754 = vmatprep.subr.mxu0 0.0
    %2755 = vmatpush1.msra.mxu0 0.0
    %2756 = vmatprep.subr.mxu0 0.0
    %2757 = vmatpush1.msra.mxu0 0.0
    %2758 = vmatprep.subr.mxu0 0.0
    %2759 = vmatpush1.msra.mxu0 0.0
    %2760 = vmatprep.subr.mxu0 0.0
    %2761 = vmatpush1.msra.mxu0 0.0
    %2762 = vmatprep.subr.mxu0 0.0
    %2763 = vmatpush1.msra.mxu0 0.0
    %2764 = vmatprep.subr.mxu0 0.0
    %2765 = vmatpush1.msra.mxu0 0.0
    %2766 = vmatprep.subr.mxu0 0.0
    %2767 = vmatpush1.msra.mxu0 0.0
    %2768 = vmatprep.subr.mxu0 0.0
    %2769 = vmatpush1.msra.mxu0 0.0
    %2770 = vmatprep.mubr.f32.mxu0 0.0
    %2771 = vmatmul.mubr.f32.gmra.mrb[0].mxu0 %v2704
    %v2772 = vpop.f32.mrb[0].mxu0
    %v2773 = vadd.f32 %v2702, %v2772
    %v2774 = vpop.f32.mrb[0].mxu0
    %2775 = vdwg.mxu0
    %2777 = vrot.lane.b32.xlu0 %v2445, 96
    %v2778 = vpop.permute.xlu0 %2777
    %v2780 = vadd.f32 %v2773, %v2778
    %v2781 = vxor.u32 %v2780, 2147483648
    %v2782 = vmul.f32 %v2781, 1.442695
    %v2783 = vpow.pop %v2782
    %v2784 = vadd.f32 %v2783, 1.0
    %v2785 = vrcp.pop %v2784
    %v2786 = vmul.f32 1.0, %v2785
    %2787 = vrot.lane.b32.xlu0 %v2445, 32
    %v2788 = vpop.permute.xlu0 %2787
    %v2790 = vmul.f32 %v2786, %v2788
    %2792 = vrot.lane.b32.xlu0 %v2790, 64
    %v2793 = vpop.permute.xlu0 %2792
    %v2795 = vadd.f32 %v2773, %v2793
    %v2796 = vtanh.pop %v2795
    %v2797 = vsub.f32 1.0, %v2786
    %2799 = vrot.lane.b32.xlu0 %v2796, 96
    %v2800 = vpop.permute.xlu0 %2799
    %v2802 = vmul.f32 %v2797, %v2800
    %v2803 = vmul.f32 %v2786, %v2366
    %v2804 = vadd.f32 %v2802, %v2803
    %2806 = vrot.lane.b32.xlu0 %v2804, 96
    %v2807 = vpop.permute.xlu0 %2806
    %s2809 = scalar_lea.vmem [#allocation2], 40
    %2810 = vst.msk [vmem:[%s2809] sm:$0xff] %vm155, %v2807
    %2811 = vst.msk [vmem:[#allocation16] sm:$0xff] %vm155, %v2807
    %v2812 = vld [vmem:[#allocation2] sm:$0xff]
    %v2813 = vld [vmem:[#allocation2 + $0x8] sm:$0xff]
    %v2814 = vld [vmem:[#allocation2 + $0x10] sm:$0xff]
    %v2815 = vld [vmem:[#allocation2 + $0x18] sm:$0xff]
    %v2816 = vld [vmem:[#allocation2 + $0x20] sm:$0xff]
    %v2817 = vld [vmem:[#allocation2 + $0x28] sm:$0xff]
    %v2818 = vld [vmem:[%s9] sm:$0xff]
    %v2819 = vld [vmem:[%s9 + $0x8] sm:$0xff]
    %v2820 = vld [vmem:[%s9 + $0x10] sm:$0xff]
    %v2821 = vld [vmem:[%s9 + $0x18] sm:$0xff]
    %v2822 = vld [vmem:[%s10] sm:$0x1]
    %v2824 = vlaneseq
    %v2825 = vshrl.u32 %v2824, 7
    %v2826 = vsub.s32 0, %v2825
    %v2827 = vrot.slane %v2822, %v2826
    %v2830 = vsel %vm155, %v2812, 0
    %v2833 = vsel %vm155, %v2813, 0
    %v2836 = vsel %vm155, %v2814, 0
    %v2839 = vsel %vm155, %v2815, 0
    %v2842 = vsel %vm155, %v2816, 0
    %v2845 = vsel %vm155, %v2817, 0
    %2847 = vmatprep.subr.mxu0 0.0
    %2848 = vmatpush1.msra.mxu0 %v2818
    %2849 = vmatprep.subr.mxu0 0.0
    %2850 = vmatpush1.msra.mxu0 %v2819
    %2851 = vmatprep.subr.mxu0 0.0
    %2852 = vmatpush1.msra.mxu0 %v2820
    %2853 = vmatprep.subr.mxu0 0.0
    %2854 = vmatpush1.msra.mxu0 %v2821
    %2855 = vmatprep.subr.mxu0 0.0
    %2856 = vmatpush1.msra.mxu0 0.0
    %2857 = vmatprep.subr.mxu0 0.0
    %2858 = vmatpush1.msra.mxu0 0.0
    %2859 = vmatprep.subr.mxu0 0.0
    %2860 = vmatpush1.msra.mxu0 0.0
    %2861 = vmatprep.subr.mxu0 0.0
    %2862 = vmatpush1.msra.mxu0 0.0
    %2863 = vmatprep.subr.mxu0 0.0
    %2864 = vmatpush1.msra.mxu0 0.0
    %2865 = vmatprep.subr.mxu0 0.0
    %2866 = vmatpush1.msra.mxu0 0.0
    %2867 = vmatprep.subr.mxu0 0.0
    %2868 = vmatpush1.msra.mxu0 0.0
    %2869 = vmatprep.subr.mxu0 0.0
    %2870 = vmatpush1.msra.mxu0 0.0
    %2871 = vmatprep.subr.mxu0 0.0
    %2872 = vmatpush1.msra.mxu0 0.0
    %2873 = vmatprep.subr.mxu0 0.0
    %2874 = vmatpush1.msra.mxu0 0.0
    %2875 = vmatprep.subr.mxu0 0.0
    %2876 = vmatpush1.msra.mxu0 0.0
    %2877 = vmatprep.subr.mxu0 0.0
    %2878 = vmatpush1.msra.mxu0 0.0
    %2879 = vmatprep.subr.mxu0 0.0
    %2880 = vmatpush1.msra.mxu0 0.0
    %2881 = vmatprep.subr.mxu0 0.0
    %2882 = vmatpush1.msra.mxu0 0.0
    %2883 = vmatprep.subr.mxu0 0.0
    %2884 = vmatpush1.msra.mxu0 0.0
    %2885 = vmatprep.subr.mxu0 0.0
    %2886 = vmatpush1.msra.mxu0 0.0
    %2887 = vmatprep.subr.mxu0 0.0
    %2888 = vmatpush1.msra.mxu0 0.0
    %2889 = vmatprep.subr.mxu0 0.0
    %2890 = vmatpush1.msra.mxu0 0.0
    %2891 = vmatprep.subr.mxu0 0.0
    %2892 = vmatpush1.msra.mxu0 0.0
    %2893 = vmatprep.subr.mxu0 0.0
    %2894 = vmatpush1.msra.mxu0 0.0
    %2895 = vmatprep.subr.mxu0 0.0
    %2896 = vmatpush1.msra.mxu0 0.0
    %2897 = vmatprep.subr.mxu0 0.0
    %2898 = vmatpush1.msra.mxu0 0.0
    %2899 = vmatprep.subr.mxu0 0.0
    %2900 = vmatpush1.msra.mxu0 0.0
    %2901 = vmatprep.subr.mxu0 0.0
    %2902 = vmatpush1.msra.mxu0 0.0
    %2903 = vmatprep.subr.mxu0 0.0
    %2904 = vmatpush1.msra.mxu0 0.0
    %2905 = vmatprep.subr.mxu0 0.0
    %2906 = vmatpush1.msra.mxu0 0.0
    %2907 = vmatprep.subr.mxu0 0.0
    %2908 = vmatpush1.msra.mxu0 0.0
    %2909 = vmatprep.subr.mxu0 0.0
    %2910 = vmatpush1.msra.mxu0 0.0
    %2911 = vmatprep.mubr.f32.mxu0 0.0
    %2912 = vmatmul.mubr.f32.gmra.mrb[0].mxu0 %v2830
    %v2913 = vpop.f32.mrb[0].mxu0
    %v2914 = vadd.f32 %v2827, %v2913
    %v2915 = vpop.f32.mrb[0].mxu0
    %2916 = vmatprep.mubr.f32.mxu0 0.0
    %2917 = vmatmul.mubr.f32.gmra.mrb[0].mxu0 %v2833
    %v2918 = vpop.f32.mrb[0].mxu0
    %v2919 = vadd.f32 %v2827, %v2918
    %v2920 = vpop.f32.mrb[0].mxu0
    %2921 = vmatprep.mubr.f32.mxu0 0.0
    %2922 = vmatmul.mubr.f32.gmra.mrb[0].mxu0 %v2836
    %v2923 = vpop.f32.mrb[0].mxu0
    %v2924 = vadd.f32 %v2827, %v2923
    %v2925 = vpop.f32.mrb[0].mxu0
    %2926 = vmatprep.mubr.f32.mxu0 0.0
    %2927 = vmatmul.mubr.f32.gmra.mrb[0].mxu0 %v2839
    %v2928 = vpop.f32.mrb[0].mxu0
    %v2929 = vadd.f32 %v2827, %v2928
    %v2930 = vpop.f32.mrb[0].mxu0
    %2931 = vmatprep.mubr.f32.mxu0 0.0
    %2932 = vmatmul.mubr.f32.gmra.mrb[0].mxu0 %v2842
    %v2933 = vpop.f32.mrb[0].mxu0
    %v2934 = vadd.f32 %v2827, %v2933
    %v2935 = vpop.f32.mrb[0].mxu0
    %2936 = vmatprep.mubr.f32.mxu0 0.0
    %2937 = vmatmul.mubr.f32.gmra.mrb[0].mxu0 %v2845
    %v2938 = vpop.f32.mrb[0].mxu0
    %v2939 = vadd.f32 %v2827, %v2938
    %v2940 = vpop.f32.mrb[0].mxu0
    %2941 = vdwg.mxu0
    %2942 = vst [vmem:[#allocation15] sm:$0xff] %v2914
    %2943 = vst [vmem:[#allocation15 + $0x8] sm:$0xff] %v2919
    %2944 = vst [vmem:[#allocation15 + $0x10] sm:$0xff] %v2924
    %2945 = vst [vmem:[#allocation15 + $0x18] sm:$0xff] %v2929
    %2946 = vst [vmem:[#allocation15 + $0x20] sm:$0xff] %v2934
    %2947 = vst [vmem:[#allocation15 + $0x28] sm:$0xff] %v2939
    // Predicated region
    $region74: #{tpu_custom_call.1} parent=1 // pred_check
      _
    $region75: #{tpu_custom_call.1} parent=1 // pred_check_branch
      %2949 = sbr.rel (0) target = $region77
    $region76: #{tpu_custom_call.1} parent=1 // pred_region
      %s2951 = ssub.s32 768, 768
      %2952 = vsyncadd [#allocation5], %s2951
      %s2953 = sshll.u32 [#allocation15], 4
      %s2954 = int_to_ptr.vmem [resolvable:$true] %s2953
      %2959 = dma.vmem_to_hbm [thread:$0]  %s2954, 768, %s11, [#allocation5], 128, 128, 8
    $region77: #{tpu_custom_call.1} parent=1 // pred_fallthru
      _
    // Predicated region
    $region78: #{tpu_custom_call.1} parent=1 // pred_check
      _
    $region79: #{tpu_custom_call.1} parent=1 // pred_check_branch
      %2961 = sbr.rel (0) target = $region81
    $region80: #{tpu_custom_call.1} parent=1 // pred_region
      _
    $region81: #{tpu_custom_call.1} parent=1 // pred_fallthru
      _
    // Predicated region
    $region82: #{tpu_custom_call.1} parent=1 // pred_check
      _
    $region83: #{tpu_custom_call.1} parent=1 // pred_check_branch
      %2963 = sbr.rel (0) target = $region85
    $region84: #{tpu_custom_call.1} parent=1 // pred_region
      %s2965 = ssub.s32 128, 128
      %2966 = vsyncadd [#allocation17], %s2965
      %s2968 = sshll.u32 [#allocation16], 4
      %s2969 = int_to_ptr.vmem [resolvable:$true] %s2968
      %2971 = dma.vmem_to_hbm [thread:$0]  %s2969, 128, %s13, [#allocation17]
    $region85: #{tpu_custom_call.1} parent=1 // pred_fallthru
      _
    // Predicated region
    $region86: #{tpu_custom_call.1} parent=1 // pred_check
      _
    $region87: #{tpu_custom_call.1} parent=1 // pred_check_branch
      %2973 = sbr.rel (0) target = $region89
    $region88: #{tpu_custom_call.1} parent=1 // pred_region
      %2974 = dma.done [#allocation5], 768
    $region89: #{tpu_custom_call.1} parent=1 // pred_fallthru
      _
    // Predicated region
    $region90: #{tpu_custom_call.1} parent=1 // pred_check
      _
    $region91: #{tpu_custom_call.1} parent=1 // pred_check_branch
      %2976 = sbr.rel (0) target = $region93
    $region92: #{tpu_custom_call.1} parent=1 // pred_region
      _
    $region93: #{tpu_custom_call.1} parent=1 // pred_fallthru
      _
    // Predicated region
    $region94: #{tpu_custom_call.1} parent=1 // pred_check
      _
    $region95: #{tpu_custom_call.1} parent=1 // pred_check_branch
      %2978 = sbr.rel (0) target = $region97
    $region96: #{tpu_custom_call.1} parent=1 // pred_region
      %2979 = dma.done [#allocation17], 128
    $region97: #{tpu_custom_call.1} parent=1 // pred_fallthru
      _
    %2980 = vsyncpa [#allocation4], 1
    %2981 = vsyncpa [#allocation7], 1
    %2982 = vsyncpa [#allocation10], 1
    %2983 = vsyncpa [#allocation13], 1
    %2984 = vsyncpa [#allocation5], 1
    %2985 = vsyncpa [#allocation17], 1

</llo_original>
